<compile_context>
chip_gen: v6e
topology: v6e:2x2x1
jax: 0.10.0
libtpu: 0.0.40
codegen_flags: <defaults>
</compile_context>

<pallas_src>
import functools
import math

import jax
import jax.numpy as jnp
from jax.experimental import pallas as pl
from jax.experimental.pallas import tpu as pltpu


_VMEM_LIMIT = 48 * 1024 * 1024   # > v5e/v6e default scoped 16/32 MiB, < v7x 64 MiB physical


def _round_up(x, m):
    return ((x + m - 1) // m) * m


def _pick_tile(dim, pref, cap=1024):
    """Pick a legal tile: full dim when small/odd (block == array dim is always
    legal), else `pref` (a multiple of 128/8) with zero-padding of the operand."""
    if dim <= pref:
        return dim
    if dim % pref == 0:
        return pref
    if dim <= cap:
        return dim
    return pref


# --------------------------- tiled linear (matmul) -------------------------- #

def _matmul_kernel(x_ref, w_ref, b_ref, o_ref, acc_ref, *, activation):
    @pl.when(pl.program_id(2) == 0)
    def _init():
        acc_ref[...] = jnp.zeros_like(acc_ref)

    acc_ref[...] += jnp.dot(x_ref[...], w_ref[...],
                            preferred_element_type=jnp.float32)

    @pl.when(pl.program_id(2) == pl.num_programs(2) - 1)
    def _finish():
        y = acc_ref[...] + b_ref[...].astype(jnp.float32)
        if activation == "gelu":
            # TODO(synk): HF BERT uses exact erf-GELU; tanh approximation here.
            y = jax.nn.gelu(y, approximate=True)
        o_ref[...] = y.reshape(o_ref.shape).astype(o_ref.dtype)


def linear_pallas(x, w, b, activation=None, out_dtype=jnp.bfloat16,
                  tm=512, tn=512, tk=1024):
    """y = act(x @ w + b).  x:(M,K) bf16, w:(K,N) bf16 (pre-cast), b:(N,) f32."""
    M, K = x.shape
    N = w.shape[1]
    tm, tk, tn = _pick_tile(M, tm), _pick_tile(K, tk), _pick_tile(N, tn)
    Mp, Kp, Np = _round_up(M, tm), _round_up(K, tk), _round_up(N, tn)

    xp, wp, bp = x, w, b.astype(jnp.float32)
    if (Mp, Kp) != (M, K):
        xp = jnp.pad(xp, ((0, Mp - M), (0, Kp - K)))
    if (Kp, Np) != (K, N):
        wp = jnp.pad(wp, ((0, Kp - K), (0, Np - N)))
    if Np != N:
        bp = jnp.pad(bp, (0, Np - N))

    out = pl.pallas_call(
        functools.partial(_matmul_kernel, activation=activation),
        grid=(Mp // tm, Np // tn, Kp // tk),
        in_specs=[
            pl.BlockSpec((tm, tk), lambda i, j, k: (i, k)),
            pl.BlockSpec((tk, tn), lambda i, j, k: (k, j)),
            pl.BlockSpec((1, tn), lambda i, j, k: (0, j)),
        ],
        out_specs=pl.BlockSpec((tm, tn), lambda i, j, k: (i, j)),
        out_shape=jax.ShapeDtypeStruct((Mp, Np), out_dtype),
        scratch_shapes=[pltpu.VMEM((tm, tn), jnp.float32)],
        compiler_params=pltpu.CompilerParams(
            dimension_semantics=("parallel", "parallel", "arbitrary"),
            vmem_limit_bytes=_VMEM_LIMIT),
    )(xp, wp, bp.reshape(1, Np))
    if (Mp, Np) != (M, N):
        out = out[:M, :N]
    return out


def fused_qkv_pallas(x, wqkv, bqkv, h_pad, out_dtype=jnp.bfloat16,
                     tm=512, tk=1024):
    """Fused QKV projection.  wqkv:(K, 3*h_pad) bf16, each H-wide part zero-padded
    to h_pad lanes (done once at init).  Output (3, M, h_pad): q/k/v with heads
    folded lane-dense -- consumed by attention with no XLA transposes."""
    M, K = x.shape
    N = wqkv.shape[1]                       # 3 * h_pad
    tm, tk = _pick_tile(M, tm), _pick_tile(K, tk)
    tn = h_pad                              # one output part (q/k/v) per j step
    Mp, Kp = _round_up(M, tm), _round_up(K, tk)

    xp, wp = x, wqkv
    if (Mp, Kp) != (M, K):
        xp = jnp.pad(xp, ((0, Mp - M), (0, Kp - K)))
    if Kp != K:
        wp = jnp.pad(wp, ((0, Kp - K), (0, 0)))

    out = pl.pallas_call(
        functools.partial(_matmul_kernel, activation=None),
        grid=(Mp // tm, 3, Kp // tk),
        in_specs=[
            pl.BlockSpec((tm, tk), lambda i, j, k: (i, k)),
            pl.BlockSpec((tk, tn), lambda i, j, k: (k, j)),
            pl.BlockSpec((1, tn), lambda i, j, k: (0, j)),
        ],
        out_specs=pl.BlockSpec((1, tm, tn), lambda i, j, k: (j, i, 0)),
        out_shape=jax.ShapeDtypeStruct((3, Mp, h_pad), out_dtype),
        scratch_shapes=[pltpu.VMEM((tm, tn), jnp.float32)],
        compiler_params=pltpu.CompilerParams(
            dimension_semantics=("parallel", "parallel", "arbitrary"),
            vmem_limit_bytes=_VMEM_LIMIT),
    )(xp, wp, bqkv.reshape(1, N))
    if Mp != M:
        out = out[:, :M, :]
    return out


# ----------------- fused linear + residual-add + LayerNorm ------------------ #

def _linear_add_ln_kernel(x_ref, w_ref, b_ref, res_ref, g_ref, bt_ref, o_ref,
                          acc_ref, *, eps):
    @pl.when(pl.program_id(1) == 0)
    def _init():
        acc_ref[...] = jnp.zeros_like(acc_ref)

    acc_ref[...] += jnp.dot(x_ref[...], w_ref[...],
                            preferred_element_type=jnp.float32)

    @pl.when(pl.program_id(1) == pl.num_programs(1) - 1)
    def _finish():
        s = (acc_ref[...] + b_ref[...].astype(jnp.float32)
             + res_ref[...].astype(jnp.float32))
        mu = jnp.mean(s, axis=-1, keepdims=True)
        var = jnp.mean((s - mu) ** 2, axis=-1, keepdims=True)
        inv = jax.lax.rsqrt(var + eps)
        o_ref[...] = ((s - mu) * inv * g_ref[...].astype(jnp.float32)
                      + bt_ref[...].astype(jnp.float32)).astype(o_ref.dtype)


def linear_add_layernorm_pallas(x, w, b, residual, gamma, beta, eps=1e-12,
                                out_dtype=jnp.bfloat16, tm=512, tk=1024):
    """LayerNorm(residual + x @ w + b) in one kernel (full N row per block)."""
    M, K = x.shape
    N = w.shape[1]
    tm, tk = _pick_tile(M, tm), _pick_tile(K, tk)
    Mp, Kp = _round_up(M, tm), _round_up(K, tk)

    xp, wp, rp = x, w, residual
    if (Mp, Kp) != (M, K):
        xp = jnp.pad(xp, ((0, Mp - M), (0, Kp - K)))
    if Kp != K:
        wp = jnp.pad(wp, ((0, Kp - K), (0, 0)))
    if Mp != M:
        rp = jnp.pad(rp, ((0, Mp - M), (0, 0)))

    out = pl.pallas_call(
        functools.partial(_linear_add_ln_kernel, eps=eps),
        grid=(Mp // tm, Kp // tk),
        in_specs=[
            pl.BlockSpec((tm, tk), lambda i, k: (i, k)),
            pl.BlockSpec((tk, N), lambda i, k: (k, 0)),
            pl.BlockSpec((1, N), lambda i, k: (0, 0)),
            pl.BlockSpec((tm, N), lambda i, k: (i, 0)),
            pl.BlockSpec((1, N), lambda i, k: (0, 0)),
            pl.BlockSpec((1, N), lambda i, k: (0, 0)),
        ],
        out_specs=pl.BlockSpec((tm, N), lambda i, k: (i, 0)),
        out_shape=jax.ShapeDtypeStruct((Mp, N), out_dtype),
        scratch_shapes=[pltpu.VMEM((tm, N), jnp.float32)],
        compiler_params=pltpu.CompilerParams(
            dimension_semantics=("parallel", "arbitrary"),
            vmem_limit_bytes=_VMEM_LIMIT),
    )(xp, wp, b.astype(jnp.float32).reshape(1, N), rp,
      gamma.astype(jnp.float32).reshape(1, N),
      beta.astype(jnp.float32).reshape(1, N))
    if Mp != M:
        out = out[:M]
    return out


# ----------------------- fused add + LayerNorm (embeddings) ------------------ #

def _add_layernorm_kernel(x_ref, y_ref, g_ref, b_ref, o_ref, *, eps):
    s = x_ref[...].astype(jnp.float32) + y_ref[...].astype(jnp.float32)
    mu = jnp.mean(s, axis=-1, keepdims=True)
    var = jnp.mean((s - mu) ** 2, axis=-1, keepdims=True)
    inv = jax.lax.rsqrt(var + eps)
    o_ref[...] = ((s - mu) * inv * g_ref[...].astype(jnp.float32)
                  + b_ref[...].astype(jnp.float32)).astype(o_ref.dtype)


def add_layernorm_pallas(x, y, gamma, beta, eps=1e-12,
                         out_dtype=jnp.bfloat16, tm=512):
    """LayerNorm(x + y) row-wise; stats in f32, output bf16. x/y: (M, H)."""
    M, H = x.shape
    tm = _pick_tile(M, tm)
    Mp = _round_up(M, tm)
    xp, yp = x, y
    if Mp != M:
        xp = jnp.pad(xp, ((0, Mp - M), (0, 0)))
        yp = jnp.pad(yp, ((0, Mp - M), (0, 0)))
    out = pl.pallas_call(
        functools.partial(_add_layernorm_kernel, eps=eps),
        grid=(Mp // tm,),
        in_specs=[
            pl.BlockSpec((tm, H), lambda i: (i, 0)),
            pl.BlockSpec((tm, H), lambda i: (i, 0)),
            pl.BlockSpec((1, H), lambda i: (0, 0)),
            pl.BlockSpec((1, H), lambda i: (0, 0)),
        ],
        out_specs=pl.BlockSpec((tm, H), lambda i: (i, 0)),
        out_shape=jax.ShapeDtypeStruct((Mp, H), out_dtype),
        compiler_params=pltpu.CompilerParams(
            dimension_semantics=("parallel",),
            vmem_limit_bytes=_VMEM_LIMIT),
    )(xp, yp, gamma.reshape(1, H), beta.reshape(1, H))
    if Mp != M:
        out = out[:M]
    return out


# ------------------------- flash-style self attention ------------------------ #

def _flash_attn_kernel(q_ref, k_ref, v_ref, bias_ref, o_ref,
                       m_sc, l_sc, acc_sc, *, scale, n_heads, d_head):
    kvi = pl.program_id(2)

    @pl.when(kvi == 0)
    def _init():
        m_sc[...] = jnp.full_like(m_sc, -jnp.inf)
        l_sc[...] = jnp.zeros_like(l_sc)
        acc_sc[...] = jnp.zeros_like(acc_sc)

    bias = bias_ref[0].astype(jnp.float32)                      # (1, tkv)

    for h in range(n_heads):                                    # static unroll
        sl = slice(h * d_head, (h + 1) * d_head)
        qh = q_ref[0, :, sl]                                    # (tq, dH) bf16
        kh = k_ref[0, :, sl]                                    # (tkv, dH)
        vh = v_ref[0, :, sl]                                    # (tkv, dH)
        s = jax.lax.dot_general(qh, kh, (((1,), (1,)), ((), ())),
                                preferred_element_type=jnp.float32) * scale
        s = s + bias                                            # (tq, tkv) f32
        m_prev = m_sc[h]                                        # (tq, 1)
        m_new = jnp.maximum(m_prev, jnp.max(s, axis=-1, keepdims=True))
        alpha = jnp.exp(m_prev - m_new)
        p = jnp.exp(s - m_new)
        l_sc[h] = alpha * l_sc[h] + jnp.sum(p, axis=-1, keepdims=True)
        acc_sc[h] = alpha * acc_sc[h] + jnp.dot(
            p.astype(vh.dtype), vh, preferred_element_type=jnp.float32)
        m_sc[h] = m_new

    @pl.when(kvi == pl.num_programs(2) - 1)
    def _finish():
        for h in range(n_heads):
            inv = pl.reciprocal(l_sc[h], approx=True)           # (tq, 1)
            o_ref[0, :, h * d_head:(h + 1) * d_head] = (
                acc_sc[h] * inv).astype(o_ref.dtype)


def flash_attention_pallas(q, k, v, attn_bias, *, n_heads, d_head,
                           out_dtype=jnp.bfloat16):
    """q/k/v: (B, S, Hp) bf16 with heads folded into the lane dim (lanes >= H are
    zero padding).  attn_bias: (B, 1, S) f32 additive mask.  Returns (B, S, H)
    lane-dense -- no head-major transposes anywhere."""
    B, S, Hp = q.shape
    H = n_heads * d_head
    scale = 1.0 / math.sqrt(d_head)

    if S <= 256:
        tq = tkv = S
        Sp = S
    else:
        tq, tkv = 256, 512
        Sp = _round_up(S, 512)

    qp, kp, vp, bp = q, k, v, attn_bias
    if Sp != S:
        pad3 = ((0, 0), (0, Sp - S), (0, 0))
        qp = jnp.pad(qp, pad3)
        kp = jnp.pad(kp, pad3)
        vp = jnp.pad(vp, pad3)
        bp = jnp.pad(bp, ((0, 0), (0, 0), (0, Sp - S)), constant_values=-1e9)

    out = pl.pallas_call(
        functools.partial(_flash_attn_kernel, scale=scale,
                          n_heads=n_heads, d_head=d_head),
        grid=(B, Sp // tq, Sp // tkv),
        in_specs=[
            pl.BlockSpec((1, tq, Hp), lambda b, qi, ki: (b, qi, 0)),
            # TODO(synk): sweep pipeline_mode=pl.Buffered(3) on K/V if DMA exposed.
            pl.BlockSpec((1, tkv, Hp), lambda b, qi, ki: (b, ki, 0)),
            pl.BlockSpec((1, tkv, Hp), lambda b, qi, ki: (b, ki, 0)),
            pl.BlockSpec((1, 1, tkv), lambda b, qi, ki: (b, 0, ki)),
        ],
        out_specs=pl.BlockSpec((1, tq, H), lambda b, qi, ki: (b, qi, 0)),
        out_shape=jax.ShapeDtypeStruct((B, Sp, H), out_dtype),
        scratch_shapes=[pltpu.VMEM((n_heads, tq, 1), jnp.float32),
                        pltpu.VMEM((n_heads, tq, 1), jnp.float32),
                        pltpu.VMEM((n_heads, tq, d_head), jnp.float32)],
        compiler_params=pltpu.CompilerParams(
            dimension_semantics=("parallel", "parallel", "arbitrary"),
            vmem_limit_bytes=_VMEM_LIMIT),
    )(qp, kp, vp, bp)
    if Sp != S:
        out = out[:, :S, :]
    return out


# ------------------------- mean-pool + classification head ------------------- #

def _pool_head_kernel(x_ref, w_ref, b_ref, o_ref, acc_ref, *, inv_s):
    @pl.when(pl.program_id(0) == 0)
    def _init():
        acc_ref[...] = jnp.zeros_like(acc_ref)

    acc_ref[...] += jnp.sum(x_ref[...].astype(jnp.float32), axis=1)

    @pl.when(pl.program_id(0) == pl.num_programs(0) - 1)
    def _finish():
        pooled = acc_ref[...] * inv_s                    # torch.mean(o2, dim=1)
        o_ref[...] = (jnp.dot(pooled, w_ref[...].astype(jnp.float32),
                              preferred_element_type=jnp.float32)
                      + b_ref[...].astype(jnp.float32))


def pool_head_pallas(seq, w_pad, b_pad, n_out, ts=128):
    """seq: (B, S, H); w_pad: (H, Np) f32 pre-padded to a lane-dense Np; returns
    (B, n_out) f32.  S is tiled as a reduction axis (VMEM-safe on v7x)."""
    B, S, H = seq.shape
    Np = w_pad.shape[1]
    ts = _pick_tile(S, ts, cap=512)
    Sp = _round_up(S, ts)
    xp = seq
    if Sp != S:
        xp = jnp.pad(xp, ((0, 0), (0, Sp - S), (0, 0)))  # zeros don't change the sum
    out = pl.pallas_call(
        functools.partial(_pool_head_kernel, inv_s=1.0 / S),
        grid=(Sp // ts,),
        in_specs=[
            pl.BlockSpec((B, ts, H), lambda s: (0, s, 0)),
            pl.BlockSpec((H, Np), lambda s: (0, 0)),
            pl.BlockSpec((1, Np), lambda s: (0, 0)),
        ],
        out_specs=pl.BlockSpec((B, Np), lambda s: (0, 0)),
        out_shape=jax.ShapeDtypeStruct((B, Np), jnp.float32),
        scratch_shapes=[pltpu.VMEM((B, H), jnp.float32)],
        compiler_params=pltpu.CompilerParams(
            dimension_semantics=("arbitrary",),
            vmem_limit_bytes=_VMEM_LIMIT),
    )(xp, w_pad, b_pad.reshape(1, Np))
    return out[:, :n_out]


# --------------------------- parameters / forward --------------------------- #

CFG = dict(
    vocab=100, max_pos=16, type_vocab=2,
    hidden=32, heads=4, intermediate=64,
    num_layers=2, eps=1e-12, n_out=1,
)


def init_params(key, cfg):
    """Raw f32 parameters mirroring the torch module (MixLinear == Linear at eval)."""
    H, I = cfg["hidden"], cfg["intermediate"]

    def nrm(k, shape):
        return 0.02 * jax.random.normal(k, shape, dtype=jnp.float32)

    keys = iter(jax.random.split(key, 8 + 10 * cfg["num_layers"]))
    params = {
        "word_emb": nrm(next(keys), (cfg["vocab"], H)),
        "pos_emb": nrm(next(keys), (cfg["max_pos"], H)),
        "type_emb": nrm(next(keys), (cfg["type_vocab"], H)),
        "emb_ln_g": jnp.ones((H,), jnp.float32),
        "emb_ln_b": jnp.zeros((H,), jnp.float32),
        "head_w": nrm(next(keys), (H, cfg["n_out"])),
        "head_b": jnp.zeros((cfg["n_out"],), jnp.float32),
        "layers": [],
    }
    for _ in range(cfg["num_layers"]):
        lyr = {
            "wq": nrm(next(keys), (H, H)), "bq": jnp.zeros((H,), jnp.float32),
            "wk": nrm(next(keys), (H, H)), "bk": jnp.zeros((H,), jnp.float32),
            "wv": nrm(next(keys), (H, H)), "bv": jnp.zeros((H,), jnp.float32),
            "wo": nrm(next(keys), (H, H)), "bo": jnp.zeros((H,), jnp.float32),
            "ln1_g": jnp.ones((H,), jnp.float32), "ln1_b": jnp.zeros((H,), jnp.float32),
            "wi": nrm(next(keys), (H, I)), "bi": jnp.zeros((I,), jnp.float32),
            # output.dense: MixLinear in the torch module -> identical to Linear at eval
            "wo2": nrm(next(keys), (I, H)), "bo2": jnp.zeros((H,), jnp.float32),
            "ln2_g": jnp.ones((H,), jnp.float32), "ln2_b": jnp.zeros((H,), jnp.float32),
        }
        params["layers"].append(lyr)
    return params


def prepare_params(raw, cfg):
    """One-time (outside jit) weight prep: bf16 cast of all matmul weights, fused +
    lane-padded QKV weight/bias, lane-padded classification head."""
    H = cfg["hidden"]
    Hp = _round_up(H, 128)
    Np = _round_up(cfg["n_out"], 128)

    def pad_w(w):
        return jnp.pad(w, ((0, 0), (0, Hp - H))) if Hp != H else w

    def pad_b(b):
        return jnp.pad(b, (0, Hp - H)) if Hp != H else b

    prep = {
        "word_emb": raw["word_emb"], "pos_emb": raw["pos_emb"],
        "type_emb": raw["type_emb"],
        "emb_ln_g": raw["emb_ln_g"], "emb_ln_b": raw["emb_ln_b"],
        "head_w": jnp.pad(raw["head_w"], ((0, 0), (0, Np - cfg["n_out"]))),
        "head_b": jnp.pad(raw["head_b"], (0, Np - cfg["n_out"])),
        "layers": [],
    }
    for lyr in raw["layers"]:
        prep["layers"].append({
            "wqkv": jnp.concatenate(
                [pad_w(lyr["wq"]), pad_w(lyr["wk"]), pad_w(lyr["wv"])],
                axis=1).astype(jnp.bfloat16),                    # (H, 3*Hp) bf16
            "bqkv": jnp.concatenate(
                [pad_b(lyr["bq"]), pad_b(lyr["bk"]), pad_b(lyr["bv"])]),
            "wo": lyr["wo"].astype(jnp.bfloat16), "bo": lyr["bo"],
            "ln1_g": lyr["ln1_g"], "ln1_b": lyr["ln1_b"],
            "wi": lyr["wi"].astype(jnp.bfloat16), "bi": lyr["bi"],
            "wo2": lyr["wo2"].astype(jnp.bfloat16), "bo2": lyr["bo2"],
            "ln2_g": lyr["ln2_g"], "ln2_b": lyr["ln2_b"],
        })
    return prep


def transformer_with_mixout_forward(params, ids, mask, token_type_ids, cfg=CFG):
    """Eval-mode forward: encoder (mixout/dropout == identity) -> mean pool -> Linear."""
    B, S = ids.shape
    H = cfg["hidden"]
    nH = cfg["heads"]
    dH = H // nH
    Hp = _round_up(H, 128)

    # Embedding gathers stay in XLA (data-dependent gather glue);
    # the embedding sum + LayerNorm is fused into one Pallas kernel.
    word = jnp.take(params["word_emb"], ids, axis=0)
    pos = params["pos_emb"][:S][None, :, :]
    typ = jnp.take(params["type_emb"], token_type_ids, axis=0)
    x = add_layernorm_pallas((word + pos).reshape(B * S, H),
                             typ.reshape(B * S, H),
                             params["emb_ln_g"], params["emb_ln_b"], cfg["eps"])

    # Attention mask bias computed once for all layers.
    attn_bias = ((1.0 - mask.astype(jnp.float32)) * -1e9)[:, None, :]   # (B, 1, S)

    for lyr in params["layers"]:
        # Fused QKV projection -> (3, B*S, Hp): heads stay folded in the lane dim,
        # so attention consumes q/k/v directly (no head-split transposes).
        qkv = fused_qkv_pallas(x, lyr["wqkv"], lyr["bqkv"], h_pad=Hp)
        if qkv.shape[1] != B * S:
            qkv = qkv[:, :B * S, :]
        q = qkv[0].reshape(B, S, Hp)
        k = qkv[1].reshape(B, S, Hp)
        v = qkv[2].reshape(B, S, Hp)

        ctx = flash_attention_pallas(q, k, v, attn_bias,
                                     n_heads=nH, d_head=dH)      # (B, S, H) lane-dense
        ctx = ctx.reshape(B * S, H)

        # attention.output.dense + dropout(identity) + residual + LayerNorm fused.
        x = linear_add_layernorm_pallas(ctx, lyr["wo"], lyr["bo"], x,
                                        lyr["ln1_g"], lyr["ln1_b"], cfg["eps"])

        inter = linear_pallas(x, lyr["wi"], lyr["bi"], activation="gelu")
        # output.dense (MixLinear == Linear at eval) + dropout(identity)
        # + residual + LayerNorm fused into one kernel.
        x = linear_add_layernorm_pallas(inter, lyr["wo2"], lyr["bo2"], x,
                                        lyr["ln2_g"], lyr["ln2_b"], cfg["eps"])

    seq = x.reshape(B, S, H)
    # self.drop (nn.Dropout(0.3)) is identity at eval; mean-pool + head in one kernel.
    return pool_head_pallas(seq, params["head_w"], params["head_b"], cfg["n_out"])


# ---------------------------------- main ------------------------------------ #

if __name__ == "__main__":
    key = jax.random.PRNGKey(0)
    k_param, k_ids = jax.random.split(key)

    B, S = 2, 8
    raw_params = init_params(k_param, CFG)
    params = prepare_params(raw_params, CFG)      # one-time bf16 cast / QKV fusion
    ids = jax.random.randint(k_ids, (B, S), 0, CFG["vocab"], dtype=jnp.int32)
    mask = jnp.ones((B, S), dtype=jnp.float32)
    token_type_ids = jnp.zeros((B, S), dtype=jnp.int32)

    fwd = jax.jit(transformer_with_mixout_forward)
    out = fwd(params, ids, mask, token_type_ids)
    out = jax.block_until_ready(out)
    assert out.shape == (B, CFG["n_out"])
    print("KERNEL_OK")
</pallas_src>

<mosaic_0001>
module attributes {stable_mosaic.version = 11 : i64} {
  func.func @_add_layernorm_kernel(%arg0: i32, %arg1: memref<16x32xf32, #tpu.memory_space<vmem>>, %arg2: memref<16x32xf32, #tpu.memory_space<vmem>>, %arg3: memref<1x32xf32, #tpu.memory_space<vmem>>, %arg4: memref<1x32xf32, #tpu.memory_space<vmem>>, %arg5: memref<16x32xbf16, #tpu.memory_space<vmem>>) attributes {dimension_semantics = [#tpu.dimension_semantics<parallel>], iteration_bounds = array<i64: 1>, scalar_prefetch = 0 : i64, scratch_operands = 0 : i64, tpu.core_type = #tpu.core_type<tc>, window_params = [{transform_indices = @transform_0, window_bounds = array<i64: 16, 32>}, {transform_indices = @transform_1, window_bounds = array<i64: 16, 32>}, {pipeline_mode = #tpu.pipeline_mode<synchronous>, transform_indices = @transform_2, window_bounds = array<i64: 1, 32>}, {pipeline_mode = #tpu.pipeline_mode<synchronous>, transform_indices = @transform_3, window_bounds = array<i64: 1, 32>}, {transform_indices = @transform_4, window_bounds = array<i64: 16, 32>}]} {
    %c0 = arith.constant 0 : index
    %c0_0 = arith.constant 0 : index
    %0 = vector.load %arg1[%c0, %c0_0] : memref<16x32xf32, #tpu.memory_space<vmem>>, vector<16x32xf32>
    %c0_1 = arith.constant 0 : index
    %c0_2 = arith.constant 0 : index
    %1 = vector.load %arg2[%c0_1, %c0_2] : memref<16x32xf32, #tpu.memory_space<vmem>>, vector<16x32xf32>
    %2 = arith.addf %0, %1 : vector<16x32xf32>
    %cst = arith.constant dense<0.000000e+00> : vector<16xf32>
    %3 = vector.multi_reduction <add>, %2, %cst [1] : vector<16x32xf32> to vector<16xf32>
    %4 = vector.shape_cast %3 : vector<16xf32> to vector<16x1xf32>
    %cst_3 = arith.constant 3.200000e+01 : f32
    %5 = vector.broadcast %cst_3 : f32 to vector<16x1xf32>
    %6 = arith.divf %4, %5 : vector<16x1xf32>
    %7 = vector.broadcast %6 : vector<16x1xf32> to vector<16x32xf32>
    %8 = arith.subf %2, %7 : vector<16x32xf32>
    %9 = arith.mulf %8, %8 : vector<16x32xf32>
    %cst_4 = arith.constant dense<0.000000e+00> : vector<16xf32>
    %10 = vector.multi_reduction <add>, %9, %cst_4 [1] : vector<16x32xf32> to vector<16xf32>
    %11 = vector.shape_cast %10 : vector<16xf32> to vector<16x1xf32>
    %cst_5 = arith.constant 3.200000e+01 : f32
    %12 = vector.broadcast %cst_5 : f32 to vector<16x1xf32>
    %13 = arith.divf %11, %12 : vector<16x1xf32>
    %cst_6 = arith.constant 9.99999996E-13 : f32
    %14 = vector.broadcast %cst_6 : f32 to vector<16x1xf32>
    %15 = arith.addf %13, %14 : vector<16x1xf32>
    %16 = math.rsqrt %15 : vector<16x1xf32>
    %17 = vector.broadcast %6 : vector<16x1xf32> to vector<16x32xf32>
    %18 = arith.subf %2, %17 : vector<16x32xf32>
    %19 = vector.broadcast %16 : vector<16x1xf32> to vector<16x32xf32>
    %20 = arith.mulf %18, %19 : vector<16x32xf32>
    %c0_7 = arith.constant 0 : index
    %c0_8 = arith.constant 0 : index
    %21 = vector.load %arg3[%c0_7, %c0_8] : memref<1x32xf32, #tpu.memory_space<vmem>>, vector<1x32xf32>
    %22 = vector.broadcast %21 : vector<1x32xf32> to vector<16x32xf32>
    %23 = arith.mulf %20, %22 : vector<16x32xf32>
    %c0_9 = arith.constant 0 : index
    %c0_10 = arith.constant 0 : index
    %24 = vector.load %arg4[%c0_9, %c0_10] : memref<1x32xf32, #tpu.memory_space<vmem>>, vector<1x32xf32>
    %25 = vector.broadcast %24 : vector<1x32xf32> to vector<16x32xf32>
    %26 = arith.addf %23, %25 : vector<16x32xf32>
    %27 = arith.truncf %26 : vector<16x32xf32> to vector<16x32xbf16>
    %c0_11 = arith.constant 0 : index
    %c0_12 = arith.constant 0 : index
    %28 = vector.load %arg5[%c0_11, %c0_12] : memref<16x32xbf16, #tpu.memory_space<vmem>>, vector<16x32xbf16>
    tpu.vector_store %arg5[%c0_11, %c0_12], %27 {strides = array<i32>} : memref<16x32xbf16, #tpu.memory_space<vmem>>, vector<16x32xbf16>,
    return
  }
  func.func @transform_0(%arg0: i32) -> (i32, i32) {
    %c0_i32 = arith.constant 0 : i32
    %c0_i32_0 = arith.constant 0 : i32
    return %arg0, %c0_i32 : i32, i32
  }
  func.func @transform_1(%arg0: i32) -> (i32, i32) {
    %c0_i32 = arith.constant 0 : i32
    %c0_i32_0 = arith.constant 0 : i32
    return %arg0, %c0_i32 : i32, i32
  }
  func.func @transform_2(%arg0: i32) -> (i32, i32) {
    %c0_i32 = arith.constant 0 : i32
    %c0_i32_0 = arith.constant 0 : i32
    %c0_i32_1 = arith.constant 0 : i32
    return %c0_i32, %c0_i32_0 : i32, i32
  }
  func.func @transform_3(%arg0: i32) -> (i32, i32) {
    %c0_i32 = arith.constant 0 : i32
    %c0_i32_0 = arith.constant 0 : i32
    %c0_i32_1 = arith.constant 0 : i32
    return %c0_i32, %c0_i32_0 : i32, i32
  }
  func.func @transform_4(%arg0: i32) -> (i32, i32) {
    %c0_i32 = arith.constant 0 : i32
    %c0_i32_0 = arith.constant 0 : i32
    return %arg0, %c0_i32 : i32, i32
  }
}

module attributes {stable_mosaic.version = 11 : i64} {
  func.func @_matmul_kernel(%arg0: i32, %arg1: i32, %arg2: i32, %arg3: memref<16x32xbf16, #tpu.memory_space<vmem>>, %arg4: memref<32x128xbf16, #tpu.memory_space<vmem>>, %arg5: memref<1x128xf32, #tpu.memory_space<vmem>>, %arg6: memref<1x16x128xbf16, #tpu.memory_space<vmem>>, %arg7: memref<16x128xf32, #tpu.memory_space<vmem>>) attributes {dimension_semantics = [#tpu.dimension_semantics<parallel>, #tpu.dimension_semantics<parallel>, #tpu.dimension_semantics<arbitrary>], iteration_bounds = array<i64: 1, 3, 1>, scalar_prefetch = 0 : i64, scratch_operands = 1 : i64, tpu.core_type = #tpu.core_type<tc>, window_params = [{transform_indices = @transform_0, window_bounds = array<i64: 16, 32>}, {transform_indices = @transform_1, window_bounds = array<i64: 32, 128>}, {transform_indices = @transform_2, window_bounds = array<i64: 1, 128>}, {transform_indices = @transform_3, window_bounds = array<i64: 1, 16, 128>}]} {
    %c0_i32 = arith.constant 0 : i32
    %0 = arith.cmpi eq, %arg2, %c0_i32 : i32
    %1 = arith.extui %0 : i1 to i32
    %c0_i32_0 = arith.constant 0 : i32
    %2 = arith.cmpi ne, %1, %c0_i32_0 : i32
    scf.if %2 {
      %cst_10 = arith.constant 0.000000e+00 : f32
      %12 = vector.broadcast %cst_10 : f32 to vector<16x128xf32>
      %c0_11 = arith.constant 0 : index
      %c0_12 = arith.constant 0 : index
      %13 = vector.load %arg7[%c0_11, %c0_12] : memref<16x128xf32, #tpu.memory_space<vmem>>, vector<16x128xf32>
      tpu.vector_store %arg7[%c0_11, %c0_12], %12 {strides = array<i32>} : memref<16x128xf32, #tpu.memory_space<vmem>>, vector<16x128xf32>,
    } else {
    }
    %c0 = arith.constant 0 : index
    %c0_1 = arith.constant 0 : index
    %3 = vector.load %arg7[%c0, %c0_1] : memref<16x128xf32, #tpu.memory_space<vmem>>, vector<16x128xf32>
    %c0_2 = arith.constant 0 : index
    %c0_3 = arith.constant 0 : index
    %4 = vector.load %arg3[%c0_2, %c0_3] : memref<16x32xbf16, #tpu.memory_space<vmem>>, vector<16x32xbf16>
    %c0_4 = arith.constant 0 : index
    %c0_5 = arith.constant 0 : index
    %5 = vector.load %arg4[%c0_4, %c0_5] : memref<32x128xbf16, #tpu.memory_space<vmem>>, vector<32x128xbf16>
    %cst = arith.constant dense<0.000000e+00> : vector<16x128xf32>
    %6 = tpu.matmul %4, %5, %cst {dimension_numbers = #tpu.dot_dimension_numbers<[1], [0], [0], [1], [0, 0, 1, 1], [], []>} : vector<16x32xbf16>, vector<32x128xbf16>, vector<16x128xf32> -> vector<16x128xf32>
    %7 = arith.addf %3, %6 : vector<16x128xf32>
    %c0_6 = arith.constant 0 : index
    %c0_7 = arith.constant 0 : index
    %8 = vector.load %arg7[%c0_6, %c0_7] : memref<16x128xf32, #tpu.memory_space<vmem>>, vector<16x128xf32>
    tpu.vector_store %arg7[%c0_6, %c0_7], %7 {strides = array<i32>} : memref<16x128xf32, #tpu.memory_space<vmem>>, vector<16x128xf32>,
    %c0_i32_8 = arith.constant 0 : i32
    %9 = arith.cmpi eq, %arg2, %c0_i32_8 : i32
    %10 = arith.extui %9 : i1 to i32
    %c0_i32_9 = arith.constant 0 : i32
    %11 = arith.cmpi ne, %10, %c0_i32_9 : i32
    scf.if %11 {
      %c0_10 = arith.constant 0 : index
      %c0_11 = arith.constant 0 : index
      %12 = vector.load %arg7[%c0_10, %c0_11] : memref<16x128xf32, #tpu.memory_space<vmem>>, vector<16x128xf32>
      %c0_12 = arith.constant 0 : index
      %c0_13 = arith.constant 0 : index
      %13 = vector.load %arg5[%c0_12, %c0_13] : memref<1x128xf32, #tpu.memory_space<vmem>>, vector<1x128xf32>
      %14 = vector.broadcast %13 : vector<1x128xf32> to vector<16x128xf32>
      %15 = arith.addf %12, %14 : vector<16x128xf32>
      %16 = vector.shape_cast %15 : vector<16x128xf32> to vector<1x16x128xf32>
      %17 = arith.truncf %16 : vector<1x16x128xf32> to vector<1x16x128xbf16>
      %c0_14 = arith.constant 0 : index
      %c0_15 = arith.constant 0 : index
      %c0_16 = arith.constant 0 : index
      %18 = vector.load %arg6[%c0_14, %c0_15, %c0_16] : memref<1x16x128xbf16, #tpu.memory_space<vmem>>, vector<1x16x128xbf16>
      tpu.vector_store %arg6[%c0_14, %c0_15, %c0_16], %17 {strides = array<i32>} : memref<1x16x128xbf16, #tpu.memory_space<vmem>>, vector<1x16x128xbf16>,
    } else {
    }
    return
  }
  func.func @transform_0(%arg0: i32, %arg1: i32, %arg2: i32) -> (i32, i32) {
    %c0_i32 = arith.constant 0 : i32
    return %arg0, %arg2 : i32, i32
  }
  func.func @transform_1(%arg0: i32, %arg1: i32, %arg2: i32) -> (i32, i32) {
    %c0_i32 = arith.constant 0 : i32
    return %arg2, %arg1 : i32, i32
  }
  func.func @transform_2(%arg0: i32, %arg1: i32, %arg2: i32) -> (i32, i32) {
    %c0_i32 = arith.constant 0 : i32
    %c0_i32_0 = arith.constant 0 : i32
    return %c0_i32, %arg1 : i32, i32
  }
  func.func @transform_3(%arg0: i32, %arg1: i32, %arg2: i32) -> (i32, i32, i32) {
    %c0_i32 = arith.constant 0 : i32
    %c0_i32_0 = arith.constant 0 : i32
    return %arg1, %arg0, %c0_i32 : i32, i32, i32
  }
}

module attributes {stable_mosaic.version = 11 : i64} {
  func.func @_flash_attn_kernel(%arg0: i32, %arg1: i32, %arg2: i32, %arg3: memref<1x8x128xbf16, #tpu.memory_space<vmem>>, %arg4: memref<1x8x128xbf16, #tpu.memory_space<vmem>>, %arg5: memref<1x8x128xbf16, #tpu.memory_space<vmem>>, %arg6: memref<1x1x8xf32, #tpu.memory_space<vmem>>, %arg7: memref<1x8x32xbf16, #tpu.memory_space<vmem>>, %arg8: memref<4x8x1xf32, #tpu.memory_space<vmem>>, %arg9: memref<4x8x1xf32, #tpu.memory_space<vmem>>, %arg10: memref<4x8x8xf32, #tpu.memory_space<vmem>>) attributes {dimension_semantics = [#tpu.dimension_semantics<parallel>, #tpu.dimension_semantics<parallel>, #tpu.dimension_semantics<arbitrary>], iteration_bounds = array<i64: 2, 1, 1>, scalar_prefetch = 0 : i64, scratch_operands = 3 : i64, tpu.core_type = #tpu.core_type<tc>, window_params = [{transform_indices = @transform_0, window_bounds = array<i64: 1, 8, 128>}, {transform_indices = @transform_1, window_bounds = array<i64: 1, 8, 128>}, {transform_indices = @transform_2, window_bounds = array<i64: 1, 8, 128>}, {transform_indices = @transform_3, window_bounds = array<i64: 1, 1, 8>}, {transform_indices = @transform_4, window_bounds = array<i64: 1, 8, 32>}]} {
    %c0_i32 = arith.constant 0 : i32
    %0 = arith.cmpi eq, %arg2, %c0_i32 : i32
    %1 = arith.extui %0 : i1 to i32
    %c0_i32_0 = arith.constant 0 : i32
    %2 = arith.cmpi ne, %1, %c0_i32_0 : i32
    scf.if %2 {
      %cst_126 = arith.constant 0xFF800000 : f32
      %180 = vector.broadcast %cst_126 : f32 to vector<4x8x1xf32>
      %c0_127 = arith.constant 0 : index
      %c0_128 = arith.constant 0 : index
      %c0_129 = arith.constant 0 : index
      %181 = vector.load %arg8[%c0_127, %c0_128, %c0_129] : memref<4x8x1xf32, #tpu.memory_space<vmem>>, vector<4x8x1xf32>
      tpu.vector_store %arg8[%c0_127, %c0_128, %c0_129], %180 {strides = array<i32>} : memref<4x8x1xf32, #tpu.memory_space<vmem>>, vector<4x8x1xf32>,
      %cst_130 = arith.constant 0.000000e+00 : f32
      %182 = vector.broadcast %cst_130 : f32 to vector<4x8x1xf32>
      %c0_131 = arith.constant 0 : index
      %c0_132 = arith.constant 0 : index
      %c0_133 = arith.constant 0 : index
      %183 = vector.load %arg9[%c0_131, %c0_132, %c0_133] : memref<4x8x1xf32, #tpu.memory_space<vmem>>, vector<4x8x1xf32>
      tpu.vector_store %arg9[%c0_131, %c0_132, %c0_133], %182 {strides = array<i32>} : memref<4x8x1xf32, #tpu.memory_space<vmem>>, vector<4x8x1xf32>,
      %cst_134 = arith.constant 0.000000e+00 : f32
      %184 = vector.broadcast %cst_134 : f32 to vector<4x8x8xf32>
      %c0_135 = arith.constant 0 : index
      %c0_136 = arith.constant 0 : index
      %c0_137 = arith.constant 0 : index
      %185 = vector.load %arg10[%c0_135, %c0_136, %c0_137] : memref<4x8x8xf32, #tpu.memory_space<vmem>>, vector<4x8x8xf32>
      tpu.vector_store %arg10[%c0_135, %c0_136, %c0_137], %184 {strides = array<i32>} : memref<4x8x8xf32, #tpu.memory_space<vmem>>, vector<4x8x8xf32>,
    } else {
    }
    %c0 = arith.constant 0 : index
    %c0_1 = arith.constant 0 : index
    %c0_2 = arith.constant 0 : index
    %3 = vector.load %arg6[%c0, %c0_1, %c0_2] : memref<1x1x8xf32, #tpu.memory_space<vmem>>, vector<1x1x8xf32>
    %4 = vector.shape_cast %3 : vector<1x1x8xf32> to vector<1x8xf32>
    %c0_3 = arith.constant 0 : index
    %c0_4 = arith.constant 0 : index
    %c0_5 = arith.constant 0 : index
    %5 = vector.load %arg3[%c0_3, %c0_4, %c0_5] : memref<1x8x128xbf16, #tpu.memory_space<vmem>>, vector<1x8x8xbf16>
    %6 = vector.shape_cast %5 : vector<1x8x8xbf16> to vector<8x8xbf16>
    %c0_6 = arith.constant 0 : index
    %c0_7 = arith.constant 0 : index
    %c0_8 = arith.constant 0 : index
    %7 = vector.load %arg4[%c0_6, %c0_7, %c0_8] : memref<1x8x128xbf16, #tpu.memory_space<vmem>>, vector<1x8x8xbf16>
    %8 = vector.shape_cast %7 : vector<1x8x8xbf16> to vector<8x8xbf16>
    %c0_9 = arith.constant 0 : index
    %c0_10 = arith.constant 0 : index
    %c0_11 = arith.constant 0 : index
    %9 = vector.load %arg5[%c0_9, %c0_10, %c0_11] : memref<1x8x128xbf16, #tpu.memory_space<vmem>>, vector<1x8x8xbf16>
    %10 = vector.shape_cast %9 : vector<1x8x8xbf16> to vector<8x8xbf16>
    %cst = arith.constant dense<0.000000e+00> : vector<8x8xf32>
    %11 = tpu.matmul %6, %8, %cst {dimension_numbers = #tpu.dot_dimension_numbers<[1], [1], [0], [0], [0, 0, 1, 0], [], []>} : vector<8x8xbf16>, vector<8x8xbf16>, vector<8x8xf32> -> vector<8x8xf32>
    %cst_12 = arith.constant 0.353553385 : f32
    %12 = vector.broadcast %cst_12 : f32 to vector<8x8xf32>
    %13 = arith.mulf %11, %12 : vector<8x8xf32>
    %14 = vector.broadcast %4 : vector<1x8xf32> to vector<8x8xf32>
    %15 = arith.addf %13, %14 : vector<8x8xf32>
    %c0_13 = arith.constant 0 : index
    %c0_14 = arith.constant 0 : index
    %c0_15 = arith.constant 0 : index
    %16 = vector.load %arg8[%c0_13, %c0_14, %c0_15] : memref<4x8x1xf32, #tpu.memory_space<vmem>>, vector<1x8x1xf32>
    %17 = vector.shape_cast %16 : vector<1x8x1xf32> to vector<8x1xf32>
    %cst_16 = arith.constant dense<0xFF800000> : vector<8xf32>
    %18 = vector.multi_reduction <maximumf>, %15, %cst_16 [1] : vector<8x8xf32> to vector<8xf32>
    %19 = vector.shape_cast %18 : vector<8xf32> to vector<8x1xf32>
    %20 = arith.maximumf %17, %19 : vector<8x1xf32>
    %21 = arith.subf %17, %20 : vector<8x1xf32>
    %22 = math.exp %21 : vector<8x1xf32>
    %23 = vector.broadcast %20 : vector<8x1xf32> to vector<8x8xf32>
    %24 = arith.subf %15, %23 : vector<8x8xf32>
    %25 = math.exp %24 : vector<8x8xf32>
    %c0_17 = arith.constant 0 : index
    %c0_18 = arith.constant 0 : index
    %c0_19 = arith.constant 0 : index
    %26 = vector.load %arg9[%c0_17, %c0_18, %c0_19] : memref<4x8x1xf32, #tpu.memory_space<vmem>>, vector<1x8x1xf32>
    %27 = vector.shape_cast %26 : vector<1x8x1xf32> to vector<8x1xf32>
    %28 = arith.mulf %22, %27 : vector<8x1xf32>
    %cst_20 = arith.constant dense<0.000000e+00> : vector<8xf32>
    %29 = vector.multi_reduction <add>, %25, %cst_20 [1] : vector<8x8xf32> to vector<8xf32>
    %30 = vector.shape_cast %29 : vector<8xf32> to vector<8x1xf32>
    %31 = arith.addf %28, %30 : vector<8x1xf32>
    %c0_21 = arith.constant 0 : index
    %c0_22 = arith.constant 0 : index
    %c0_23 = arith.constant 0 : index
    %32 = vector.load %arg9[%c0_21, %c0_22, %c0_23] : memref<4x8x1xf32, #tpu.memory_space<vmem>>, vector<1x8x1xf32>
    %33 = vector.shape_cast %32 : vector<1x8x1xf32> to vector<8x1xf32>
    %34 = vector.shape_cast %31 : vector<8x1xf32> to vector<1x8x1xf32>
    tpu.vector_store %arg9[%c0_21, %c0_22, %c0_23], %34 {strides = array<i32>} : memref<4x8x1xf32, #tpu.memory_space<vmem>>, vector<1x8x1xf32>,
    %c0_24 = arith.constant 0 : index
    %c0_25 = arith.constant 0 : index
    %c0_26 = arith.constant 0 : index
    %35 = vector.load %arg10[%c0_24, %c0_25, %c0_26] : memref<4x8x8xf32, #tpu.memory_space<vmem>>, vector<1x8x8xf32>
    %36 = vector.shape_cast %35 : vector<1x8x8xf32> to vector<8x8xf32>
    %37 = vector.broadcast %22 : vector<8x1xf32> to vector<8x8xf32>
    %38 = arith.mulf %37, %36 : vector<8x8xf32>
    %39 = arith.truncf %25 : vector<8x8xf32> to vector<8x8xbf16>
    %cst_27 = arith.constant dense<0.000000e+00> : vector<8x8xf32>
    %40 = tpu.matmul %39, %10, %cst_27 {dimension_numbers = #tpu.dot_dimension_numbers<[1], [0], [0], [1], [0, 0, 1, 1], [], []>} : vector<8x8xbf16>, vector<8x8xbf16>, vector<8x8xf32> -> vector<8x8xf32>
    %41 = arith.addf %38, %40 : vector<8x8xf32>
    %c0_28 = arith.constant 0 : index
    %c0_29 = arith.constant 0 : index
    %c0_30 = arith.constant 0 : index
    %42 = vector.load %arg10[%c0_28, %c0_29, %c0_30] : memref<4x8x8xf32, #tpu.memory_space<vmem>>, vector<1x8x8xf32>
    %43 = vector.shape_cast %42 : vector<1x8x8xf32> to vector<8x8xf32>
    %44 = vector.shape_cast %41 : vector<8x8xf32> to vector<1x8x8xf32>
    tpu.vector_store %arg10[%c0_28, %c0_29, %c0_30], %44 {strides = array<i32>} : memref<4x8x8xf32, #tpu.memory_space<vmem>>, vector<1x8x8xf32>,
    %c0_31 = arith.constant 0 : index
    %c0_32 = arith.constant 0 : index
    %c0_33 = arith.constant 0 : index
    %45 = vector.load %arg8[%c0_31, %c0_32, %c0_33] : memref<4x8x1xf32, #tpu.memory_space<vmem>>, vector<1x8x1xf32>
    %46 = vector.shape_cast %45 : vector<1x8x1xf32> to vector<8x1xf32>
    %47 = vector.shape_cast %20 : vector<8x1xf32> to vector<1x8x1xf32>
    tpu.vector_store %arg8[%c0_31, %c0_32, %c0_33], %47 {strides = array<i32>} : memref<4x8x1xf32, #tpu.memory_space<vmem>>, vector<1x8x1xf32>,
    %c0_34 = arith.constant 0 : index
    %c0_35 = arith.constant 0 : index
    %c8 = arith.constant 8 : index
    %48 = vector.load %arg3[%c0_34, %c0_35, %c8] : memref<1x8x128xbf16, #tpu.memory_space<vmem>>, vector<1x8x8xbf16>
    %49 = vector.shape_cast %48 : vector<1x8x8xbf16> to vector<8x8xbf16>
    %c0_36 = arith.constant 0 : index
    %c0_37 = arith.constant 0 : index
    %c8_38 = arith.constant 8 : index
    %50 = vector.load %arg4[%c0_36, %c0_37, %c8_38] : memref<1x8x128xbf16, #tpu.memory_space<vmem>>, vector<1x8x8xbf16>
    %51 = vector.shape_cast %50 : vector<1x8x8xbf16> to vector<8x8xbf16>
    %c0_39 = arith.constant 0 : index
    %c0_40 = arith.constant 0 : index
    %c8_41 = arith.constant 8 : index
    %52 = vector.load %arg5[%c0_39, %c0_40, %c8_41] : memref<1x8x128xbf16, #tpu.memory_space<vmem>>, vector<1x8x8xbf16>
    %53 = vector.shape_cast %52 : vector<1x8x8xbf16> to vector<8x8xbf16>
    %cst_42 = arith.constant dense<0.000000e+00> : vector<8x8xf32>
    %54 = tpu.matmul %49, %51, %cst_42 {dimension_numbers = #tpu.dot_dimension_numbers<[1], [1], [0], [0], [0, 0, 1, 0], [], []>} : vector<8x8xbf16>, vector<8x8xbf16>, vector<8x8xf32> -> vector<8x8xf32>
    %cst_43 = arith.constant 0.353553385 : f32
    %55 = vector.broadcast %cst_43 : f32 to vector<8x8xf32>
    %56 = arith.mulf %54, %55 : vector<8x8xf32>
    %57 = vector.broadcast %4 : vector<1x8xf32> to vector<8x8xf32>
    %58 = arith.addf %56, %57 : vector<8x8xf32>
    %c1 = arith.constant 1 : index
    %c0_44 = arith.constant 0 : index
    %c0_45 = arith.constant 0 : index
    %59 = vector.load %arg8[%c1, %c0_44, %c0_45] : memref<4x8x1xf32, #tpu.memory_space<vmem>>, vector<1x8x1xf32>
    %60 = vector.shape_cast %59 : vector<1x8x1xf32> to vector<8x1xf32>
    %cst_46 = arith.constant dense<0xFF800000> : vector<8xf32>
    %61 = vector.multi_reduction <maximumf>, %58, %cst_46 [1] : vector<8x8xf32> to vector<8xf32>
    %62 = vector.shape_cast %61 : vector<8xf32> to vector<8x1xf32>
    %63 = arith.maximumf %60, %62 : vector<8x1xf32>
    %64 = arith.subf %60, %63 : vector<8x1xf32>
    %65 = math.exp %64 : vector<8x1xf32>
    %66 = vector.broadcast %63 : vector<8x1xf32> to vector<8x8xf32>
    %67 = arith.subf %58, %66 : vector<8x8xf32>
    %68 = math.exp %67 : vector<8x8xf32>
    %c1_47 = arith.constant 1 : index
    %c0_48 = arith.constant 0 : index
    %c0_49 = arith.constant 0 : index
    %69 = vector.load %arg9[%c1_47, %c0_48, %c0_49] : memref<4x8x1xf32, #tpu.memory_space<vmem>>, vector<1x8x1xf32>
    %70 = vector.shape_cast %69 : vector<1x8x1xf32> to vector<8x1xf32>
    %71 = arith.mulf %65, %70 : vector<8x1xf32>
    %cst_50 = arith.constant dense<0.000000e+00> : vector<8xf32>
    %72 = vector.multi_reduction <add>, %68, %cst_50 [1] : vector<8x8xf32> to vector<8xf32>
    %73 = vector.shape_cast %72 : vector<8xf32> to vector<8x1xf32>
    %74 = arith.addf %71, %73 : vector<8x1xf32>
    %c1_51 = arith.constant 1 : index
    %c0_52 = arith.constant 0 : index
    %c0_53 = arith.constant 0 : index
    %75 = vector.load %arg9[%c1_51, %c0_52, %c0_53] : memref<4x8x1xf32, #tpu.memory_space<vmem>>, vector<1x8x1xf32>
    %76 = vector.shape_cast %75 : vector<1x8x1xf32> to vector<8x1xf32>
    %77 = vector.shape_cast %74 : vector<8x1xf32> to vector<1x8x1xf32>
    tpu.vector_store %arg9[%c1_51, %c0_52, %c0_53], %77 {strides = array<i32>} : memref<4x8x1xf32, #tpu.memory_space<vmem>>, vector<1x8x1xf32>,
    %c1_54 = arith.constant 1 : index
    %c0_55 = arith.constant 0 : index
    %c0_56 = arith.constant 0 : index
    %78 = vector.load %arg10[%c1_54, %c0_55, %c0_56] : memref<4x8x8xf32, #tpu.memory_space<vmem>>, vector<1x8x8xf32>
    %79 = vector.shape_cast %78 : vector<1x8x8xf32> to vector<8x8xf32>
    %80 = vector.broadcast %65 : vector<8x1xf32> to vector<8x8xf32>
    %81 = arith.mulf %80, %79 : vector<8x8xf32>
    %82 = arith.truncf %68 : vector<8x8xf32> to vector<8x8xbf16>
    %cst_57 = arith.constant dense<0.000000e+00> : vector<8x8xf32>
    %83 = tpu.matmul %82, %53, %cst_57 {dimension_numbers = #tpu.dot_dimension_numbers<[1], [0], [0], [1], [0, 0, 1, 1], [], []>} : vector<8x8xbf16>, vector<8x8xbf16>, vector<8x8xf32> -> vector<8x8xf32>
    %84 = arith.addf %81, %83 : vector<8x8xf32>
    %c1_58 = arith.constant 1 : index
    %c0_59 = arith.constant 0 : index
    %c0_60 = arith.constant 0 : index
    %85 = vector.load %arg10[%c1_58, %c0_59, %c0_60] : memref<4x8x8xf32, #tpu.memory_space<vmem>>, vector<1x8x8xf32>
    %86 = vector.shape_cast %85 : vector<1x8x8xf32> to vector<8x8xf32>
    %87 = vector.shape_cast %84 : vector<8x8xf32> to vector<1x8x8xf32>
    tpu.vector_store %arg10[%c1_58, %c0_59, %c0_60], %87 {strides = array<i32>} : memref<4x8x8xf32, #tpu.memory_space<vmem>>, vector<1x8x8xf32>,
    %c1_61 = arith.constant 1 : index
    %c0_62 = arith.constant 0 : index
    %c0_63 = arith.constant 0 : index
    %88 = vector.load %arg8[%c1_61, %c0_62, %c0_63] : memref<4x8x1xf32, #tpu.memory_space<vmem>>, vector<1x8x1xf32>
    %89 = vector.shape_cast %88 : vector<1x8x1xf32> to vector<8x1xf32>
    %90 = vector.shape_cast %63 : vector<8x1xf32> to vector<1x8x1xf32>
    tpu.vector_store %arg8[%c1_61, %c0_62, %c0_63], %90 {strides = array<i32>} : memref<4x8x1xf32, #tpu.memory_space<vmem>>, vector<1x8x1xf32>,
    %c0_64 = arith.constant 0 : index
    %c0_65 = arith.constant 0 : index
    %c16 = arith.constant 16 : index
    %91 = vector.load %arg3[%c0_64, %c0_65, %c16] : memref<1x8x128xbf16, #tpu.memory_space<vmem>>, vector<1x8x8xbf16>
    %92 = vector.shape_cast %91 : vector<1x8x8xbf16> to vector<8x8xbf16>
    %c0_66 = arith.constant 0 : index
    %c0_67 = arith.constant 0 : index
    %c16_68 = arith.constant 16 : index
    %93 = vector.load %arg4[%c0_66, %c0_67, %c16_68] : memref<1x8x128xbf16, #tpu.memory_space<vmem>>, vector<1x8x8xbf16>
    %94 = vector.shape_cast %93 : vector<1x8x8xbf16> to vector<8x8xbf16>
    %c0_69 = arith.constant 0 : index
    %c0_70 = arith.constant 0 : index
    %c16_71 = arith.constant 16 : index
    %95 = vector.load %arg5[%c0_69, %c0_70, %c16_71] : memref<1x8x128xbf16, #tpu.memory_space<vmem>>, vector<1x8x8xbf16>
    %96 = vector.shape_cast %95 : vector<1x8x8xbf16> to vector<8x8xbf16>
    %cst_72 = arith.constant dense<0.000000e+00> : vector<8x8xf32>
    %97 = tpu.matmul %92, %94, %cst_72 {dimension_numbers = #tpu.dot_dimension_numbers<[1], [1], [0], [0], [0, 0, 1, 0], [], []>} : vector<8x8xbf16>, vector<8x8xbf16>, vector<8x8xf32> -> vector<8x8xf32>
    %cst_73 = arith.constant 0.353553385 : f32
    %98 = vector.broadcast %cst_73 : f32 to vector<8x8xf32>
    %99 = arith.mulf %97, %98 : vector<8x8xf32>
    %100 = vector.broadcast %4 : vector<1x8xf32> to vector<8x8xf32>
    %101 = arith.addf %99, %100 : vector<8x8xf32>
    %c2 = arith.constant 2 : index
    %c0_74 = arith.constant 0 : index
    %c0_75 = arith.constant 0 : index
    %102 = vector.load %arg8[%c2, %c0_74, %c0_75] : memref<4x8x1xf32, #tpu.memory_space<vmem>>, vector<1x8x1xf32>
    %103 = vector.shape_cast %102 : vector<1x8x1xf32> to vector<8x1xf32>
    %cst_76 = arith.constant dense<0xFF800000> : vector<8xf32>
    %104 = vector.multi_reduction <maximumf>, %101, %cst_76 [1] : vector<8x8xf32> to vector<8xf32>
    %105 = vector.shape_cast %104 : vector<8xf32> to vector<8x1xf32>
    %106 = arith.maximumf %103, %105 : vector<8x1xf32>
    %107 = arith.subf %103, %106 : vector<8x1xf32>
    %108 = math.exp %107 : vector<8x1xf32>
    %109 = vector.broadcast %106 : vector<8x1xf32> to vector<8x8xf32>
    %110 = arith.subf %101, %109 : vector<8x8xf32>
    %111 = math.exp %110 : vector<8x8xf32>
    %c2_77 = arith.constant 2 : index
    %c0_78 = arith.constant 0 : index
    %c0_79 = arith.constant 0 : index
    %112 = vector.load %arg9[%c2_77, %c0_78, %c0_79] : memref<4x8x1xf32, #tpu.memory_space<vmem>>, vector<1x8x1xf32>
    %113 = vector.shape_cast %112 : vector<1x8x1xf32> to vector<8x1xf32>
    %114 = arith.mulf %108, %113 : vector<8x1xf32>
    %cst_80 = arith.constant dense<0.000000e+00> : vector<8xf32>
    %115 = vector.multi_reduction <add>, %111, %cst_80 [1] : vector<8x8xf32> to vector<8xf32>
    %116 = vector.shape_cast %115 : vector<8xf32> to vector<8x1xf32>
    %117 = arith.addf %114, %116 : vector<8x1xf32>
    %c2_81 = arith.constant 2 : index
    %c0_82 = arith.constant 0 : index
    %c0_83 = arith.constant 0 : index
    %118 = vector.load %arg9[%c2_81, %c0_82, %c0_83] : memref<4x8x1xf32, #tpu.memory_space<vmem>>, vector<1x8x1xf32>
    %119 = vector.shape_cast %118 : vector<1x8x1xf32> to vector<8x1xf32>
    %120 = vector.shape_cast %117 : vector<8x1xf32> to vector<1x8x1xf32>
    tpu.vector_store %arg9[%c2_81, %c0_82, %c0_83], %120 {strides = array<i32>} : memref<4x8x1xf32, #tpu.memory_space<vmem>>, vector<1x8x1xf32>,
    %c2_84 = arith.constant 2 : index
    %c0_85 = arith.constant 0 : index
    %c0_86 = arith.constant 0 : index
    %121 = vector.load %arg10[%c2_84, %c0_85, %c0_86] : memref<4x8x8xf32, #tpu.memory_space<vmem>>, vector<1x8x8xf32>
    %122 = vector.shape_cast %121 : vector<1x8x8xf32> to vector<8x8xf32>
    %123 = vector.broadcast %108 : vector<8x1xf32> to vector<8x8xf32>
    %124 = arith.mulf %123, %122 : vector<8x8xf32>
    %125 = arith.truncf %111 : vector<8x8xf32> to vector<8x8xbf16>
    %cst_87 = arith.constant dense<0.000000e+00> : vector<8x8xf32>
    %126 = tpu.matmul %125, %96, %cst_87 {dimension_numbers = #tpu.dot_dimension_numbers<[1], [0], [0], [1], [0, 0, 1, 1], [], []>} : vector<8x8xbf16>, vector<8x8xbf16>, vector<8x8xf32> -> vector<8x8xf32>
    %127 = arith.addf %124, %126 : vector<8x8xf32>
    %c2_88 = arith.constant 2 : index
    %c0_89 = arith.constant 0 : index
    %c0_90 = arith.constant 0 : index
    %128 = vector.load %arg10[%c2_88, %c0_89, %c0_90] : memref<4x8x8xf32, #tpu.memory_space<vmem>>, vector<1x8x8xf32>
    %129 = vector.shape_cast %128 : vector<1x8x8xf32> to vector<8x8xf32>
    %130 = vector.shape_cast %127 : vector<8x8xf32> to vector<1x8x8xf32>
    tpu.vector_store %arg10[%c2_88, %c0_89, %c0_90], %130 {strides = array<i32>} : memref<4x8x8xf32, #tpu.memory_space<vmem>>, vector<1x8x8xf32>,
    %c2_91 = arith.constant 2 : index
    %c0_92 = arith.constant 0 : index
    %c0_93 = arith.constant 0 : index
    %131 = vector.load %arg8[%c2_91, %c0_92, %c0_93] : memref<4x8x1xf32, #tpu.memory_space<vmem>>, vector<1x8x1xf32>
    %132 = vector.shape_cast %131 : vector<1x8x1xf32> to vector<8x1xf32>
    %133 = vector.shape_cast %106 : vector<8x1xf32> to vector<1x8x1xf32>
    tpu.vector_store %arg8[%c2_91, %c0_92, %c0_93], %133 {strides = array<i32>} : memref<4x8x1xf32, #tpu.memory_space<vmem>>, vector<1x8x1xf32>,
    %c0_94 = arith.constant 0 : index
    %c0_95 = arith.constant 0 : index
    %c24 = arith.constant 24 : index
    %134 = vector.load %arg3[%c0_94, %c0_95, %c24] : memref<1x8x128xbf16, #tpu.memory_space<vmem>>, vector<1x8x8xbf16>
    %135 = vector.shape_cast %134 : vector<1x8x8xbf16> to vector<8x8xbf16>
    %c0_96 = arith.constant 0 : index
    %c0_97 = arith.constant 0 : index
    %c24_98 = arith.constant 24 : index
    %136 = vector.load %arg4[%c0_96, %c0_97, %c24_98] : memref<1x8x128xbf16, #tpu.memory_space<vmem>>, vector<1x8x8xbf16>
    %137 = vector.shape_cast %136 : vector<1x8x8xbf16> to vector<8x8xbf16>
    %c0_99 = arith.constant 0 : index
    %c0_100 = arith.constant 0 : index
    %c24_101 = arith.constant 24 : index
    %138 = vector.load %arg5[%c0_99, %c0_100, %c24_101] : memref<1x8x128xbf16, #tpu.memory_space<vmem>>, vector<1x8x8xbf16>
    %139 = vector.shape_cast %138 : vector<1x8x8xbf16> to vector<8x8xbf16>
    %cst_102 = arith.constant dense<0.000000e+00> : vector<8x8xf32>
    %140 = tpu.matmul %135, %137, %cst_102 {dimension_numbers = #tpu.dot_dimension_numbers<[1], [1], [0], [0], [0, 0, 1, 0], [], []>} : vector<8x8xbf16>, vector<8x8xbf16>, vector<8x8xf32> -> vector<8x8xf32>
    %cst_103 = arith.constant 0.353553385 : f32
    %141 = vector.broadcast %cst_103 : f32 to vector<8x8xf32>
    %142 = arith.mulf %140, %141 : vector<8x8xf32>
    %143 = vector.broadcast %4 : vector<1x8xf32> to vector<8x8xf32>
    %144 = arith.addf %142, %143 : vector<8x8xf32>
    %c3 = arith.constant 3 : index
    %c0_104 = arith.constant 0 : index
    %c0_105 = arith.constant 0 : index
    %145 = vector.load %arg8[%c3, %c0_104, %c0_105] : memref<4x8x1xf32, #tpu.memory_space<vmem>>, vector<1x8x1xf32>
    %146 = vector.shape_cast %145 : vector<1x8x1xf32> to vector<8x1xf32>
    %cst_106 = arith.constant dense<0xFF800000> : vector<8xf32>
    %147 = vector.multi_reduction <maximumf>, %144, %cst_106 [1] : vector<8x8xf32> to vector<8xf32>
    %148 = vector.shape_cast %147 : vector<8xf32> to vector<8x1xf32>
    %149 = arith.maximumf %146, %148 : vector<8x1xf32>
    %150 = arith.subf %146, %149 : vector<8x1xf32>
    %151 = math.exp %150 : vector<8x1xf32>
    %152 = vector.broadcast %149 : vector<8x1xf32> to vector<8x8xf32>
    %153 = arith.subf %144, %152 : vector<8x8xf32>
    %154 = math.exp %153 : vector<8x8xf32>
    %c3_107 = arith.constant 3 : index
    %c0_108 = arith.constant 0 : index
    %c0_109 = arith.constant 0 : index
    %155 = vector.load %arg9[%c3_107, %c0_108, %c0_109] : memref<4x8x1xf32, #tpu.memory_space<vmem>>, vector<1x8x1xf32>
    %156 = vector.shape_cast %155 : vector<1x8x1xf32> to vector<8x1xf32>
    %157 = arith.mulf %151, %156 : vector<8x1xf32>
    %cst_110 = arith.constant dense<0.000000e+00> : vector<8xf32>
    %158 = vector.multi_reduction <add>, %154, %cst_110 [1] : vector<8x8xf32> to vector<8xf32>
    %159 = vector.shape_cast %158 : vector<8xf32> to vector<8x1xf32>
    %160 = arith.addf %157, %159 : vector<8x1xf32>
    %c3_111 = arith.constant 3 : index
    %c0_112 = arith.constant 0 : index
    %c0_113 = arith.constant 0 : index
    %161 = vector.load %arg9[%c3_111, %c0_112, %c0_113] : memref<4x8x1xf32, #tpu.memory_space<vmem>>, vector<1x8x1xf32>
    %162 = vector.shape_cast %161 : vector<1x8x1xf32> to vector<8x1xf32>
    %163 = vector.shape_cast %160 : vector<8x1xf32> to vector<1x8x1xf32>
    tpu.vector_store %arg9[%c3_111, %c0_112, %c0_113], %163 {strides = array<i32>} : memref<4x8x1xf32, #tpu.memory_space<vmem>>, vector<1x8x1xf32>,
    %c3_114 = arith.constant 3 : index
    %c0_115 = arith.constant 0 : index
    %c0_116 = arith.constant 0 : index
    %164 = vector.load %arg10[%c3_114, %c0_115, %c0_116] : memref<4x8x8xf32, #tpu.memory_space<vmem>>, vector<1x8x8xf32>
    %165 = vector.shape_cast %164 : vector<1x8x8xf32> to vector<8x8xf32>
    %166 = vector.broadcast %151 : vector<8x1xf32> to vector<8x8xf32>
    %167 = arith.mulf %166, %165 : vector<8x8xf32>
    %168 = arith.truncf %154 : vector<8x8xf32> to vector<8x8xbf16>
    %cst_117 = arith.constant dense<0.000000e+00> : vector<8x8xf32>
    %169 = tpu.matmul %168, %139, %cst_117 {dimension_numbers = #tpu.dot_dimension_numbers<[1], [0], [0], [1], [0, 0, 1, 1], [], []>} : vector<8x8xbf16>, vector<8x8xbf16>, vector<8x8xf32> -> vector<8x8xf32>
    %170 = arith.addf %167, %169 : vector<8x8xf32>
    %c3_118 = arith.constant 3 : index
    %c0_119 = arith.constant 0 : index
    %c0_120 = arith.constant 0 : index
    %171 = vector.load %arg10[%c3_118, %c0_119, %c0_120] : memref<4x8x8xf32, #tpu.memory_space<vmem>>, vector<1x8x8xf32>
    %172 = vector.shape_cast %171 : vector<1x8x8xf32> to vector<8x8xf32>
    %173 = vector.shape_cast %170 : vector<8x8xf32> to vector<1x8x8xf32>
    tpu.vector_store %arg10[%c3_118, %c0_119, %c0_120], %173 {strides = array<i32>} : memref<4x8x8xf32, #tpu.memory_space<vmem>>, vector<1x8x8xf32>,
    %c3_121 = arith.constant 3 : index
    %c0_122 = arith.constant 0 : index
    %c0_123 = arith.constant 0 : index
    %174 = vector.load %arg8[%c3_121, %c0_122, %c0_123] : memref<4x8x1xf32, #tpu.memory_space<vmem>>, vector<1x8x1xf32>
    %175 = vector.shape_cast %174 : vector<1x8x1xf32> to vector<8x1xf32>
    %176 = vector.shape_cast %149 : vector<8x1xf32> to vector<1x8x1xf32>
    tpu.vector_store %arg8[%c3_121, %c0_122, %c0_123], %176 {strides = array<i32>} : memref<4x8x1xf32, #tpu.memory_space<vmem>>, vector<1x8x1xf32>,
    %c0_i32_124 = arith.constant 0 : i32
    %177 = arith.cmpi eq, %arg2, %c0_i32_124 : i32
    %178 = arith.extui %177 : i1 to i32
    %c0_i32_125 = arith.constant 0 : i32
    %179 = arith.cmpi ne, %178, %c0_i32_125 : i32
    scf.if %179 {
      %c0_126 = arith.constant 0 : index
      %c0_127 = arith.constant 0 : index
      %c0_128 = arith.constant 0 : index
      %180 = vector.load %arg9[%c0_126, %c0_127, %c0_128] : memref<4x8x1xf32, #tpu.memory_space<vmem>>, vector<1x8x1xf32>
      %181 = vector.shape_cast %180 : vector<1x8x1xf32> to vector<8x1xf32>
      %182 = tpu.reciprocal %181 {approx = true} : vector<8x1xf32> -> vector<8x1xf32>
      %c0_129 = arith.constant 0 : index
      %c0_130 = arith.constant 0 : index
      %c0_131 = arith.constant 0 : index
      %183 = vector.load %arg10[%c0_129, %c0_130, %c0_131] : memref<4x8x8xf32, #tpu.memory_space<vmem>>, vector<1x8x8xf32>
      %184 = vector.shape_cast %183 : vector<1x8x8xf32> to vector<8x8xf32>
      %185 = vector.broadcast %182 : vector<8x1xf32> to vector<8x8xf32>
      %186 = arith.mulf %184, %185 : vector<8x8xf32>
      %187 = arith.truncf %186 : vector<8x8xf32> to vector<8x8xbf16>
      %c0_132 = arith.constant 0 : index
      %c0_133 = arith.constant 0 : index
      %c0_134 = arith.constant 0 : index
      %188 = vector.load %arg7[%c0_132, %c0_133, %c0_134] : memref<1x8x32xbf16, #tpu.memory_space<vmem>>, vector<1x8x8xbf16>
      %189 = vector.shape_cast %188 : vector<1x8x8xbf16> to vector<8x8xbf16>
      %190 = vector.shape_cast %187 : vector<8x8xbf16> to vector<1x8x8xbf16>
      tpu.vector_store %arg7[%c0_132, %c0_133, %c0_134], %190 {strides = array<i32>} : memref<1x8x32xbf16, #tpu.memory_space<vmem>>, vector<1x8x8xbf16>,
      %c1_135 = arith.constant 1 : index
      %c0_136 = arith.constant 0 : index
      %c0_137 = arith.constant 0 : index
      %191 = vector.load %arg9[%c1_135, %c0_136, %c0_137] : memref<4x8x1xf32, #tpu.memory_space<vmem>>, vector<1x8x1xf32>
      %192 = vector.shape_cast %191 : vector<1x8x1xf32> to vector<8x1xf32>
      %193 = tpu.reciprocal %192 {approx = true} : vector<8x1xf32> -> vector<8x1xf32>
      %c1_138 = arith.constant 1 : index
      %c0_139 = arith.constant 0 : index
      %c0_140 = arith.constant 0 : index
      %194 = vector.load %arg10[%c1_138, %c0_139, %c0_140] : memref<4x8x8xf32, #tpu.memory_space<vmem>>, vector<1x8x8xf32>
      %195 = vector.shape_cast %194 : vector<1x8x8xf32> to vector<8x8xf32>
      %196 = vector.broadcast %193 : vector<8x1xf32> to vector<8x8xf32>
      %197 = arith.mulf %195, %196 : vector<8x8xf32>
      %198 = arith.truncf %197 : vector<8x8xf32> to vector<8x8xbf16>
      %c0_141 = arith.constant 0 : index
      %c0_142 = arith.constant 0 : index
      %c8_143 = arith.constant 8 : index
      %199 = vector.load %arg7[%c0_141, %c0_142, %c8_143] : memref<1x8x32xbf16, #tpu.memory_space<vmem>>, vector<1x8x8xbf16>
      %200 = vector.shape_cast %199 : vector<1x8x8xbf16> to vector<8x8xbf16>
      %201 = vector.shape_cast %198 : vector<8x8xbf16> to vector<1x8x8xbf16>
      tpu.vector_store %arg7[%c0_141, %c0_142, %c8_143], %201 {strides = array<i32>} : memref<1x8x32xbf16, #tpu.memory_space<vmem>>, vector<1x8x8xbf16>,
      %c2_144 = arith.constant 2 : index
      %c0_145 = arith.constant 0 : index
      %c0_146 = arith.constant 0 : index
      %202 = vector.load %arg9[%c2_144, %c0_145, %c0_146] : memref<4x8x1xf32, #tpu.memory_space<vmem>>, vector<1x8x1xf32>
      %203 = vector.shape_cast %202 : vector<1x8x1xf32> to vector<8x1xf32>
      %204 = tpu.reciprocal %203 {approx = true} : vector<8x1xf32> -> vector<8x1xf32>
      %c2_147 = arith.constant 2 : index
      %c0_148 = arith.constant 0 : index
      %c0_149 = arith.constant 0 : index
      %205 = vector.load %arg10[%c2_147, %c0_148, %c0_149] : memref<4x8x8xf32, #tpu.memory_space<vmem>>, vector<1x8x8xf32>
      %206 = vector.shape_cast %205 : vector<1x8x8xf32> to vector<8x8xf32>
      %207 = vector.broadcast %204 : vector<8x1xf32> to vector<8x8xf32>
      %208 = arith.mulf %206, %207 : vector<8x8xf32>
      %209 = arith.truncf %208 : vector<8x8xf32> to vector<8x8xbf16>
      %c0_150 = arith.constant 0 : index
      %c0_151 = arith.constant 0 : index
      %c16_152 = arith.constant 16 : index
      %210 = vector.load %arg7[%c0_150, %c0_151, %c16_152] : memref<1x8x32xbf16, #tpu.memory_space<vmem>>, vector<1x8x8xbf16>
      %211 = vector.shape_cast %210 : vector<1x8x8xbf16> to vector<8x8xbf16>
      %212 = vector.shape_cast %209 : vector<8x8xbf16> to vector<1x8x8xbf16>
      tpu.vector_store %arg7[%c0_150, %c0_151, %c16_152], %212 {strides = array<i32>} : memref<1x8x32xbf16, #tpu.memory_space<vmem>>, vector<1x8x8xbf16>,
      %c3_153 = arith.constant 3 : index
      %c0_154 = arith.constant 0 : index
      %c0_155 = arith.constant 0 : index
      %213 = vector.load %arg9[%c3_153, %c0_154, %c0_155] : memref<4x8x1xf32, #tpu.memory_space<vmem>>, vector<1x8x1xf32>
      %214 = vector.shape_cast %213 : vector<1x8x1xf32> to vector<8x1xf32>
      %215 = tpu.reciprocal %214 {approx = true} : vector<8x1xf32> -> vector<8x1xf32>
      %c3_156 = arith.constant 3 : index
      %c0_157 = arith.constant 0 : index
      %c0_158 = arith.constant 0 : index
      %216 = vector.load %arg10[%c3_156, %c0_157, %c0_158] : memref<4x8x8xf32, #tpu.memory_space<vmem>>, vector<1x8x8xf32>
      %217 = vector.shape_cast %216 : vector<1x8x8xf32> to vector<8x8xf32>
      %218 = vector.broadcast %215 : vector<8x1xf32> to vector<8x8xf32>
      %219 = arith.mulf %217, %218 : vector<8x8xf32>
      %220 = arith.truncf %219 : vector<8x8xf32> to vector<8x8xbf16>
      %c0_159 = arith.constant 0 : index
      %c0_160 = arith.constant 0 : index
      %c24_161 = arith.constant 24 : index
      %221 = vector.load %arg7[%c0_159, %c0_160, %c24_161] : memref<1x8x32xbf16, #tpu.memory_space<vmem>>, vector<1x8x8xbf16>
      %222 = vector.shape_cast %221 : vector<1x8x8xbf16> to vector<8x8xbf16>
      %223 = vector.shape_cast %220 : vector<8x8xbf16> to vector<1x8x8xbf16>
      tpu.vector_store %arg7[%c0_159, %c0_160, %c24_161], %223 {strides = array<i32>} : memref<1x8x32xbf16, #tpu.memory_space<vmem>>, vector<1x8x8xbf16>,
    } else {
    }
    return
  }
  func.func @transform_0(%arg0: i32, %arg1: i32, %arg2: i32) -> (i32, i32, i32) {
    %c0_i32 = arith.constant 0 : i32
    %c0_i32_0 = arith.constant 0 : i32
    return %arg0, %arg1, %c0_i32 : i32, i32, i32
  }
  func.func @transform_1(%arg0: i32, %arg1: i32, %arg2: i32) -> (i32, i32, i32) {
    %c0_i32 = arith.constant 0 : i32
    %c0_i32_0 = arith.constant 0 : i32
    return %arg0, %arg2, %c0_i32 : i32, i32, i32
  }
  func.func @transform_2(%arg0: i32, %arg1: i32, %arg2: i32) -> (i32, i32, i32) {
    %c0_i32 = arith.constant 0 : i32
    %c0_i32_0 = arith.constant 0 : i32
    return %arg0, %arg2, %c0_i32 : i32, i32, i32
  }
  func.func @transform_3(%arg0: i32, %arg1: i32, %arg2: i32) -> (i32, i32, i32) {
    %c0_i32 = arith.constant 0 : i32
    %c0_i32_0 = arith.constant 0 : i32
    return %arg0, %c0_i32, %arg2 : i32, i32, i32
  }
  func.func @transform_4(%arg0: i32, %arg1: i32, %arg2: i32) -> (i32, i32, i32) {
    %c0_i32 = arith.constant 0 : i32
    %c0_i32_0 = arith.constant 0 : i32
    return %arg0, %arg1, %c0_i32 : i32, i32, i32
  }
}

module attributes {stable_mosaic.version = 11 : i64} {
  func.func @_linear_add_ln_kernel(%arg0: i32, %arg1: i32, %arg2: memref<16x32xbf16, #tpu.memory_space<vmem>>, %arg3: memref<32x32xbf16, #tpu.memory_space<vmem>>, %arg4: memref<1x32xf32, #tpu.memory_space<vmem>>, %arg5: memref<16x32xbf16, #tpu.memory_space<vmem>>, %arg6: memref<1x32xf32, #tpu.memory_space<vmem>>, %arg7: memref<1x32xf32, #tpu.memory_space<vmem>>, %arg8: memref<16x32xbf16, #tpu.memory_space<vmem>>, %arg9: memref<16x32xf32, #tpu.memory_space<vmem>>) attributes {dimension_semantics = [#tpu.dimension_semantics<parallel>, #tpu.dimension_semantics<arbitrary>], iteration_bounds = array<i64: 1, 1>, scalar_prefetch = 0 : i64, scratch_operands = 1 : i64, tpu.core_type = #tpu.core_type<tc>, window_params = [{transform_indices = @transform_0, window_bounds = array<i64: 16, 32>}, {transform_indices = @transform_1, window_bounds = array<i64: 32, 32>}, {pipeline_mode = #tpu.pipeline_mode<synchronous>, transform_indices = @transform_2, window_bounds = array<i64: 1, 32>}, {transform_indices = @transform_3, window_bounds = array<i64: 16, 32>}, {pipeline_mode = #tpu.pipeline_mode<synchronous>, transform_indices = @transform_4, window_bounds = array<i64: 1, 32>}, {pipeline_mode = #tpu.pipeline_mode<synchronous>, transform_indices = @transform_5, window_bounds = array<i64: 1, 32>}, {transform_indices = @transform_6, window_bounds = array<i64: 16, 32>}]} {
    %c0_i32 = arith.constant 0 : i32
    %0 = arith.cmpi eq, %arg1, %c0_i32 : i32
    %1 = arith.extui %0 : i1 to i32
    %c0_i32_0 = arith.constant 0 : i32
    %2 = arith.cmpi ne, %1, %c0_i32_0 : i32
    scf.if %2 {
      %cst_10 = arith.constant 0.000000e+00 : f32
      %12 = vector.broadcast %cst_10 : f32 to vector<16x32xf32>
      %c0_11 = arith.constant 0 : index
      %c0_12 = arith.constant 0 : index
      %13 = vector.load %arg9[%c0_11, %c0_12] : memref<16x32xf32, #tpu.memory_space<vmem>>, vector<16x32xf32>
      tpu.vector_store %arg9[%c0_11, %c0_12], %12 {strides = array<i32>} : memref<16x32xf32, #tpu.memory_space<vmem>>, vector<16x32xf32>,
    } else {
    }
    %c0 = arith.constant 0 : index
    %c0_1 = arith.constant 0 : index
    %3 = vector.load %arg9[%c0, %c0_1] : memref<16x32xf32, #tpu.memory_space<vmem>>, vector<16x32xf32>
    %c0_2 = arith.constant 0 : index
    %c0_3 = arith.constant 0 : index
    %4 = vector.load %arg2[%c0_2, %c0_3] : memref<16x32xbf16, #tpu.memory_space<vmem>>, vector<16x32xbf16>
    %c0_4 = arith.constant 0 : index
    %c0_5 = arith.constant 0 : index
    %5 = vector.load %arg3[%c0_4, %c0_5] : memref<32x32xbf16, #tpu.memory_space<vmem>>, vector<32x32xbf16>
    %cst = arith.constant dense<0.000000e+00> : vector<16x32xf32>
    %6 = tpu.matmul %4, %5, %cst {dimension_numbers = #tpu.dot_dimension_numbers<[1], [0], [0], [1], [0, 0, 1, 1], [], []>} : vector<16x32xbf16>, vector<32x32xbf16>, vector<16x32xf32> -> vector<16x32xf32>
    %7 = arith.addf %3, %6 : vector<16x32xf32>
    %c0_6 = arith.constant 0 : index
    %c0_7 = arith.constant 0 : index
    %8 = vector.load %arg9[%c0_6, %c0_7] : memref<16x32xf32, #tpu.memory_space<vmem>>, vector<16x32xf32>
    tpu.vector_store %arg9[%c0_6, %c0_7], %7 {strides = array<i32>} : memref<16x32xf32, #tpu.memory_space<vmem>>, vector<16x32xf32>,
    %c0_i32_8 = arith.constant 0 : i32
    %9 = arith.cmpi eq, %arg1, %c0_i32_8 : i32
    %10 = arith.extui %9 : i1 to i32
    %c0_i32_9 = arith.constant 0 : i32
    %11 = arith.cmpi ne, %10, %c0_i32_9 : i32
    scf.if %11 {
      %c0_10 = arith.constant 0 : index
      %c0_11 = arith.constant 0 : index
      %12 = vector.load %arg9[%c0_10, %c0_11] : memref<16x32xf32, #tpu.memory_space<vmem>>, vector<16x32xf32>
      %c0_12 = arith.constant 0 : index
      %c0_13 = arith.constant 0 : index
      %13 = vector.load %arg4[%c0_12, %c0_13] : memref<1x32xf32, #tpu.memory_space<vmem>>, vector<1x32xf32>
      %14 = vector.broadcast %13 : vector<1x32xf32> to vector<16x32xf32>
      %15 = arith.addf %12, %14 : vector<16x32xf32>
      %c0_14 = arith.constant 0 : index
      %c0_15 = arith.constant 0 : index
      %16 = vector.load %arg5[%c0_14, %c0_15] : memref<16x32xbf16, #tpu.memory_space<vmem>>, vector<16x32xbf16>
      %17 = arith.extf %16 : vector<16x32xbf16> to vector<16x32xf32>
      %18 = arith.addf %15, %17 : vector<16x32xf32>
      %cst_16 = arith.constant dense<0.000000e+00> : vector<16xf32>
      %19 = vector.multi_reduction <add>, %18, %cst_16 [1] : vector<16x32xf32> to vector<16xf32>
      %20 = vector.shape_cast %19 : vector<16xf32> to vector<16x1xf32>
      %cst_17 = arith.constant 3.200000e+01 : f32
      %21 = vector.broadcast %cst_17 : f32 to vector<16x1xf32>
      %22 = arith.divf %20, %21 : vector<16x1xf32>
      %23 = vector.broadcast %22 : vector<16x1xf32> to vector<16x32xf32>
      %24 = arith.subf %18, %23 : vector<16x32xf32>
      %25 = arith.mulf %24, %24 : vector<16x32xf32>
      %cst_18 = arith.constant dense<0.000000e+00> : vector<16xf32>
      %26 = vector.multi_reduction <add>, %25, %cst_18 [1] : vector<16x32xf32> to vector<16xf32>
      %27 = vector.shape_cast %26 : vector<16xf32> to vector<16x1xf32>
      %cst_19 = arith.constant 3.200000e+01 : f32
      %28 = vector.broadcast %cst_19 : f32 to vector<16x1xf32>
      %29 = arith.divf %27, %28 : vector<16x1xf32>
      %cst_20 = arith.constant 9.99999996E-13 : f32
      %30 = vector.broadcast %cst_20 : f32 to vector<16x1xf32>
      %31 = arith.addf %29, %30 : vector<16x1xf32>
      %32 = math.rsqrt %31 : vector<16x1xf32>
      %33 = vector.broadcast %22 : vector<16x1xf32> to vector<16x32xf32>
      %34 = arith.subf %18, %33 : vector<16x32xf32>
      %35 = vector.broadcast %32 : vector<16x1xf32> to vector<16x32xf32>
      %36 = arith.mulf %34, %35 : vector<16x32xf32>
      %c0_21 = arith.constant 0 : index
      %c0_22 = arith.constant 0 : index
      %37 = vector.load %arg6[%c0_21, %c0_22] : memref<1x32xf32, #tpu.memory_space<vmem>>, vector<1x32xf32>
      %38 = vector.broadcast %37 : vector<1x32xf32> to vector<16x32xf32>
      %39 = arith.mulf %36, %38 : vector<16x32xf32>
      %c0_23 = arith.constant 0 : index
      %c0_24 = arith.constant 0 : index
      %40 = vector.load %arg7[%c0_23, %c0_24] : memref<1x32xf32, #tpu.memory_space<vmem>>, vector<1x32xf32>
      %41 = vector.broadcast %40 : vector<1x32xf32> to vector<16x32xf32>
      %42 = arith.addf %39, %41 : vector<16x32xf32>
      %43 = arith.truncf %42 : vector<16x32xf32> to vector<16x32xbf16>
      %c0_25 = arith.constant 0 : index
      %c0_26 = arith.constant 0 : index
      %44 = vector.load %arg8[%c0_25, %c0_26] : memref<16x32xbf16, #tpu.memory_space<vmem>>, vector<16x32xbf16>
      tpu.vector_store %arg8[%c0_25, %c0_26], %43 {strides = array<i32>} : memref<16x32xbf16, #tpu.memory_space<vmem>>, vector<16x32xbf16>,
    } else {
    }
    return
  }
  func.func @transform_0(%arg0: i32, %arg1: i32) -> (i32, i32) {
    %c0_i32 = arith.constant 0 : i32
    return %arg0, %arg1 : i32, i32
  }
  func.func @transform_1(%arg0: i32, %arg1: i32) -> (i32, i32) {
    %c0_i32 = arith.constant 0 : i32
    %c0_i32_0 = arith.constant 0 : i32
    return %arg1, %c0_i32 : i32, i32
  }
  func.func @transform_2(%arg0: i32, %arg1: i32) -> (i32, i32) {
    %c0_i32 = arith.constant 0 : i32
    %c0_i32_0 = arith.constant 0 : i32
    %c0_i32_1 = arith.constant 0 : i32
    return %c0_i32, %c0_i32_0 : i32, i32
  }
  func.func @transform_3(%arg0: i32, %arg1: i32) -> (i32, i32) {
    %c0_i32 = arith.constant 0 : i32
    %c0_i32_0 = arith.constant 0 : i32
    return %arg0, %c0_i32 : i32, i32
  }
  func.func @transform_4(%arg0: i32, %arg1: i32) -> (i32, i32) {
    %c0_i32 = arith.constant 0 : i32
    %c0_i32_0 = arith.constant 0 : i32
    %c0_i32_1 = arith.constant 0 : i32
    return %c0_i32, %c0_i32_0 : i32, i32
  }
  func.func @transform_5(%arg0: i32, %arg1: i32) -> (i32, i32) {
    %c0_i32 = arith.constant 0 : i32
    %c0_i32_0 = arith.constant 0 : i32
    %c0_i32_1 = arith.constant 0 : i32
    return %c0_i32, %c0_i32_0 : i32, i32
  }
  func.func @transform_6(%arg0: i32, %arg1: i32) -> (i32, i32) {
    %c0_i32 = arith.constant 0 : i32
    %c0_i32_0 = arith.constant 0 : i32
    return %arg0, %c0_i32 : i32, i32
  }
}

module attributes {stable_mosaic.version = 11 : i64} {
  func.func @_matmul_kernel(%arg0: i32, %arg1: i32, %arg2: i32, %arg3: memref<16x32xbf16, #tpu.memory_space<vmem>>, %arg4: memref<32x64xbf16, #tpu.memory_space<vmem>>, %arg5: memref<1x64xf32, #tpu.memory_space<vmem>>, %arg6: memref<16x64xbf16, #tpu.memory_space<vmem>>, %arg7: memref<16x64xf32, #tpu.memory_space<vmem>>) attributes {dimension_semantics = [#tpu.dimension_semantics<parallel>, #tpu.dimension_semantics<parallel>, #tpu.dimension_semantics<arbitrary>], iteration_bounds = array<i64: 1, 1, 1>, scalar_prefetch = 0 : i64, scratch_operands = 1 : i64, tpu.core_type = #tpu.core_type<tc>, window_params = [{transform_indices = @transform_0, window_bounds = array<i64: 16, 32>}, {transform_indices = @transform_1, window_bounds = array<i64: 32, 64>}, {transform_indices = @transform_2, window_bounds = array<i64: 1, 64>}, {transform_indices = @transform_3, window_bounds = array<i64: 16, 64>}]} {
    %c0_i32 = arith.constant 0 : i32
    %0 = arith.cmpi eq, %arg2, %c0_i32 : i32
    %1 = arith.extui %0 : i1 to i32
    %c0_i32_0 = arith.constant 0 : i32
    %2 = arith.cmpi ne, %1, %c0_i32_0 : i32
    scf.if %2 {
      %cst_10 = arith.constant 0.000000e+00 : f32
      %12 = vector.broadcast %cst_10 : f32 to vector<16x64xf32>
      %c0_11 = arith.constant 0 : index
      %c0_12 = arith.constant 0 : index
      %13 = vector.load %arg7[%c0_11, %c0_12] : memref<16x64xf32, #tpu.memory_space<vmem>>, vector<16x64xf32>
      tpu.vector_store %arg7[%c0_11, %c0_12], %12 {strides = array<i32>} : memref<16x64xf32, #tpu.memory_space<vmem>>, vector<16x64xf32>,
    } else {
    }
    %c0 = arith.constant 0 : index
    %c0_1 = arith.constant 0 : index
    %3 = vector.load %arg7[%c0, %c0_1] : memref<16x64xf32, #tpu.memory_space<vmem>>, vector<16x64xf32>
    %c0_2 = arith.constant 0 : index
    %c0_3 = arith.constant 0 : index
    %4 = vector.load %arg3[%c0_2, %c0_3] : memref<16x32xbf16, #tpu.memory_space<vmem>>, vector<16x32xbf16>
    %c0_4 = arith.constant 0 : index
    %c0_5 = arith.constant 0 : index
    %5 = vector.load %arg4[%c0_4, %c0_5] : memref<32x64xbf16, #tpu.memory_space<vmem>>, vector<32x64xbf16>
    %cst = arith.constant dense<0.000000e+00> : vector<16x64xf32>
    %6 = tpu.matmul %4, %5, %cst {dimension_numbers = #tpu.dot_dimension_numbers<[1], [0], [0], [1], [0, 0, 1, 1], [], []>} : vector<16x32xbf16>, vector<32x64xbf16>, vector<16x64xf32> -> vector<16x64xf32>
    %7 = arith.addf %3, %6 : vector<16x64xf32>
    %c0_6 = arith.constant 0 : index
    %c0_7 = arith.constant 0 : index
    %8 = vector.load %arg7[%c0_6, %c0_7] : memref<16x64xf32, #tpu.memory_space<vmem>>, vector<16x64xf32>
    tpu.vector_store %arg7[%c0_6, %c0_7], %7 {strides = array<i32>} : memref<16x64xf32, #tpu.memory_space<vmem>>, vector<16x64xf32>,
    %c0_i32_8 = arith.constant 0 : i32
    %9 = arith.cmpi eq, %arg2, %c0_i32_8 : i32
    %10 = arith.extui %9 : i1 to i32
    %c0_i32_9 = arith.constant 0 : i32
    %11 = arith.cmpi ne, %10, %c0_i32_9 : i32
    scf.if %11 {
      %c0_10 = arith.constant 0 : index
      %c0_11 = arith.constant 0 : index
      %12 = vector.load %arg7[%c0_10, %c0_11] : memref<16x64xf32, #tpu.memory_space<vmem>>, vector<16x64xf32>
      %c0_12 = arith.constant 0 : index
      %c0_13 = arith.constant 0 : index
      %13 = vector.load %arg5[%c0_12, %c0_13] : memref<1x64xf32, #tpu.memory_space<vmem>>, vector<1x64xf32>
      %14 = vector.broadcast %13 : vector<1x64xf32> to vector<16x64xf32>
      %15 = arith.addf %12, %14 : vector<16x64xf32>
      %16 = arith.mulf %15, %15 : vector<16x64xf32>
      %17 = arith.mulf %15, %16 : vector<16x64xf32>
      %cst_14 = arith.constant 4.471500e-02 : f32
      %18 = vector.broadcast %cst_14 : f32 to vector<16x64xf32>
      %19 = arith.mulf %18, %17 : vector<16x64xf32>
      %20 = arith.addf %15, %19 : vector<16x64xf32>
      %cst_15 = arith.constant 0.797884583 : f32
      %21 = vector.broadcast %cst_15 : f32 to vector<16x64xf32>
      %22 = arith.mulf %21, %20 : vector<16x64xf32>
      %23 = math.tanh %22 : vector<16x64xf32>
      %cst_16 = arith.constant 1.000000e+00 : f32
      %24 = vector.broadcast %cst_16 : f32 to vector<16x64xf32>
      %25 = arith.addf %24, %23 : vector<16x64xf32>
      %cst_17 = arith.constant 5.000000e-01 : f32
      %26 = vector.broadcast %cst_17 : f32 to vector<16x64xf32>
      %27 = arith.mulf %26, %25 : vector<16x64xf32>
      %28 = arith.mulf %15, %27 : vector<16x64xf32>
      %29 = arith.truncf %28 : vector<16x64xf32> to vector<16x64xbf16>
      %c0_18 = arith.constant 0 : index
      %c0_19 = arith.constant 0 : index
      %30 = vector.load %arg6[%c0_18, %c0_19] : memref<16x64xbf16, #tpu.memory_space<vmem>>, vector<16x64xbf16>
      tpu.vector_store %arg6[%c0_18, %c0_19], %29 {strides = array<i32>} : memref<16x64xbf16, #tpu.memory_space<vmem>>, vector<16x64xbf16>,
    } else {
    }
    return
  }
  func.func @transform_0(%arg0: i32, %arg1: i32, %arg2: i32) -> (i32, i32) {
    %c0_i32 = arith.constant 0 : i32
    return %arg0, %arg2 : i32, i32
  }
  func.func @transform_1(%arg0: i32, %arg1: i32, %arg2: i32) -> (i32, i32) {
    %c0_i32 = arith.constant 0 : i32
    return %arg2, %arg1 : i32, i32
  }
  func.func @transform_2(%arg0: i32, %arg1: i32, %arg2: i32) -> (i32, i32) {
    %c0_i32 = arith.constant 0 : i32
    %c0_i32_0 = arith.constant 0 : i32
    return %c0_i32, %arg1 : i32, i32
  }
  func.func @transform_3(%arg0: i32, %arg1: i32, %arg2: i32) -> (i32, i32) {
    %c0_i32 = arith.constant 0 : i32
    return %arg0, %arg1 : i32, i32
  }
}

module attributes {stable_mosaic.version = 11 : i64} {
  func.func @_linear_add_ln_kernel(%arg0: i32, %arg1: i32, %arg2: memref<16x64xbf16, #tpu.memory_space<vmem>>, %arg3: memref<64x32xbf16, #tpu.memory_space<vmem>>, %arg4: memref<1x32xf32, #tpu.memory_space<vmem>>, %arg5: memref<16x32xbf16, #tpu.memory_space<vmem>>, %arg6: memref<1x32xf32, #tpu.memory_space<vmem>>, %arg7: memref<1x32xf32, #tpu.memory_space<vmem>>, %arg8: memref<16x32xbf16, #tpu.memory_space<vmem>>, %arg9: memref<16x32xf32, #tpu.memory_space<vmem>>) attributes {dimension_semantics = [#tpu.dimension_semantics<parallel>, #tpu.dimension_semantics<arbitrary>], iteration_bounds = array<i64: 1, 1>, scalar_prefetch = 0 : i64, scratch_operands = 1 : i64, tpu.core_type = #tpu.core_type<tc>, window_params = [{transform_indices = @transform_0, window_bounds = array<i64: 16, 64>}, {transform_indices = @transform_1, window_bounds = array<i64: 64, 32>}, {pipeline_mode = #tpu.pipeline_mode<synchronous>, transform_indices = @transform_2, window_bounds = array<i64: 1, 32>}, {transform_indices = @transform_3, window_bounds = array<i64: 16, 32>}, {pipeline_mode = #tpu.pipeline_mode<synchronous>, transform_indices = @transform_4, window_bounds = array<i64: 1, 32>}, {pipeline_mode = #tpu.pipeline_mode<synchronous>, transform_indices = @transform_5, window_bounds = array<i64: 1, 32>}, {transform_indices = @transform_6, window_bounds = array<i64: 16, 32>}]} {
    %c0_i32 = arith.constant 0 : i32
    %0 = arith.cmpi eq, %arg1, %c0_i32 : i32
    %1 = arith.extui %0 : i1 to i32
    %c0_i32_0 = arith.constant 0 : i32
    %2 = arith.cmpi ne, %1, %c0_i32_0 : i32
    scf.if %2 {
      %cst_10 = arith.constant 0.000000e+00 : f32
      %12 = vector.broadcast %cst_10 : f32 to vector<16x32xf32>
      %c0_11 = arith.constant 0 : index
      %c0_12 = arith.constant 0 : index
      %13 = vector.load %arg9[%c0_11, %c0_12] : memref<16x32xf32, #tpu.memory_space<vmem>>, vector<16x32xf32>
      tpu.vector_store %arg9[%c0_11, %c0_12], %12 {strides = array<i32>} : memref<16x32xf32, #tpu.memory_space<vmem>>, vector<16x32xf32>,
    } else {
    }
    %c0 = arith.constant 0 : index
    %c0_1 = arith.constant 0 : index
    %3 = vector.load %arg9[%c0, %c0_1] : memref<16x32xf32, #tpu.memory_space<vmem>>, vector<16x32xf32>
    %c0_2 = arith.constant 0 : index
    %c0_3 = arith.constant 0 : index
    %4 = vector.load %arg2[%c0_2, %c0_3] : memref<16x64xbf16, #tpu.memory_space<vmem>>, vector<16x64xbf16>
    %c0_4 = arith.constant 0 : index
    %c0_5 = arith.constant 0 : index
    %5 = vector.load %arg3[%c0_4, %c0_5] : memref<64x32xbf16, #tpu.memory_space<vmem>>, vector<64x32xbf16>
    %cst = arith.constant dense<0.000000e+00> : vector<16x32xf32>
    %6 = tpu.matmul %4, %5, %cst {dimension_numbers = #tpu.dot_dimension_numbers<[1], [0], [0], [1], [0, 0, 1, 1], [], []>} : vector<16x64xbf16>, vector<64x32xbf16>, vector<16x32xf32> -> vector<16x32xf32>
    %7 = arith.addf %3, %6 : vector<16x32xf32>
    %c0_6 = arith.constant 0 : index
    %c0_7 = arith.constant 0 : index
    %8 = vector.load %arg9[%c0_6, %c0_7] : memref<16x32xf32, #tpu.memory_space<vmem>>, vector<16x32xf32>
    tpu.vector_store %arg9[%c0_6, %c0_7], %7 {strides = array<i32>} : memref<16x32xf32, #tpu.memory_space<vmem>>, vector<16x32xf32>,
    %c0_i32_8 = arith.constant 0 : i32
    %9 = arith.cmpi eq, %arg1, %c0_i32_8 : i32
    %10 = arith.extui %9 : i1 to i32
    %c0_i32_9 = arith.constant 0 : i32
    %11 = arith.cmpi ne, %10, %c0_i32_9 : i32
    scf.if %11 {
      %c0_10 = arith.constant 0 : index
      %c0_11 = arith.constant 0 : index
      %12 = vector.load %arg9[%c0_10, %c0_11] : memref<16x32xf32, #tpu.memory_space<vmem>>, vector<16x32xf32>
      %c0_12 = arith.constant 0 : index
      %c0_13 = arith.constant 0 : index
      %13 = vector.load %arg4[%c0_12, %c0_13] : memref<1x32xf32, #tpu.memory_space<vmem>>, vector<1x32xf32>
      %14 = vector.broadcast %13 : vector<1x32xf32> to vector<16x32xf32>
      %15 = arith.addf %12, %14 : vector<16x32xf32>
      %c0_14 = arith.constant 0 : index
      %c0_15 = arith.constant 0 : index
      %16 = vector.load %arg5[%c0_14, %c0_15] : memref<16x32xbf16, #tpu.memory_space<vmem>>, vector<16x32xbf16>
      %17 = arith.extf %16 : vector<16x32xbf16> to vector<16x32xf32>
      %18 = arith.addf %15, %17 : vector<16x32xf32>
      %cst_16 = arith.constant dense<0.000000e+00> : vector<16xf32>
      %19 = vector.multi_reduction <add>, %18, %cst_16 [1] : vector<16x32xf32> to vector<16xf32>
      %20 = vector.shape_cast %19 : vector<16xf32> to vector<16x1xf32>
      %cst_17 = arith.constant 3.200000e+01 : f32
      %21 = vector.broadcast %cst_17 : f32 to vector<16x1xf32>
      %22 = arith.divf %20, %21 : vector<16x1xf32>
      %23 = vector.broadcast %22 : vector<16x1xf32> to vector<16x32xf32>
      %24 = arith.subf %18, %23 : vector<16x32xf32>
      %25 = arith.mulf %24, %24 : vector<16x32xf32>
      %cst_18 = arith.constant dense<0.000000e+00> : vector<16xf32>
      %26 = vector.multi_reduction <add>, %25, %cst_18 [1] : vector<16x32xf32> to vector<16xf32>
      %27 = vector.shape_cast %26 : vector<16xf32> to vector<16x1xf32>
      %cst_19 = arith.constant 3.200000e+01 : f32
      %28 = vector.broadcast %cst_19 : f32 to vector<16x1xf32>
      %29 = arith.divf %27, %28 : vector<16x1xf32>
      %cst_20 = arith.constant 9.99999996E-13 : f32
      %30 = vector.broadcast %cst_20 : f32 to vector<16x1xf32>
      %31 = arith.addf %29, %30 : vector<16x1xf32>
      %32 = math.rsqrt %31 : vector<16x1xf32>
      %33 = vector.broadcast %22 : vector<16x1xf32> to vector<16x32xf32>
      %34 = arith.subf %18, %33 : vector<16x32xf32>
      %35 = vector.broadcast %32 : vector<16x1xf32> to vector<16x32xf32>
      %36 = arith.mulf %34, %35 : vector<16x32xf32>
      %c0_21 = arith.constant 0 : index
      %c0_22 = arith.constant 0 : index
      %37 = vector.load %arg6[%c0_21, %c0_22] : memref<1x32xf32, #tpu.memory_space<vmem>>, vector<1x32xf32>
      %38 = vector.broadcast %37 : vector<1x32xf32> to vector<16x32xf32>
      %39 = arith.mulf %36, %38 : vector<16x32xf32>
      %c0_23 = arith.constant 0 : index
      %c0_24 = arith.constant 0 : index
      %40 = vector.load %arg7[%c0_23, %c0_24] : memref<1x32xf32, #tpu.memory_space<vmem>>, vector<1x32xf32>
      %41 = vector.broadcast %40 : vector<1x32xf32> to vector<16x32xf32>
      %42 = arith.addf %39, %41 : vector<16x32xf32>
      %43 = arith.truncf %42 : vector<16x32xf32> to vector<16x32xbf16>
      %c0_25 = arith.constant 0 : index
      %c0_26 = arith.constant 0 : index
      %44 = vector.load %arg8[%c0_25, %c0_26] : memref<16x32xbf16, #tpu.memory_space<vmem>>, vector<16x32xbf16>
      tpu.vector_store %arg8[%c0_25, %c0_26], %43 {strides = array<i32>} : memref<16x32xbf16, #tpu.memory_space<vmem>>, vector<16x32xbf16>,
    } else {
    }
    return
  }
  func.func @transform_0(%arg0: i32, %arg1: i32) -> (i32, i32) {
    %c0_i32 = arith.constant 0 : i32
    return %arg0, %arg1 : i32, i32
  }
  func.func @transform_1(%arg0: i32, %arg1: i32) -> (i32, i32) {
    %c0_i32 = arith.constant 0 : i32
    %c0_i32_0 = arith.constant 0 : i32
    return %arg1, %c0_i32 : i32, i32
  }
  func.func @transform_2(%arg0: i32, %arg1: i32) -> (i32, i32) {
    %c0_i32 = arith.constant 0 : i32
    %c0_i32_0 = arith.constant 0 : i32
    %c0_i32_1 = arith.constant 0 : i32
    return %c0_i32, %c0_i32_0 : i32, i32
  }
  func.func @transform_3(%arg0: i32, %arg1: i32) -> (i32, i32) {
    %c0_i32 = arith.constant 0 : i32
    %c0_i32_0 = arith.constant 0 : i32
    return %arg0, %c0_i32 : i32, i32
  }
  func.func @transform_4(%arg0: i32, %arg1: i32) -> (i32, i32) {
    %c0_i32 = arith.constant 0 : i32
    %c0_i32_0 = arith.constant 0 : i32
    %c0_i32_1 = arith.constant 0 : i32
    return %c0_i32, %c0_i32_0 : i32, i32
  }
  func.func @transform_5(%arg0: i32, %arg1: i32) -> (i32, i32) {
    %c0_i32 = arith.constant 0 : i32
    %c0_i32_0 = arith.constant 0 : i32
    %c0_i32_1 = arith.constant 0 : i32
    return %c0_i32, %c0_i32_0 : i32, i32
  }
  func.func @transform_6(%arg0: i32, %arg1: i32) -> (i32, i32) {
    %c0_i32 = arith.constant 0 : i32
    %c0_i32_0 = arith.constant 0 : i32
    return %arg0, %c0_i32 : i32, i32
  }
}

module attributes {stable_mosaic.version = 11 : i64} {
  func.func @_pool_head_kernel(%arg0: i32, %arg1: memref<2x8x32xbf16, #tpu.memory_space<vmem>>, %arg2: memref<32x128xf32, #tpu.memory_space<vmem>>, %arg3: memref<1x128xf32, #tpu.memory_space<vmem>>, %arg4: memref<2x128xf32, #tpu.memory_space<vmem>>, %arg5: memref<2x32xf32, #tpu.memory_space<vmem>>) attributes {dimension_semantics = [#tpu.dimension_semantics<arbitrary>], iteration_bounds = array<i64: 1>, scalar_prefetch = 0 : i64, scratch_operands = 1 : i64, tpu.core_type = #tpu.core_type<tc>, window_params = [{transform_indices = @transform_0, window_bounds = array<i64: 2, 8, 32>}, {pipeline_mode = #tpu.pipeline_mode<synchronous>, transform_indices = @transform_1, window_bounds = array<i64: 32, 128>}, {pipeline_mode = #tpu.pipeline_mode<synchronous>, transform_indices = @transform_2, window_bounds = array<i64: 1, 128>}, {pipeline_mode = #tpu.pipeline_mode<synchronous>, transform_indices = @transform_3, window_bounds = array<i64: 2, 128>}]} {
    %c0_i32 = arith.constant 0 : i32
    %0 = arith.cmpi eq, %arg0, %c0_i32 : i32
    %1 = arith.extui %0 : i1 to i32
    %c0_i32_0 = arith.constant 0 : i32
    %2 = arith.cmpi ne, %1, %c0_i32_0 : i32
    scf.if %2 {
      %cst_9 = arith.constant 0.000000e+00 : f32
      %12 = vector.broadcast %cst_9 : f32 to vector<2x32xf32>
      %c0_10 = arith.constant 0 : index
      %c0_11 = arith.constant 0 : index
      %13 = vector.load %arg5[%c0_10, %c0_11] : memref<2x32xf32, #tpu.memory_space<vmem>>, vector<2x32xf32>
      tpu.vector_store %arg5[%c0_10, %c0_11], %12 {strides = array<i32>} : memref<2x32xf32, #tpu.memory_space<vmem>>, vector<2x32xf32>,
    } else {
    }
    %c0 = arith.constant 0 : index
    %c0_1 = arith.constant 0 : index
    %3 = vector.load %arg5[%c0, %c0_1] : memref<2x32xf32, #tpu.memory_space<vmem>>, vector<2x32xf32>
    %c0_2 = arith.constant 0 : index
    %c0_3 = arith.constant 0 : index
    %c0_4 = arith.constant 0 : index
    %4 = vector.load %arg1[%c0_2, %c0_3, %c0_4] : memref<2x8x32xbf16, #tpu.memory_space<vmem>>, vector<2x8x32xbf16>
    %5 = arith.extf %4 : vector<2x8x32xbf16> to vector<2x8x32xf32>
    %cst = arith.constant dense<0.000000e+00> : vector<2x32xf32>
    %6 = vector.multi_reduction <add>, %5, %cst [1] : vector<2x8x32xf32> to vector<2x32xf32>
    %7 = arith.addf %3, %6 : vector<2x32xf32>
    %c0_5 = arith.constant 0 : index
    %c0_6 = arith.constant 0 : index
    %8 = vector.load %arg5[%c0_5, %c0_6] : memref<2x32xf32, #tpu.memory_space<vmem>>, vector<2x32xf32>
    tpu.vector_store %arg5[%c0_5, %c0_6], %7 {strides = array<i32>} : memref<2x32xf32, #tpu.memory_space<vmem>>, vector<2x32xf32>,
    %c0_i32_7 = arith.constant 0 : i32
    %9 = arith.cmpi eq, %arg0, %c0_i32_7 : i32
    %10 = arith.extui %9 : i1 to i32
    %c0_i32_8 = arith.constant 0 : i32
    %11 = arith.cmpi ne, %10, %c0_i32_8 : i32
    scf.if %11 {
      %c0_9 = arith.constant 0 : index
      %c0_10 = arith.constant 0 : index
      %12 = vector.load %arg5[%c0_9, %c0_10] : memref<2x32xf32, #tpu.memory_space<vmem>>, vector<2x32xf32>
      %cst_11 = arith.constant 1.250000e-01 : f32
      %13 = vector.broadcast %cst_11 : f32 to vector<2x32xf32>
      %14 = arith.mulf %12, %13 : vector<2x32xf32>
      %c0_12 = arith.constant 0 : index
      %c0_13 = arith.constant 0 : index
      %15 = vector.load %arg2[%c0_12, %c0_13] : memref<32x128xf32, #tpu.memory_space<vmem>>, vector<32x128xf32>
      %cst_14 = arith.constant dense<0.000000e+00> : vector<2x128xf32>
      %16 = tpu.matmul %14, %15, %cst_14 {dimension_numbers = #tpu.dot_dimension_numbers<[1], [0], [0], [1], [0, 0, 1, 1], [], []>} : vector<2x32xf32>, vector<32x128xf32>, vector<2x128xf32> -> vector<2x128xf32>
      %c0_15 = arith.constant 0 : index
      %c0_16 = arith.constant 0 : index
      %17 = vector.load %arg3[%c0_15, %c0_16] : memref<1x128xf32, #tpu.memory_space<vmem>>, vector<1x128xf32>
      %18 = vector.broadcast %17 : vector<1x128xf32> to vector<2x128xf32>
      %19 = arith.addf %16, %18 : vector<2x128xf32>
      %c0_17 = arith.constant 0 : index
      %c0_18 = arith.constant 0 : index
      %20 = vector.load %arg4[%c0_17, %c0_18] : memref<2x128xf32, #tpu.memory_space<vmem>>, vector<2x128xf32>
      tpu.vector_store %arg4[%c0_17, %c0_18], %19 {strides = array<i32>} : memref<2x128xf32, #tpu.memory_space<vmem>>, vector<2x128xf32>,
    } else {
    }
    return
  }
  func.func @transform_0(%arg0: i32) -> (i32, i32, i32) {
    %c0_i32 = arith.constant 0 : i32
    %c0_i32_0 = arith.constant 0 : i32
    %c0_i32_1 = arith.constant 0 : i32
    return %c0_i32, %arg0, %c0_i32_0 : i32, i32, i32
  }
  func.func @transform_1(%arg0: i32) -> (i32, i32) {
    %c0_i32 = arith.constant 0 : i32
    %c0_i32_0 = arith.constant 0 : i32
    %c0_i32_1 = arith.constant 0 : i32
    return %c0_i32, %c0_i32_0 : i32, i32
  }
  func.func @transform_2(%arg0: i32) -> (i32, i32) {
    %c0_i32 = arith.constant 0 : i32
    %c0_i32_0 = arith.constant 0 : i32
    %c0_i32_1 = arith.constant 0 : i32
    return %c0_i32, %c0_i32_0 : i32, i32
  }
  func.func @transform_3(%arg0: i32) -> (i32, i32) {
    %c0_i32 = arith.constant 0 : i32
    %c0_i32_0 = arith.constant 0 : i32
    %c0_i32_1 = arith.constant 0 : i32
    return %c0_i32, %c0_i32_0 : i32, i32
  }
}

</mosaic_0001>

<llo_original>
// kernel: transformer_with_mixout_forward.12
$region0: #{transformer_with_mixout_forward.12}
  #allocation0 [shape = 'u32[]', space=smem, size = 0x4, offset = 0x4, fixed_abs, tag = 'smem constant byte address 0x4 - core index']
  #allocation1 [shape = 'u32[144,128]{1,0:T(1,128)}', space=vmem, size = 0x12000, scoped, tag = 'internal scratch']
  %s0 = inlined_call_operand.vmem [shape: f32[16,32], index: 0, kind: input, shape index: {}]
  %s1 = inlined_call_operand.vmem [shape: f32[16,32], index: 1, kind: input, shape index: {}]
  %s2 = inlined_call_operand.vmem [shape: f32[1,32], index: 2, kind: input, shape index: {}]
  %s3 = inlined_call_operand.vmem [shape: f32[1,32], index: 3, kind: input, shape index: {}]
  %s4 = inlined_call_operand.vmem [shape: bf16[16,32], index: 4, kind: output, shape index: {}]
  %s5 = sld [smem:[#allocation0]]
  $region26: #{transformer_with_mixout_forward.12} parent=0
    _
  %s7 = ssub.s32 1, %s5
  %s8 = scalar_select 0, %s7, %s5
  // Predicated region
  $region2: #{transformer_with_mixout_forward.12} parent=0 // pred_check
    _
  $region3: #{transformer_with_mixout_forward.12} parent=0 // pred_check_branch
    %10 = sbr.rel (0) target = $region5
  $region4: #{transformer_with_mixout_forward.12} parent=0 // pred_region
    _
  $region5: #{transformer_with_mixout_forward.12} parent=0 // pred_fallthru
    _
  // Predicated region
  $region6: #{transformer_with_mixout_forward.12} parent=0 // pred_check
    _
  $region7: #{transformer_with_mixout_forward.12} parent=0 // pred_check_branch
    %12 = sbr.rel (0) target = $region9
  $region8: #{transformer_with_mixout_forward.12} parent=0 // pred_region
    _
  $region9: #{transformer_with_mixout_forward.12} parent=0 // pred_fallthru
    _
  // Predicated region
  $region10: #{transformer_with_mixout_forward.12} parent=0 // pred_check
    _
  $region11: #{transformer_with_mixout_forward.12} parent=0 // pred_check_branch
    %14 = sbr.rel (0) target = $region13
  $region12: #{transformer_with_mixout_forward.12} parent=0 // pred_region
    _
  $region13: #{transformer_with_mixout_forward.12} parent=0 // pred_fallthru
    _
  // Predicated region
  $region14: #{transformer_with_mixout_forward.12} parent=0 // pred_check
    _
  $region15: #{transformer_with_mixout_forward.12} parent=0 // pred_check_branch
    %16 = sbr.rel (0) target = $region17
  $region16: #{transformer_with_mixout_forward.12} parent=0 // pred_region
    _
  $region17: #{transformer_with_mixout_forward.12} parent=0 // pred_fallthru
    _
  %v17 = vld [vmem:[%s0] sm:$0xff]
  %v18 = vld [vmem:[%s0 + $0x8] sm:$0xff]
  %v19 = vld [vmem:[%s1] sm:$0xff]
  %v20 = vld [vmem:[%s1 + $0x8] sm:$0xff]
  %v21 = vadd.f32 %v17, %v19
  %v22 = vadd.f32 %v18, %v20
  %vm23 = vcmask 261120
  %v24 = vsel %vm23, %v21, 0.0
  %25 = vadd.xlane.f32.xlu0 %v24
  %v26 = vpop.xlane.xlu0 %25
  %v27 = vsel %vm23, %v22, 0.0
  %28 = vadd.xlane.f32.xlu0 %v27
  %v29 = vpop.xlane.xlu0 %28
  %v30 = vrcp.pop 32.0
  %v31 = vmul.f32 %v26, %v30
  %v32 = vmul.f32 %v29, %v30
  %v33 = vsub.f32 %v21, %v31
  %v34 = vsub.f32 %v22, %v32
  %v35 = vmul.f32 %v33, %v33
  %v36 = vmul.f32 %v34, %v34
  %v37 = vsel %vm23, %v35, 0.0
  %38 = vadd.xlane.f32.xlu0 %v37
  %v39 = vpop.xlane.xlu0 %38
  %v40 = vsel %vm23, %v36, 0.0
  %41 = vadd.xlane.f32.xlu0 %v40
  %v42 = vpop.xlane.xlu0 %41
  %v43 = vmul.f32 %v39, %v30
  %v44 = vmul.f32 %v42, %v30
  %v45 = vadd.f32 %v43, 1e-12
  %v46 = vadd.f32 %v44, 1e-12
  %v47 = vrsqrt.pop %v45
  %v48 = vrsqrt.pop %v46
  %v49 = vmul.f32 %v33, %v47
  %v50 = vmul.f32 %v34, %v48
  %v51 = vld [vmem:[%s2] sm:$0x1]
  %v53 = vlaneseq
  %v54 = vshrl.u32 %v53, 7
  %v55 = vsub.s32 0, %v54
  %v56 = vrot.slane %v51, %v55
  %v58 = vmul.f32 %v49, %v56
  %v59 = vmul.f32 %v50, %v56
  %v60 = vld [vmem:[%s3] sm:$0x1]
  %v62 = vlaneseq
  %v63 = vshrl.u32 %v62, 7
  %v64 = vsub.s32 0, %v63
  %v65 = vrot.slane %v60, %v64
  %v67 = vadd.f32 %v58, %v65
  %v68 = vadd.f32 %v59, %v65
  %v69 = vpack.c.bf16 %v68, %v67
  %v71 = vunpack.c.l.b16 %v69
  %v72 = vunpack.c.h.b16 %v69
  %v73 = vpack.c.b16 %v71, %v71
  %v74 = vpack.c.b16 %v72, %v72
  %vm77 = vcmask 257024
  %78 = vst.msk [vmem:[%s4] sm:$0xf] %vm77, %v73
  %79 = vst.msk [vmem:[%s4 + $0x4] sm:$0xf] %vm77, %v74
  // Predicated region
  $region18: #{transformer_with_mixout_forward.12} parent=0 // pred_check
    _
  $region19: #{transformer_with_mixout_forward.12} parent=0 // pred_check_branch
    %81 = sbr.rel (0) target = $region21
  $region20: #{transformer_with_mixout_forward.12} parent=0 // pred_region
    _
  $region21: #{transformer_with_mixout_forward.12} parent=0 // pred_fallthru
    _
  // Predicated region
  $region22: #{transformer_with_mixout_forward.12} parent=0 // pred_check
    _
  $region23: #{transformer_with_mixout_forward.12} parent=0 // pred_check_branch
    %83 = sbr.rel (0) target = $region25
  $region24: #{transformer_with_mixout_forward.12} parent=0 // pred_region
    _
  $region25: #{transformer_with_mixout_forward.12} parent=0 // pred_fallthru
    _

// kernel: transformer_with_mixout_forward.13
$region0: #{transformer_with_mixout_forward.13}
  #allocation0 [shape = 'u32[]', space=smem, size = 0x4, offset = 0x4, fixed_abs, tag = 'smem constant byte address 0x4 - core index']
  #allocation1 [shape = 'u32[144,128]{1,0:T(1,128)}', space=vmem, size = 0x12000, scoped, tag = 'internal scratch']
  #allocation2 [shape = 'f32[16,128]{1,0:T(8,128)}', space=vmem, size = 0x2000, scoped, tag = 'scratch operand']
  %s0 = inlined_call_operand.vmem [shape: bf16[16,32], index: 0, kind: input, shape index: {}]
  %s1 = inlined_call_operand.vmem [shape: bf16[32,384], index: 1, kind: input, shape index: {}]
  %s2 = inlined_call_operand.vmem [shape: f32[1,384], index: 2, kind: input, shape index: {}]
  %s3 = inlined_call_operand.vmem [shape: bf16[3,16,128], index: 3, kind: output, shape index: {}]
  %s4 = sld [smem:[#allocation0]]
  $region94: #{transformer_with_mixout_forward.13} parent=0
    _
  %s6 = ssub.s32 1, %s4
  %s7 = scalar_select 0, %s6, %s4
  $region1: #{transformer_with_mixout_forward.13} parent=0
    #allocation3 [shape = 'u8[16384]{0}', space=vmem, size = 0x4000, scoped, tag = 'input window, operand 1']
    loop: start=0, step=1, limit=5
    $region2: #{transformer_with_mixout_forward.13} parent=1 // loop_pre_header
      _
    $region3: #{transformer_with_mixout_forward.13} parent=1 // loop_header
      %s9 = sphi 0, %s13
      %p10 = scmp.ge.s32.totalorder %s9, 5
      %s16 = sphi 0, %s35
      %s17 = sphi 0, %s31
      %s18 = sphi 0, %s27
      %s19 = sphi 0, %s16
      %s20 = sphi 0, %s17
      %s21 = sphi 0, %s18
      %s22 = sphi 0, %s19
      %s23 = sphi 0, %s20
      %s24 = sphi 0, %s21
      %s40 = sphi 0, %s42
      %s43 = sphi 0, %s40
      %s44 = sphi 0, %s43
      %s60 = sphi 0, %s44
      %s68 = sphi 0, %s70
      %s71 = sphi 0, %s68
      %s72 = sphi 0, %s71
      %s88 = sphi 0, %s72
      %s94 = sphi 0, %s96
      %s97 = sphi 0, %s94
      %s98 = sphi 0, %s97
      %s114 = sphi 0, %s98
      %s122 = sphi 0, %s124
      %s125 = sphi 0, %s122
      %s126 = sphi 0, %s125
      %s142 = sphi 0, %s126
    $region4: #{transformer_with_mixout_forward.13} parent=1 // loop_header_branch
      %12 = sbr.rel (%p10) target = $region8
    $region5: #{transformer_with_mixout_forward.13} parent=1 // loop_body
      %s14 = ssub.s32 %s9, 1
      %s15 = ssub.s32 %s9, 2
      %s25 = sadd.s32 1, %s18
      %p26 = scmp.ge.s32.totalorder %s25, 1
      %s27 = scalar_select %p26, 0, %s25
      %s28 = sadd.s32 1, %s17
      %s29 = scalar_select %p26, %s28, %s17
      %p30 = scmp.ge.s32.totalorder %s29, 3
      %s31 = scalar_select %p30, 0, %s29
      %s32 = sadd.s32 1, %s16
      %s33 = scalar_select %p30, %s32, %s16
      %p34 = scmp.ge.s32.totalorder %s33, 1
      %s35 = scalar_select %p34, 0, %s33
      %s36 = ssub.s32 %s16, %s35
      %s37 = ssub.s32 %s18, %s27
      %s38 = sor.u32 %s36, %s37
      %p39 = scmp.eq.s32.totalorder %s38, 0
      %s41 = sadd.s32 %s40, 1
      %s42 = scalar_select %p39, %s40, %s41
      %p45 = pneg %p39
      %p46 = scmp.eq.s32.totalorder %s9, 2
      %p47 = por %p45, %p46
      %p48 = scmp.ne.s32.totalorder %s40, %s43
      %p49 = scmp.eq.s32.totalorder %s9, 0
      %p50 = por %p48, %p49
      %p51 = scmp.ne.s32.totalorder %s40, %s43
      %p52 = scmp.eq.s32.totalorder %s14, 2
      %p53 = por %p51, %p52
      %p54 = scmp.ne.s32.totalorder %s43, %s44
      %p55 = scmp.eq.s32.totalorder %s14, 0
      %p56 = por %p54, %p55
      %p57 = scmp.ne.s32.totalorder %s43, %s44
      %p58 = scmp.eq.s32.totalorder %s15, 2
      %p59 = por %p57, %p58
      %p61 = scmp.ne.s32.totalorder %s44, %s60
      %p62 = scmp.eq.s32.totalorder %s15, 0
      %p63 = por %p61, %p62
      %s64 = ssub.s32 %s18, %s27
      %s65 = ssub.s32 %s17, %s31
      %s66 = sor.u32 %s64, %s65
      %p67 = scmp.eq.s32.totalorder %s66, 0
      %s69 = sadd.s32 %s68, 1
      %s70 = scalar_select %p67, %s68, %s69
      %p73 = pneg %p67
      %p74 = scmp.eq.s32.totalorder %s9, 2
      %p75 = por %p73, %p74
      %p76 = scmp.ne.s32.totalorder %s68, %s71
      %p77 = scmp.eq.s32.totalorder %s9, 0
      %p78 = por %p76, %p77
      %p79 = scmp.ne.s32.totalorder %s68, %s71
      %p80 = scmp.eq.s32.totalorder %s14, 2
      %p81 = por %p79, %p80
      %p82 = scmp.ne.s32.totalorder %s71, %s72
      %p83 = scmp.eq.s32.totalorder %s14, 0
      %p84 = por %p82, %p83
      %p85 = scmp.ne.s32.totalorder %s71, %s72
      %p86 = scmp.eq.s32.totalorder %s15, 2
      %p87 = por %p85, %p86
      %p89 = scmp.ne.s32.totalorder %s72, %s88
      %p90 = scmp.eq.s32.totalorder %s15, 0
      %p91 = por %p89, %p90
      %s92 = ssub.s32 %s17, %s31
      %p93 = scmp.eq.s32.totalorder %s92, 0
      %s95 = sadd.s32 %s94, 1
      %s96 = scalar_select %p93, %s94, %s95
      %p99 = pneg %p93
      %p100 = scmp.eq.s32.totalorder %s9, 2
      %p101 = por %p99, %p100
      %p102 = scmp.ne.s32.totalorder %s94, %s97
      %p103 = scmp.eq.s32.totalorder %s9, 0
      %p104 = por %p102, %p103
      %p105 = scmp.ne.s32.totalorder %s94, %s97
      %p106 = scmp.eq.s32.totalorder %s14, 2
      %p107 = por %p105, %p106
      %p108 = scmp.ne.s32.totalorder %s97, %s98
      %p109 = scmp.eq.s32.totalorder %s14, 0
      %p110 = por %p108, %p109
      %p111 = scmp.ne.s32.totalorder %s97, %s98
      %p112 = scmp.eq.s32.totalorder %s15, 2
      %p113 = por %p111, %p112
      %p115 = scmp.ne.s32.totalorder %s98, %s114
      %p116 = scmp.eq.s32.totalorder %s15, 0
      %p117 = por %p115, %p116
      %s118 = ssub.s32 %s17, %s31
      %s119 = ssub.s32 %s16, %s35
      %s120 = sor.u32 %s118, %s119
      %p121 = scmp.eq.s32.totalorder %s120, 0
      %s123 = sadd.s32 %s122, 1
      %s124 = scalar_select %p121, %s122, %s123
      %p127 = pneg %p121
      %p128 = scmp.eq.s32.totalorder %s9, 2
      %p129 = por %p127, %p128
      %p130 = scmp.ne.s32.totalorder %s122, %s125
      %p131 = scmp.eq.s32.totalorder %s9, 0
      %p132 = por %p130, %p131
      %p133 = scmp.ne.s32.totalorder %s122, %s125
      %p134 = scmp.eq.s32.totalorder %s14, 2
      %p135 = por %p133, %p134
      %p136 = scmp.ne.s32.totalorder %s125, %s126
      %p137 = scmp.eq.s32.totalorder %s14, 0
      %p138 = por %p136, %p137
      %p139 = scmp.ne.s32.totalorder %s125, %s126
      %p140 = scmp.eq.s32.totalorder %s15, 2
      %p141 = por %p139, %p140
      %p143 = scmp.ne.s32.totalorder %s126, %s142
      %p144 = scmp.eq.s32.totalorder %s15, 0
      %p145 = por %p143, %p144
      %p146 = scmp.le.s32.totalorder 1, %s9
      %p147 = scmp.lt.s32.totalorder %s9, 4
      %p148 = pnand %p146, %p147
      %p149 = pneg %p148
      // Predicated region
      $region9: #{transformer_with_mixout_forward.13} parent=5 // pred_check
        _
      $region10: #{transformer_with_mixout_forward.13} parent=5 // pred_check_branch
        %151 = sbr.rel (%p148) target = $region12
      $region11: #{transformer_with_mixout_forward.13} parent=5 // pred_region
        %s152 = ssub.s32 %s9, 1
        // Predicated region
        $region13: #{transformer_with_mixout_forward.13} parent=11 // pred_check
          %p153 = pneg %p56
        $region14: #{transformer_with_mixout_forward.13} parent=11 // pred_check_branch
          %155 = sbr.rel (%p153) target = $region16
        $region15: #{transformer_with_mixout_forward.13} parent=11 // pred_region
          %s156 = smul.u32 2, %s19
          %p157 = scmp.lt.s32.totalorder %s156, 1
          %s158 = scalar_select %p157, %s156, 1
          %p159 = scmp.lt.s32.totalorder %s21, 0
          %s160 = scalar_select %p159, %s21, 0
          %s161 = sadd.s32 %s160, %s158
          %s162 = smul.addr %s161, 4
          %s163 = scalar_lea.vmem %s0, %s162
          %s164 = smul.u32 2, %s19
        $region16: #{transformer_with_mixout_forward.13} parent=11 // pred_fallthru
          _
      $region12: #{transformer_with_mixout_forward.13} parent=5 // pred_fallthru
        _
      %p165 = scmp.lt.s32.totalorder %s9, 3
      // Predicated region
      $region17: #{transformer_with_mixout_forward.13} parent=5 // pred_check
        %p166 = pneg %p165
      $region18: #{transformer_with_mixout_forward.13} parent=5 // pred_check_branch
        %168 = sbr.rel (%p166) target = $region20
      $region19: #{transformer_with_mixout_forward.13} parent=5 // pred_region
        // Predicated region
        $region21: #{transformer_with_mixout_forward.13} parent=19 // pred_check
          %p169 = pneg %p78
        $region22: #{transformer_with_mixout_forward.13} parent=19 // pred_check_branch
          %171 = sbr.rel (%p169) target = $region24
        $region23: #{transformer_with_mixout_forward.13} parent=19 // pred_region
          %s172 = sand.u32 %s68, 1
          %s173 = sand.u32 %s68, 1
          %s174 = smul.addr %s173, 16
          %s175 = scalar_lea.vmem [#allocation3], %s174
          %s176 = smul.u32 4, %s18
          %s177 = smul.addr %s176, 3
          %s178 = sadd.s32 %s17, %s177
          %s179 = smul.addr %s178, 4
          %s180 = scalar_lea.vmem %s1, %s179
          // Predicated region
          $region25: #{transformer_with_mixout_forward.13} parent=23 // pred_check
            _
          $region26: #{transformer_with_mixout_forward.13} parent=23 // pred_check_branch
            %182 = sbr.rel (0) target = $region28
          $region27: #{transformer_with_mixout_forward.13} parent=23 // pred_region
            // Predicated region
            $region29: #{transformer_with_mixout_forward.13} parent=27 // pred_check
              _
            $region30: #{transformer_with_mixout_forward.13} parent=27 // pred_check_branch
              %184 = sbr.rel target = $region32
            $region31: #{transformer_with_mixout_forward.13} parent=27 // pred_region
              // Predicated region
              $region44: #{transformer_with_mixout_forward.13} parent=31 // pred_check
                _
              $region45: #{transformer_with_mixout_forward.13} parent=31 // pred_check_branch
                %206 = sbr.rel (0) target = $region47
              $region46: #{transformer_with_mixout_forward.13} parent=31 // pred_region
                loop: start=0, step=1, limit=1
                $region48: #{transformer_with_mixout_forward.13} parent=46 // loop_pre_header
                  _
                $region49: #{transformer_with_mixout_forward.13} parent=46 // loop_header
                  %s208 = sphi 0, %s212
                  %p209 = scmp.ge.s32.totalorder %s208, 1
                  %s213 = sphi %s180, %s180
                  %s214 = sphi %s175, %s175
                $region50: #{transformer_with_mixout_forward.13} parent=46 // loop_header_branch
                  %211 = sbr.rel (%p209) target = $region54
                $region51: #{transformer_with_mixout_forward.13} parent=46 // loop_body
                  _
                $region52: #{transformer_with_mixout_forward.13} parent=46 // loop_footer
                  %s212 = sadd.s32 1, %s208
                $region53: #{transformer_with_mixout_forward.13} parent=46 // loop_footer_branch
                  %207 = sbr.rel target = $region49
                $region54: #{transformer_with_mixout_forward.13} parent=46 // loop_exit
                  _
                %s216 = ssub.s32 16, 1
                loop: start=0, step=1, limit=1
                $region55: #{transformer_with_mixout_forward.13} parent=46 // loop_pre_header
                  _
                $region56: #{transformer_with_mixout_forward.13} parent=46 // loop_header
                  %s218 = sphi 0, %s222
                  %p219 = scmp.ge.s32.totalorder %s218, 1
                  %s223 = sphi %s180, %s180
                  %s224 = sphi %s175, %s175
                $region57: #{transformer_with_mixout_forward.13} parent=46 // loop_header_branch
                  %221 = sbr.rel (%p219) target = $region61
                $region58: #{transformer_with_mixout_forward.13} parent=46 // loop_body
                  %v225 = vld [vmem:[%s223] sm:%s216]
                  %226 = vst [vmem:[%s224] sm:%s216] %v225
                  %v227 = vld [vmem:[%s223 + $0xc] sm:%s216]
                  %228 = vst [vmem:[%s224 + $0x4] sm:%s216] %v227
                  %v229 = vld [vmem:[%s223 + $0x18] sm:%s216]
                  %230 = vst [vmem:[%s224 + $0x8] sm:%s216] %v229
                  %v231 = vld [vmem:[%s223 + $0x24] sm:%s216]
                  %232 = vst [vmem:[%s224 + $0xc] sm:%s216] %v231
                $region59: #{transformer_with_mixout_forward.13} parent=46 // loop_footer
                  %s222 = sadd.s32 1, %s218
                $region60: #{transformer_with_mixout_forward.13} parent=46 // loop_footer_branch
                  %217 = sbr.rel target = $region56
                $region61: #{transformer_with_mixout_forward.13} parent=46 // loop_exit
                  _
              $region47: #{transformer_with_mixout_forward.13} parent=31 // pred_fallthru
                _
            $region32: #{transformer_with_mixout_forward.13} parent=27 // pred_fallthru
              _
            // Predicated region
            $region33: #{transformer_with_mixout_forward.13} parent=27 // pred_check
              _
            $region34: #{transformer_with_mixout_forward.13} parent=27 // pred_check_branch
              %186 = sbr.rel (0) target = $region36
            $region35: #{transformer_with_mixout_forward.13} parent=27 // pred_region
              %s188 = ssub.s32 16, 1
              loop: start=0, step=1, limit=1
              $region37: #{transformer_with_mixout_forward.13} parent=35 // loop_pre_header
                _
              $region38: #{transformer_with_mixout_forward.13} parent=35 // loop_header
                %s190 = sphi 0, %s194
                %p191 = scmp.ge.s32.totalorder %s190, 1
                %s195 = sphi %s180, %s180
                %s196 = sphi %s175, %s175
              $region39: #{transformer_with_mixout_forward.13} parent=35 // loop_header_branch
                %193 = sbr.rel (%p191) target = $region43
              $region40: #{transformer_with_mixout_forward.13} parent=35 // loop_body
                %v197 = vld [vmem:[%s195] sm:%s188]
                %198 = vst [vmem:[%s196] sm:%s188] %v197
                %v199 = vld [vmem:[%s195 + $0xc] sm:%s188]
                %200 = vst [vmem:[%s196 + $0x4] sm:%s188] %v199
                %v201 = vld [vmem:[%s195 + $0x18] sm:%s188]
                %202 = vst [vmem:[%s196 + $0x8] sm:%s188] %v201
                %v203 = vld [vmem:[%s195 + $0x24] sm:%s188]
                %204 = vst [vmem:[%s196 + $0xc] sm:%s188] %v203
              $region41: #{transformer_with_mixout_forward.13} parent=35 // loop_footer
                %s194 = sadd.s32 1, %s190
              $region42: #{transformer_with_mixout_forward.13} parent=35 // loop_footer_branch
                %189 = sbr.rel target = $region38
              $region43: #{transformer_with_mixout_forward.13} parent=35 // loop_exit
                _
            $region36: #{transformer_with_mixout_forward.13} parent=27 // pred_fallthru
              _
          $region28: #{transformer_with_mixout_forward.13} parent=23 // pred_fallthru
            _
          %233 = vnop
        $region24: #{transformer_with_mixout_forward.13} parent=19 // pred_fallthru
          _
        // Predicated region
        $region62: #{transformer_with_mixout_forward.13} parent=19 // pred_check
          %p234 = pneg %p104
        $region63: #{transformer_with_mixout_forward.13} parent=19 // pred_check_branch
          %236 = sbr.rel (%p234) target = $region65
        $region64: #{transformer_with_mixout_forward.13} parent=19 // pred_region
          %p237 = scmp.lt.s32.totalorder %s17, 2
          %s238 = scalar_select %p237, %s17, 2
          %s239 = scalar_lea.vmem %s2, %s238
        $region65: #{transformer_with_mixout_forward.13} parent=19 // pred_fallthru
          _
      $region20: #{transformer_with_mixout_forward.13} parent=5 // pred_fallthru
        _
      %p240 = scmp.le.s32.totalorder 1, %s9
      %p241 = scmp.lt.s32.totalorder %s9, 4
      %p242 = pnand %p240, %p241
      %p243 = pneg %p242
      // Predicated region
      $region66: #{transformer_with_mixout_forward.13} parent=5 // pred_check
        _
      $region67: #{transformer_with_mixout_forward.13} parent=5 // pred_check_branch
        %245 = sbr.rel (%p242) target = $region69
      $region68: #{transformer_with_mixout_forward.13} parent=5 // pred_region
        %s246 = ssub.s32 %s9, 1
        %s247 = sand.u32 %s71, 1
        %s248 = sand.u32 %s71, 1
        %s249 = smul.addr %s248, 16
        %s250 = scalar_lea.vmem [#allocation3], %s249
        // Predicated region
        $region70: #{transformer_with_mixout_forward.13} parent=68 // pred_check
          %p251 = pneg %p84
        $region71: #{transformer_with_mixout_forward.13} parent=68 // pred_check_branch
          %253 = sbr.rel (%p251) target = $region73
        $region72: #{transformer_with_mixout_forward.13} parent=68 // pred_region
          _
        $region73: #{transformer_with_mixout_forward.13} parent=68 // pred_fallthru
          _
        %s254 = smul.u32 2, %s19
        %p255 = scmp.lt.s32.totalorder %s254, 1
        %s256 = scalar_select %p255, %s254, 1
        %p257 = scmp.lt.s32.totalorder %s21, 0
        %s258 = scalar_select %p257, %s21, 0
        %s259 = sadd.s32 %s258, %s256
        %s260 = smul.addr %s259, 4
        %s261 = scalar_lea.vmem %s0, %s260
        %p262 = pneg %p56
        %p263 = pneg %p53
        %s264 = sand.u32 %s71, 1
        %s265 = sand.u32 %s71, 1
        %s266 = smul.addr %s265, 16
        %s267 = scalar_lea.vmem [#allocation3], %s266
        %p268 = pneg %p84
        %p269 = pneg %p81
        %p270 = scmp.lt.s32.totalorder %s20, 2
        %s271 = scalar_select %p270, %s20, 2
        %s272 = scalar_lea.vmem %s2, %s271
        %p273 = pneg %p110
        %p274 = pneg %p107
        %p275 = pneg %p138
        %p276 = pneg %p135
        %s277 = smul.u32 2, %s19
        %p278 = scmp.lt.s32.totalorder %s20, 2
        %s279 = scalar_select %p278, %s20, 2
        %p280 = scmp.lt.s32.totalorder %s277, 1
        %s281 = scalar_select %p280, %s277, 1
        %s282 = smul.addr %s279, 2
        %s283 = sadd.s32 %s281, %s282
        %s284 = smul.addr %s283, 4
        %s285 = scalar_lea.vmem %s3, %s284
        %s286 = smul.u32 2, %s19
        %p287 = scmp.lt.s32.totalorder %s286, 1
        %s288 = scalar_select %p287, %s286, 1
        %p289 = scmp.lt.s32.totalorder %s21, 0
        %s290 = scalar_select %p289, %s21, 0
        %s291 = sadd.s32 %s290, %s288
        %s292 = smul.addr %s291, 4
        %s293 = scalar_lea.vmem %s0, %s292
        %s294 = smul.u32 2, %s19
        %s295 = smul.u32 4, %s21
        %p296 = scmp.lt.s32.totalorder %s20, 2
        %s297 = scalar_select %p296, %s20, 2
        %s298 = scalar_lea.vmem %s2, %s297
        %s299 = smul.u32 2, %s19
        %p300 = scmp.lt.s32.totalorder %s20, 2
        %s301 = scalar_select %p300, %s20, 2
        %p302 = scmp.lt.s32.totalorder %s299, 1
        %s303 = scalar_select %p302, %s299, 1
        %s304 = smul.addr %s301, 2
        %s305 = sadd.s32 %s303, %s304
        %s306 = smul.addr %s305, 4
        %s307 = scalar_lea.vmem %s3, %s306
        %s308 = smul.u32 2, %s19
        %p310 = scmp.eq.s32.totalorder %s21, 0
        // Predicated region
        $region74: #{transformer_with_mixout_forward.13} parent=68 // pred_check
          %p311 = pneg %p310
        $region75: #{transformer_with_mixout_forward.13} parent=68 // pred_check_branch
          %313 = sbr.rel (%p311) target = $region77
        $region76: #{transformer_with_mixout_forward.13} parent=68 // pred_region
          %314 = vst [vmem:[#allocation2] sm:$0xff] 0.0
          %315 = vst [vmem:[#allocation2 + $0x8] sm:$0xff] 0.0
        $region77: #{transformer_with_mixout_forward.13} parent=68 // pred_fallthru
          _
        %v316 = vld [vmem:[#allocation2] sm:$0xff]
        %v317 = vld [vmem:[#allocation2 + $0x8] sm:$0xff]
        %v318 = vld [vmem:[%s293] sm:$0xf]
        %v319 = vld [vmem:[%s293 + $0x4] sm:$0xf]
        %v320 = vld [vmem:[%s250] sm:$0xf]
        %v321 = vld [vmem:[%s250 + $0x4] sm:$0xf]
        %v322 = vld [vmem:[%s250 + $0x8] sm:$0xf]
        %v323 = vld [vmem:[%s250 + $0xc] sm:$0xf]
        %v326 = vunpack.c.l.b16 %v318
        %v327 = vunpack.c.l.b16 %v319
        %v328 = vpack.c.b16 %v327, %v326
        %v333 = vunpack.c.l.b16 %v320
        %v334 = vunpack.c.l.b16 %v321
        %v335 = vunpack.c.l.b16 %v322
        %v336 = vunpack.c.l.b16 %v323
        %v337 = vpack.c.b16 %v334, %v333
        %v338 = vpack.c.b16 %v336, %v335
        %vm341 = vcmask 261120
        %v343 = vsel %vm341, %v328, 0
        %345 = vmatprep.subr.bf16.mxu0 0
        %346 = vmatpush1.bf16.msra.mxu0 0
        %347 = vmatprep.subr.bf16.mxu0 0
        %348 = vmatpush1.bf16.msra.mxu0 0
        %349 = vmatprep.subr.bf16.mxu0 0
        %350 = vmatpush1.bf16.msra.mxu0 0
        %351 = vmatprep.subr.bf16.mxu0 0
        %352 = vmatpush1.bf16.msra.mxu0 0
        %353 = vmatprep.subr.bf16.mxu0 0
        %354 = vmatpush1.bf16.msra.mxu0 0
        %355 = vmatprep.subr.bf16.mxu0 0
        %356 = vmatpush1.bf16.msra.mxu0 0
        %357 = vmatprep.subr.bf16.mxu0 0
        %358 = vmatpush1.bf16.msra.mxu0 %v338
        %359 = vmatprep.subr.bf16.mxu0 0
        %360 = vmatpush1.bf16.msra.mxu0 %v337
        %361 = vmatprep.subr.bf16.mxu0 0
        %362 = vmatpush2.bf16.msra.mxu0 0
        %363 = vmatprep.subr.bf16.mxu0 0
        %364 = vmatpush2.bf16.msra.mxu0 0
        %365 = vmatprep.subr.bf16.mxu0 0
        %366 = vmatpush2.bf16.msra.mxu0 0
        %367 = vmatprep.subr.bf16.mxu0 0
        %368 = vmatpush2.bf16.msra.mxu0 0
        %369 = vmatprep.subr.bf16.mxu0 0
        %370 = vmatpush2.bf16.msra.mxu0 0
        %371 = vmatprep.subr.bf16.mxu0 0
        %372 = vmatpush2.bf16.msra.mxu0 0
        %373 = vmatprep.subr.bf16.mxu0 0
        %374 = vmatpush2.bf16.msra.mxu0 0
        %375 = vmatprep.subr.bf16.mxu0 0
        %376 = vmatpush2.bf16.msra.mxu0 0
        %377 = vmatprep.mubr.bf16.mxu0 0
        %378 = vmatmul.mubr.bf16.gmra.mxu0 %v343
        %v379 = vpop.f32.mrf.mxu0
        %v380 = vadd.f32 0.0, %v379
        %v381 = vpop.f32.mrf.mxu0
        %v382 = vpop.f32.mrf.mxu0
        %v383 = vadd.f32 0.0, %v382
        %v384 = vpop.f32.mrf.mxu0
        %385 = vdwg.mxu0
        %v386 = vadd.f32 %v316, %v380
        %v387 = vadd.f32 %v317, %v383
        %388 = vst [vmem:[#allocation2] sm:$0xff] %v386
        %389 = vst [vmem:[#allocation2 + $0x8] sm:$0xff] %v387
        // Predicated region
        $region78: #{transformer_with_mixout_forward.13} parent=68 // pred_check
          %p390 = pneg %p310
        $region79: #{transformer_with_mixout_forward.13} parent=68 // pred_check_branch
          %392 = sbr.rel (%p390) target = $region81
        $region80: #{transformer_with_mixout_forward.13} parent=68 // pred_region
          %v393 = vld [vmem:[#allocation2] sm:$0xff]
          %v394 = vld [vmem:[#allocation2 + $0x8] sm:$0xff]
          %v395 = vld [vmem:[%s298] sm:$0x1]
          %v397 = vlaneseq
          %v398 = vshrl.u32 %v397, 7
          %v399 = vsub.s32 0, %v398
          %v400 = vrot.slane %v395, %v399
          %v402 = vadd.f32 %v393, %v400
          %v403 = vadd.f32 %v394, %v400
          %v404 = vpack.c.bf16 %v403, %v402
          %v406 = vunpack.c.l.b16 %v404
          %v407 = vunpack.c.h.b16 %v404
          %v408 = vpack.c.b16 %v406, %v406
          %v409 = vpack.c.b16 %v407, %v407
          %412 = vst [vmem:[%s307] sm:$0xf] %v408
          %413 = vst [vmem:[%s307 + $0x4] sm:$0xf] %v409
        $region81: #{transformer_with_mixout_forward.13} parent=68 // pred_fallthru
          _
        %s414 = smul.u32 2, %s19
        %p415 = scmp.lt.s32.totalorder %s20, 2
        %s416 = scalar_select %p415, %s20, 2
        %p417 = scmp.lt.s32.totalorder %s414, 1
        %s418 = scalar_select %p417, %s414, 1
        %s419 = smul.addr %s416, 2
        %s420 = sadd.s32 %s418, %s419
        %s421 = smul.addr %s420, 4
        %s422 = scalar_lea.vmem %s3, %s421
        // Predicated region
        $region82: #{transformer_with_mixout_forward.13} parent=68 // pred_check
          %p423 = pneg %p135
        $region83: #{transformer_with_mixout_forward.13} parent=68 // pred_check_branch
          %425 = sbr.rel (%p423) target = $region85
        $region84: #{transformer_with_mixout_forward.13} parent=68 // pred_region
          %s426 = smul.u32 2, %s19
        $region85: #{transformer_with_mixout_forward.13} parent=68 // pred_fallthru
          _
      $region69: #{transformer_with_mixout_forward.13} parent=5 // pred_fallthru
        _
      %p427 = scmp.le.s32.totalorder 2, %s9
      // Predicated region
      $region86: #{transformer_with_mixout_forward.13} parent=5 // pred_check
        %p428 = pneg %p427
      $region87: #{transformer_with_mixout_forward.13} parent=5 // pred_check_branch
        %430 = sbr.rel (%p428) target = $region89
      $region88: #{transformer_with_mixout_forward.13} parent=5 // pred_region
        %s431 = ssub.s32 %s9, 2
        // Predicated region
        $region90: #{transformer_with_mixout_forward.13} parent=88 // pred_check
          %p432 = pneg %p141
        $region91: #{transformer_with_mixout_forward.13} parent=88 // pred_check_branch
          %434 = sbr.rel (%p432) target = $region93
        $region92: #{transformer_with_mixout_forward.13} parent=88 // pred_region
          %s435 = smul.u32 2, %s22
          %p436 = scmp.lt.s32.totalorder %s23, 2
          %s437 = scalar_select %p436, %s23, 2
          %p438 = scmp.lt.s32.totalorder %s435, 1
          %s439 = scalar_select %p438, %s435, 1
          %s440 = smul.addr %s437, 2
          %s441 = sadd.s32 %s439, %s440
          %s442 = smul.addr %s441, 4
          %s443 = scalar_lea.vmem %s3, %s442
        $region93: #{transformer_with_mixout_forward.13} parent=88 // pred_fallthru
          _
      $region89: #{transformer_with_mixout_forward.13} parent=5 // pred_fallthru
        _
    $region6: #{transformer_with_mixout_forward.13} parent=1 // loop_footer
      %s13 = sadd.s32 1, %s9
    $region7: #{transformer_with_mixout_forward.13} parent=1 // loop_footer_branch
      %8 = sbr.rel target = $region3
    $region8: #{transformer_with_mixout_forward.13} parent=1 // loop_exit
      _

// kernel: transformer_with_mixout_forward.15
$region0: #{transformer_with_mixout_forward.15}
  #allocation0 [shape = 'u32[]', space=smem, size = 0x4, offset = 0x4, fixed_abs, tag = 'smem constant byte address 0x4 - core index']
  #allocation1 [shape = 'u32[144,128]{1,0:T(1,128)}', space=vmem, size = 0x12000, scoped, tag = 'internal scratch']
  #allocation2 [shape = 'f32[16,32]{1,0:T(8,128)}', space=vmem, size = 0x2000, scoped, tag = 'scratch operand']
  %s0 = inlined_call_operand.vmem [shape: bf16[16,32], index: 0, kind: input, shape index: {}]
  %s1 = inlined_call_operand.vmem [shape: bf16[32,32], index: 1, kind: input, shape index: {}]
  %s2 = inlined_call_operand.vmem [shape: f32[1,32], index: 2, kind: input, shape index: {}]
  %s3 = inlined_call_operand.vmem [shape: bf16[16,32], index: 3, kind: input, shape index: {}]
  %s4 = inlined_call_operand.vmem [shape: f32[1,32], index: 4, kind: input, shape index: {}]
  %s5 = inlined_call_operand.vmem [shape: f32[1,32], index: 5, kind: input, shape index: {}]
  %s6 = inlined_call_operand.vmem [shape: bf16[16,32], index: 6, kind: output, shape index: {}]
  %s7 = sld [smem:[#allocation0]]
  $region42: #{transformer_with_mixout_forward.15} parent=0
    _
  %s9 = ssub.s32 1, %s7
  %s10 = scalar_select 0, %s9, %s7
  // Predicated region
  $region2: #{transformer_with_mixout_forward.15} parent=0 // pred_check
    _
  $region3: #{transformer_with_mixout_forward.15} parent=0 // pred_check_branch
    %12 = sbr.rel (0) target = $region5
  $region4: #{transformer_with_mixout_forward.15} parent=0 // pred_region
    _
  $region5: #{transformer_with_mixout_forward.15} parent=0 // pred_fallthru
    _
  // Predicated region
  $region6: #{transformer_with_mixout_forward.15} parent=0 // pred_check
    _
  $region7: #{transformer_with_mixout_forward.15} parent=0 // pred_check_branch
    %14 = sbr.rel (0) target = $region9
  $region8: #{transformer_with_mixout_forward.15} parent=0 // pred_region
    _
  $region9: #{transformer_with_mixout_forward.15} parent=0 // pred_fallthru
    _
  // Predicated region
  $region10: #{transformer_with_mixout_forward.15} parent=0 // pred_check
    _
  $region11: #{transformer_with_mixout_forward.15} parent=0 // pred_check_branch
    %16 = sbr.rel (0) target = $region13
  $region12: #{transformer_with_mixout_forward.15} parent=0 // pred_region
    _
  $region13: #{transformer_with_mixout_forward.15} parent=0 // pred_fallthru
    _
  // Predicated region
  $region14: #{transformer_with_mixout_forward.15} parent=0 // pred_check
    _
  $region15: #{transformer_with_mixout_forward.15} parent=0 // pred_check_branch
    %18 = sbr.rel (0) target = $region17
  $region16: #{transformer_with_mixout_forward.15} parent=0 // pred_region
    _
  $region17: #{transformer_with_mixout_forward.15} parent=0 // pred_fallthru
    _
  // Predicated region
  $region18: #{transformer_with_mixout_forward.15} parent=0 // pred_check
    _
  $region19: #{transformer_with_mixout_forward.15} parent=0 // pred_check_branch
    %20 = sbr.rel (0) target = $region21
  $region20: #{transformer_with_mixout_forward.15} parent=0 // pred_region
    _
  $region21: #{transformer_with_mixout_forward.15} parent=0 // pred_fallthru
    _
  // Predicated region
  $region22: #{transformer_with_mixout_forward.15} parent=0 // pred_check
    _
  $region23: #{transformer_with_mixout_forward.15} parent=0 // pred_check_branch
    %22 = sbr.rel (0) target = $region25
  $region24: #{transformer_with_mixout_forward.15} parent=0 // pred_region
    _
  $region25: #{transformer_with_mixout_forward.15} parent=0 // pred_fallthru
    _
  %p24 = scmp.eq.s32.totalorder 0, 0
  // Predicated region
  $region26: #{transformer_with_mixout_forward.15} parent=0 // pred_check
    %p25 = pneg %p24
  $region27: #{transformer_with_mixout_forward.15} parent=0 // pred_check_branch
    %27 = sbr.rel (%p25) target = $region29
  $region28: #{transformer_with_mixout_forward.15} parent=0 // pred_region
    %vm28 = vcmask 261120
    %29 = vst.msk [vmem:[#allocation2] sm:$0xff] %vm28, 0.0
    %30 = vst.msk [vmem:[#allocation2 + $0x8] sm:$0xff] %vm28, 0.0
  $region29: #{transformer_with_mixout_forward.15} parent=0 // pred_fallthru
    _
  %v31 = vld [vmem:[#allocation2] sm:$0xff]
  %v32 = vld [vmem:[#allocation2 + $0x8] sm:$0xff]
  %v33 = vld [vmem:[%s0] sm:$0xf]
  %v34 = vld [vmem:[%s0 + $0x4] sm:$0xf]
  %v35 = vld [vmem:[%s1] sm:$0xf]
  %v36 = vld [vmem:[%s1 + $0x4] sm:$0xf]
  %v37 = vld [vmem:[%s1 + $0x8] sm:$0xf]
  %v38 = vld [vmem:[%s1 + $0xc] sm:$0xf]
  %v41 = vunpack.c.l.b16 %v33
  %v42 = vunpack.c.l.b16 %v34
  %v43 = vpack.c.b16 %v42, %v41
  %v48 = vunpack.c.l.b16 %v35
  %v49 = vunpack.c.l.b16 %v36
  %v50 = vunpack.c.l.b16 %v37
  %v51 = vunpack.c.l.b16 %v38
  %v52 = vpack.c.b16 %v49, %v48
  %v53 = vpack.c.b16 %v51, %v50
  %vm56 = vcmask 261120
  %v58 = vsel %vm56, %v43, 0
  %60 = vmatprep.subr.bf16.mxu0 0
  %61 = vmatpush1.bf16.msra.mxu0 0
  %62 = vmatprep.subr.bf16.mxu0 0
  %63 = vmatpush1.bf16.msra.mxu0 0
  %64 = vmatprep.subr.bf16.mxu0 0
  %65 = vmatpush1.bf16.msra.mxu0 0
  %66 = vmatprep.subr.bf16.mxu0 0
  %67 = vmatpush1.bf16.msra.mxu0 0
  %68 = vmatprep.subr.bf16.mxu0 0
  %69 = vmatpush1.bf16.msra.mxu0 0
  %70 = vmatprep.subr.bf16.mxu0 0
  %71 = vmatpush1.bf16.msra.mxu0 0
  %72 = vmatprep.subr.bf16.mxu0 0
  %73 = vmatpush1.bf16.msra.mxu0 %v53
  %74 = vmatprep.subr.bf16.mxu0 0
  %75 = vmatpush1.bf16.msra.mxu0 %v52
  %76 = vmatprep.subr.bf16.mxu0 0
  %77 = vmatpush2.bf16.msra.mxu0 0
  %78 = vmatprep.subr.bf16.mxu0 0
  %79 = vmatpush2.bf16.msra.mxu0 0
  %80 = vmatprep.subr.bf16.mxu0 0
  %81 = vmatpush2.bf16.msra.mxu0 0
  %82 = vmatprep.subr.bf16.mxu0 0
  %83 = vmatpush2.bf16.msra.mxu0 0
  %84 = vmatprep.subr.bf16.mxu0 0
  %85 = vmatpush2.bf16.msra.mxu0 0
  %86 = vmatprep.subr.bf16.mxu0 0
  %87 = vmatpush2.bf16.msra.mxu0 0
  %88 = vmatprep.subr.bf16.mxu0 0
  %89 = vmatpush2.bf16.msra.mxu0 0
  %90 = vmatprep.subr.bf16.mxu0 0
  %91 = vmatpush2.bf16.msra.mxu0 0
  %92 = vmatprep.mubr.bf16.mxu0 0
  %93 = vmatmul.mubr.bf16.gmra.mxu0 %v58
  %v94 = vpop.f32.mrf.mxu0
  %v95 = vadd.f32 0.0, %v94
  %v96 = vpop.f32.mrf.mxu0
  %v97 = vpop.f32.mrf.mxu0
  %v98 = vadd.f32 0.0, %v97
  %v99 = vpop.f32.mrf.mxu0
  %100 = vdwg.mxu0
  %v101 = vadd.f32 %v31, %v95
  %v102 = vadd.f32 %v32, %v98
  %103 = vst.msk [vmem:[#allocation2] sm:$0xff] %vm56, %v101
  %104 = vst.msk [vmem:[#allocation2 + $0x8] sm:$0xff] %vm56, %v102
  // Predicated region
  $region30: #{transformer_with_mixout_forward.15} parent=0 // pred_check
    %p105 = pneg %p24
  $region31: #{transformer_with_mixout_forward.15} parent=0 // pred_check_branch
    %107 = sbr.rel (%p105) target = $region33
  $region32: #{transformer_with_mixout_forward.15} parent=0 // pred_region
    %v108 = vld [vmem:[#allocation2] sm:$0xff]
    %v109 = vld [vmem:[#allocation2 + $0x8] sm:$0xff]
    %v110 = vld [vmem:[%s2] sm:$0x1]
    %v112 = vlaneseq
    %v113 = vshrl.u32 %v112, 7
    %v114 = vsub.s32 0, %v113
    %v115 = vrot.slane %v110, %v114
    %v117 = vadd.f32 %v108, %v115
    %v118 = vadd.f32 %v109, %v115
    %v119 = vld [vmem:[%s3] sm:$0xf]
    %v120 = vld [vmem:[%s3 + $0x4] sm:$0xf]
    %v121 = vunpack.c.l.bf16 %v119
    %v122 = vunpack.c.l.bf16 %v120
    %v123 = vadd.f32 %v117, %v121
    %v124 = vadd.f32 %v118, %v122
    %v125 = vsel %vm56, %v123, 0.0
    %126 = vadd.xlane.f32.xlu0 %v125
    %v127 = vpop.xlane.xlu0 %126
    %v128 = vsel %vm56, %v124, 0.0
    %129 = vadd.xlane.f32.xlu0 %v128
    %v130 = vpop.xlane.xlu0 %129
    %v131 = vrcp.pop 32.0
    %v132 = vmul.f32 %v127, %v131
    %v133 = vmul.f32 %v130, %v131
    %v134 = vsub.f32 %v123, %v132
    %v135 = vsub.f32 %v124, %v133
    %v136 = vmul.f32 %v134, %v134
    %v137 = vmul.f32 %v135, %v135
    %v138 = vsel %vm56, %v136, 0.0
    %139 = vadd.xlane.f32.xlu0 %v138
    %v140 = vpop.xlane.xlu0 %139
    %v141 = vsel %vm56, %v137, 0.0
    %142 = vadd.xlane.f32.xlu0 %v141
    %v143 = vpop.xlane.xlu0 %142
    %v144 = vmul.f32 %v140, %v131
    %v145 = vmul.f32 %v143, %v131
    %v146 = vadd.f32 %v144, 1e-12
    %v147 = vadd.f32 %v145, 1e-12
    %v148 = vrsqrt.pop %v146
    %v149 = vrsqrt.pop %v147
    %v150 = vmul.f32 %v134, %v148
    %v151 = vmul.f32 %v135, %v149
    %v152 = vld [vmem:[%s4] sm:$0x1]
    %v154 = vlaneseq
    %v155 = vshrl.u32 %v154, 7
    %v156 = vsub.s32 0, %v155
    %v157 = vrot.slane %v152, %v156
    %v159 = vmul.f32 %v150, %v157
    %v160 = vmul.f32 %v151, %v157
    %v161 = vld [vmem:[%s5] sm:$0x1]
    %v163 = vlaneseq
    %v164 = vshrl.u32 %v163, 7
    %v165 = vsub.s32 0, %v164
    %v166 = vrot.slane %v161, %v165
    %v168 = vadd.f32 %v159, %v166
    %v169 = vadd.f32 %v160, %v166
    %v170 = vpack.c.bf16 %v169, %v168
    %v172 = vunpack.c.l.b16 %v170
    %v173 = vunpack.c.h.b16 %v170
    %v174 = vpack.c.b16 %v172, %v172
    %v175 = vpack.c.b16 %v173, %v173
    %vm178 = vcmask 257024
    %179 = vst.msk [vmem:[%s6] sm:$0xf] %vm178, %v174
    %180 = vst.msk [vmem:[%s6 + $0x4] sm:$0xf] %vm178, %v175
  $region33: #{transformer_with_mixout_forward.15} parent=0 // pred_fallthru
    _
  // Predicated region
  $region34: #{transformer_with_mixout_forward.15} parent=0 // pred_check
    _
  $region35: #{transformer_with_mixout_forward.15} parent=0 // pred_check_branch
    %182 = sbr.rel (0) target = $region37
  $region36: #{transformer_with_mixout_forward.15} parent=0 // pred_region
    _
  $region37: #{transformer_with_mixout_forward.15} parent=0 // pred_fallthru
    _
  // Predicated region
  $region38: #{transformer_with_mixout_forward.15} parent=0 // pred_check
    _
  $region39: #{transformer_with_mixout_forward.15} parent=0 // pred_check_branch
    %184 = sbr.rel (0) target = $region41
  $region40: #{transformer_with_mixout_forward.15} parent=0 // pred_region
    _
  $region41: #{transformer_with_mixout_forward.15} parent=0 // pred_fallthru
    _

// kernel: transformer_with_mixout_forward.14
$region0: #{transformer_with_mixout_forward.14}
  #allocation0 [shape = 'u32[]', space=smem, size = 0x4, offset = 0x4, fixed_abs, tag = 'smem constant byte address 0x4 - core index']
  #allocation1 [shape = 'u32[144,128]{1,0:T(1,128)}', space=vmem, size = 0x12000, scoped, tag = 'internal scratch']
  #allocation2 [shape = 'f32[4,8,1]{2,1,0:T(8,128)}', space=vmem, size = 0x4000, scoped, tag = 'scratch operand']
  #allocation3 [shape = 'f32[4,8,1]{2,1,0:T(8,128)}', space=vmem, size = 0x4000, scoped, tag = 'scratch operand']
  #allocation4 [shape = 'f32[4,8,8]{2,1,0:T(8,128)}', space=vmem, size = 0x4000, scoped, tag = 'scratch operand']
  %s0 = inlined_call_operand.vmem [shape: bf16[2,8,128], index: 0, kind: input, shape index: {}]
  %s1 = inlined_call_operand.vmem [shape: bf16[2,8,128], index: 1, kind: input, shape index: {}]
  %s2 = inlined_call_operand.vmem [shape: bf16[2,8,128], index: 2, kind: input, shape index: {}]
  %s3 = inlined_call_operand.vmem [shape: f32[2,1,8], index: 3, kind: input, shape index: {}]
  %s4 = inlined_call_operand.vmem [shape: bf16[2,8,32], index: 4, kind: output, shape index: {}]
  %s5 = sld [smem:[#allocation0]]
  $region57: #{transformer_with_mixout_forward.14} parent=0
    _
  %s7 = ssub.s32 1, %s5
  %s8 = scalar_select 0, %s7, %s5
  loop: start=0, step=1, limit=4
  $region2: #{transformer_with_mixout_forward.14} parent=0 // loop_pre_header
    _
  $region3: #{transformer_with_mixout_forward.14} parent=0 // loop_header
    %s10 = sphi 0, %s14
    %p11 = scmp.ge.s32.totalorder %s10, 4
    %s17 = sphi 0, %s36
    %s18 = sphi 0, %s32
    %s19 = sphi 0, %s28
    %s20 = sphi 0, %s17
    %s21 = sphi 0, %s18
    %s22 = sphi 0, %s19
    %s23 = sphi 0, %s20
    %s24 = sphi 0, %s21
    %s25 = sphi 0, %s22
    %s41 = sphi 0, %s43
    %s44 = sphi 0, %s41
    %s45 = sphi 0, %s44
    %s61 = sphi 0, %s45
    %s69 = sphi 0, %s71
    %s72 = sphi 0, %s69
    %s73 = sphi 0, %s72
    %s89 = sphi 0, %s73
    %s97 = sphi 0, %s99
    %s100 = sphi 0, %s97
    %s101 = sphi 0, %s100
    %s117 = sphi 0, %s101
    %s125 = sphi 0, %s127
    %s128 = sphi 0, %s125
    %s129 = sphi 0, %s128
    %s145 = sphi 0, %s129
    %s153 = sphi 0, %s155
    %s156 = sphi 0, %s153
    %s157 = sphi 0, %s156
    %s173 = sphi 0, %s157
  $region4: #{transformer_with_mixout_forward.14} parent=0 // loop_header_branch
    %13 = sbr.rel (%p11) target = $region8
  $region5: #{transformer_with_mixout_forward.14} parent=0 // loop_body
    %s15 = ssub.s32 %s10, 1
    %s16 = ssub.s32 %s10, 2
    %s26 = sadd.s32 1, %s19
    %p27 = scmp.ge.s32.totalorder %s26, 1
    %s28 = scalar_select %p27, 0, %s26
    %s29 = sadd.s32 1, %s18
    %s30 = scalar_select %p27, %s29, %s18
    %p31 = scmp.ge.s32.totalorder %s30, 1
    %s32 = scalar_select %p31, 0, %s30
    %s33 = sadd.s32 1, %s17
    %s34 = scalar_select %p31, %s33, %s17
    %p35 = scmp.ge.s32.totalorder %s34, 2
    %s36 = scalar_select %p35, 0, %s34
    %s37 = ssub.s32 %s17, %s36
    %s38 = ssub.s32 %s18, %s32
    %s39 = sor.u32 %s37, %s38
    %p40 = scmp.eq.s32.totalorder %s39, 0
    %s42 = sadd.s32 %s41, 1
    %s43 = scalar_select %p40, %s41, %s42
    %p46 = pneg %p40
    %p47 = scmp.eq.s32.totalorder %s10, 1
    %p48 = por %p46, %p47
    %p49 = scmp.ne.s32.totalorder %s41, %s44
    %p50 = scmp.eq.s32.totalorder %s10, 0
    %p51 = por %p49, %p50
    %p52 = scmp.ne.s32.totalorder %s41, %s44
    %p53 = scmp.eq.s32.totalorder %s15, 1
    %p54 = por %p52, %p53
    %p55 = scmp.ne.s32.totalorder %s44, %s45
    %p56 = scmp.eq.s32.totalorder %s15, 0
    %p57 = por %p55, %p56
    %p58 = scmp.ne.s32.totalorder %s44, %s45
    %p59 = scmp.eq.s32.totalorder %s16, 1
    %p60 = por %p58, %p59
    %p62 = scmp.ne.s32.totalorder %s45, %s61
    %p63 = scmp.eq.s32.totalorder %s16, 0
    %p64 = por %p62, %p63
    %s65 = ssub.s32 %s17, %s36
    %s66 = ssub.s32 %s19, %s28
    %s67 = sor.u32 %s65, %s66
    %p68 = scmp.eq.s32.totalorder %s67, 0
    %s70 = sadd.s32 %s69, 1
    %s71 = scalar_select %p68, %s69, %s70
    %p74 = pneg %p68
    %p75 = scmp.eq.s32.totalorder %s10, 1
    %p76 = por %p74, %p75
    %p77 = scmp.ne.s32.totalorder %s69, %s72
    %p78 = scmp.eq.s32.totalorder %s10, 0
    %p79 = por %p77, %p78
    %p80 = scmp.ne.s32.totalorder %s69, %s72
    %p81 = scmp.eq.s32.totalorder %s15, 1
    %p82 = por %p80, %p81
    %p83 = scmp.ne.s32.totalorder %s72, %s73
    %p84 = scmp.eq.s32.totalorder %s15, 0
    %p85 = por %p83, %p84
    %p86 = scmp.ne.s32.totalorder %s72, %s73
    %p87 = scmp.eq.s32.totalorder %s16, 1
    %p88 = por %p86, %p87
    %p90 = scmp.ne.s32.totalorder %s73, %s89
    %p91 = scmp.eq.s32.totalorder %s16, 0
    %p92 = por %p90, %p91
    %s93 = ssub.s32 %s17, %s36
    %s94 = ssub.s32 %s19, %s28
    %s95 = sor.u32 %s93, %s94
    %p96 = scmp.eq.s32.totalorder %s95, 0
    %s98 = sadd.s32 %s97, 1
    %s99 = scalar_select %p96, %s97, %s98
    %p102 = pneg %p96
    %p103 = scmp.eq.s32.totalorder %s10, 1
    %p104 = por %p102, %p103
    %p105 = scmp.ne.s32.totalorder %s97, %s100
    %p106 = scmp.eq.s32.totalorder %s10, 0
    %p107 = por %p105, %p106
    %p108 = scmp.ne.s32.totalorder %s97, %s100
    %p109 = scmp.eq.s32.totalorder %s15, 1
    %p110 = por %p108, %p109
    %p111 = scmp.ne.s32.totalorder %s100, %s101
    %p112 = scmp.eq.s32.totalorder %s15, 0
    %p113 = por %p111, %p112
    %p114 = scmp.ne.s32.totalorder %s100, %s101
    %p115 = scmp.eq.s32.totalorder %s16, 1
    %p116 = por %p114, %p115
    %p118 = scmp.ne.s32.totalorder %s101, %s117
    %p119 = scmp.eq.s32.totalorder %s16, 0
    %p120 = por %p118, %p119
    %s121 = ssub.s32 %s17, %s36
    %s122 = ssub.s32 %s19, %s28
    %s123 = sor.u32 %s121, %s122
    %p124 = scmp.eq.s32.totalorder %s123, 0
    %s126 = sadd.s32 %s125, 1
    %s127 = scalar_select %p124, %s125, %s126
    %p130 = pneg %p124
    %p131 = scmp.eq.s32.totalorder %s10, 1
    %p132 = por %p130, %p131
    %p133 = scmp.ne.s32.totalorder %s125, %s128
    %p134 = scmp.eq.s32.totalorder %s10, 0
    %p135 = por %p133, %p134
    %p136 = scmp.ne.s32.totalorder %s125, %s128
    %p137 = scmp.eq.s32.totalorder %s15, 1
    %p138 = por %p136, %p137
    %p139 = scmp.ne.s32.totalorder %s128, %s129
    %p140 = scmp.eq.s32.totalorder %s15, 0
    %p141 = por %p139, %p140
    %p142 = scmp.ne.s32.totalorder %s128, %s129
    %p143 = scmp.eq.s32.totalorder %s16, 1
    %p144 = por %p142, %p143
    %p146 = scmp.ne.s32.totalorder %s129, %s145
    %p147 = scmp.eq.s32.totalorder %s16, 0
    %p148 = por %p146, %p147
    %s149 = ssub.s32 %s17, %s36
    %s150 = ssub.s32 %s18, %s32
    %s151 = sor.u32 %s149, %s150
    %p152 = scmp.eq.s32.totalorder %s151, 0
    %s154 = sadd.s32 %s153, 1
    %s155 = scalar_select %p152, %s153, %s154
    %p158 = pneg %p152
    %p159 = scmp.eq.s32.totalorder %s10, 1
    %p160 = por %p158, %p159
    %p161 = scmp.ne.s32.totalorder %s153, %s156
    %p162 = scmp.eq.s32.totalorder %s10, 0
    %p163 = por %p161, %p162
    %p164 = scmp.ne.s32.totalorder %s153, %s156
    %p165 = scmp.eq.s32.totalorder %s15, 1
    %p166 = por %p164, %p165
    %p167 = scmp.ne.s32.totalorder %s156, %s157
    %p168 = scmp.eq.s32.totalorder %s15, 0
    %p169 = por %p167, %p168
    %p170 = scmp.ne.s32.totalorder %s156, %s157
    %p171 = scmp.eq.s32.totalorder %s16, 1
    %p172 = por %p170, %p171
    %p174 = scmp.ne.s32.totalorder %s157, %s173
    %p175 = scmp.eq.s32.totalorder %s16, 0
    %p176 = por %p174, %p175
    %p177 = scmp.le.s32.totalorder 1, %s10
    %p178 = scmp.lt.s32.totalorder %s10, 3
    %p179 = pnand %p177, %p178
    %p180 = pneg %p179
    // Predicated region
    $region9: #{transformer_with_mixout_forward.14} parent=5 // pred_check
      _
    $region10: #{transformer_with_mixout_forward.14} parent=5 // pred_check_branch
      %182 = sbr.rel (%p179) target = $region12
    $region11: #{transformer_with_mixout_forward.14} parent=5 // pred_region
      %s183 = ssub.s32 %s10, 1
    $region12: #{transformer_with_mixout_forward.14} parent=5 // pred_fallthru
      _
    %p184 = scmp.lt.s32.totalorder %s10, 2
    // Predicated region
    $region13: #{transformer_with_mixout_forward.14} parent=5 // pred_check
      %p185 = pneg %p184
    $region14: #{transformer_with_mixout_forward.14} parent=5 // pred_check_branch
      %187 = sbr.rel (%p185) target = $region16
    $region15: #{transformer_with_mixout_forward.14} parent=5 // pred_region
      // Predicated region
      $region17: #{transformer_with_mixout_forward.14} parent=15 // pred_check
        %p188 = pneg %p51
      $region18: #{transformer_with_mixout_forward.14} parent=15 // pred_check_branch
        %190 = sbr.rel (%p188) target = $region20
      $region19: #{transformer_with_mixout_forward.14} parent=15 // pred_region
        %p191 = scmp.lt.s32.totalorder %s17, 1
        %s192 = scalar_select %p191, %s17, 1
        %p193 = scmp.lt.s32.totalorder %s18, 0
        %s194 = scalar_select %p193, %s18, 0
        %s195 = sadd.s32 %s194, %s192
        %s196 = smul.addr %s195, 4
        %s197 = scalar_lea.vmem %s0, %s196
      $region20: #{transformer_with_mixout_forward.14} parent=15 // pred_fallthru
        _
      // Predicated region
      $region21: #{transformer_with_mixout_forward.14} parent=15 // pred_check
        %p198 = pneg %p79
      $region22: #{transformer_with_mixout_forward.14} parent=15 // pred_check_branch
        %200 = sbr.rel (%p198) target = $region24
      $region23: #{transformer_with_mixout_forward.14} parent=15 // pred_region
        %p201 = scmp.lt.s32.totalorder %s17, 1
        %s202 = scalar_select %p201, %s17, 1
        %p203 = scmp.lt.s32.totalorder %s19, 0
        %s204 = scalar_select %p203, %s19, 0
        %s205 = sadd.s32 %s204, %s202
        %s206 = smul.addr %s205, 4
        %s207 = scalar_lea.vmem %s1, %s206
      $region24: #{transformer_with_mixout_forward.14} parent=15 // pred_fallthru
        _
      // Predicated region
      $region25: #{transformer_with_mixout_forward.14} parent=15 // pred_check
        %p208 = pneg %p107
      $region26: #{transformer_with_mixout_forward.14} parent=15 // pred_check_branch
        %210 = sbr.rel (%p208) target = $region28
      $region27: #{transformer_with_mixout_forward.14} parent=15 // pred_region
        %p211 = scmp.lt.s32.totalorder %s17, 1
        %s212 = scalar_select %p211, %s17, 1
        %p213 = scmp.lt.s32.totalorder %s19, 0
        %s214 = scalar_select %p213, %s19, 0
        %s215 = sadd.s32 %s214, %s212
        %s216 = smul.addr %s215, 4
        %s217 = scalar_lea.vmem %s2, %s216
      $region28: #{transformer_with_mixout_forward.14} parent=15 // pred_fallthru
        _
      // Predicated region
      $region29: #{transformer_with_mixout_forward.14} parent=15 // pred_check
        %p218 = pneg %p135
      $region30: #{transformer_with_mixout_forward.14} parent=15 // pred_check_branch
        %220 = sbr.rel (%p218) target = $region32
      $region31: #{transformer_with_mixout_forward.14} parent=15 // pred_region
        %p221 = scmp.lt.s32.totalorder %s17, 1
        %s222 = scalar_select %p221, %s17, 1
        %p223 = scmp.lt.s32.totalorder %s19, 0
        %s224 = scalar_select %p223, %s19, 0
        %s225 = sadd.s32 %s224, %s222
        %s226 = scalar_lea.vmem %s3, %s225
      $region32: #{transformer_with_mixout_forward.14} parent=15 // pred_fallthru
        _
    $region16: #{transformer_with_mixout_forward.14} parent=5 // pred_fallthru
      _
    %p227 = scmp.le.s32.totalorder 1, %s10
    %p228 = scmp.lt.s32.totalorder %s10, 3
    %p229 = pnand %p227, %p228
    %p230 = pneg %p229
    // Predicated region
    $region33: #{transformer_with_mixout_forward.14} parent=5 // pred_check
      _
    $region34: #{transformer_with_mixout_forward.14} parent=5 // pred_check_branch
      %232 = sbr.rel (%p229) target = $region36
    $region35: #{transformer_with_mixout_forward.14} parent=5 // pred_region
      %s233 = ssub.s32 %s10, 1
      %p234 = scmp.lt.s32.totalorder %s20, 1
      %s235 = scalar_select %p234, %s20, 1
      %p236 = scmp.lt.s32.totalorder %s21, 0
      %s237 = scalar_select %p236, %s21, 0
      %s238 = sadd.s32 %s237, %s235
      %s239 = smul.addr %s238, 4
      %s240 = scalar_lea.vmem %s0, %s239
      %p241 = pneg %p57
      %p242 = pneg %p54
      %p243 = scmp.lt.s32.totalorder %s20, 1
      %s244 = scalar_select %p243, %s20, 1
      %p245 = scmp.lt.s32.totalorder %s22, 0
      %s246 = scalar_select %p245, %s22, 0
      %s247 = sadd.s32 %s246, %s244
      %s248 = smul.addr %s247, 4
      %s249 = scalar_lea.vmem %s1, %s248
      %p250 = pneg %p85
      %p251 = pneg %p82
      %p252 = scmp.lt.s32.totalorder %s20, 1
      %s253 = scalar_select %p252, %s20, 1
      %p254 = scmp.lt.s32.totalorder %s22, 0
      %s255 = scalar_select %p254, %s22, 0
      %s256 = sadd.s32 %s255, %s253
      %s257 = smul.addr %s256, 4
      %s258 = scalar_lea.vmem %s2, %s257
      %p259 = pneg %p113
      %p260 = pneg %p110
      %p261 = scmp.lt.s32.totalorder %s20, 1
      %s262 = scalar_select %p261, %s20, 1
      %p263 = scmp.lt.s32.totalorder %s22, 0
      %s264 = scalar_select %p263, %s22, 0
      %s265 = sadd.s32 %s264, %s262
      %s266 = scalar_lea.vmem %s3, %s265
      %p267 = pneg %p141
      %p268 = pneg %p138
      %p269 = pneg %p169
      %p270 = pneg %p166
      %p271 = scmp.lt.s32.totalorder %s20, 1
      %s272 = scalar_select %p271, %s20, 1
      %p273 = scmp.lt.s32.totalorder %s21, 0
      %s274 = scalar_select %p273, %s21, 0
      %s275 = sadd.s32 %s274, %s272
      %s276 = smul.addr %s275, 4
      %s277 = scalar_lea.vmem %s4, %s276
      %p278 = scmp.lt.s32.totalorder %s20, 1
      %s279 = scalar_select %p278, %s20, 1
      %p280 = scmp.lt.s32.totalorder %s21, 0
      %s281 = scalar_select %p280, %s21, 0
      %s282 = sadd.s32 %s281, %s279
      %s283 = smul.addr %s282, 4
      %s284 = scalar_lea.vmem %s0, %s283
      %p285 = scmp.lt.s32.totalorder %s20, 1
      %s286 = scalar_select %p285, %s20, 1
      %p287 = scmp.lt.s32.totalorder %s22, 0
      %s288 = scalar_select %p287, %s22, 0
      %s289 = sadd.s32 %s288, %s286
      %s290 = smul.addr %s289, 4
      %s291 = scalar_lea.vmem %s1, %s290
      %p292 = scmp.lt.s32.totalorder %s20, 1
      %s293 = scalar_select %p292, %s20, 1
      %p294 = scmp.lt.s32.totalorder %s22, 0
      %s295 = scalar_select %p294, %s22, 0
      %s296 = sadd.s32 %s295, %s293
      %s297 = smul.addr %s296, 4
      %s298 = scalar_lea.vmem %s2, %s297
      %p299 = scmp.lt.s32.totalorder %s20, 1
      %s300 = scalar_select %p299, %s20, 1
      %p301 = scmp.lt.s32.totalorder %s22, 0
      %s302 = scalar_select %p301, %s22, 0
      %s303 = sadd.s32 %s302, %s300
      %s304 = scalar_lea.vmem %s3, %s303
      %p305 = scmp.lt.s32.totalorder %s20, 1
      %s306 = scalar_select %p305, %s20, 1
      %p307 = scmp.lt.s32.totalorder %s21, 0
      %s308 = scalar_select %p307, %s21, 0
      %s309 = sadd.s32 %s308, %s306
      %s310 = smul.addr %s309, 4
      %s311 = scalar_lea.vmem %s4, %s310
      %p313 = scmp.eq.s32.totalorder %s22, 0
      // Predicated region
      $region37: #{transformer_with_mixout_forward.14} parent=35 // pred_check
        %p314 = pneg %p313
      $region38: #{transformer_with_mixout_forward.14} parent=35 // pred_check_branch
        %316 = sbr.rel (%p314) target = $region40
      $region39: #{transformer_with_mixout_forward.14} parent=35 // pred_region
        %vm317 = vcmask 7168
        %318 = vst.msk [vmem:[#allocation2] sm:$0xff] %vm317, -inf
        %319 = vst.msk [vmem:[#allocation2 + $0x8] sm:$0xff] %vm317, -inf
        %320 = vst.msk [vmem:[#allocation2 + $0x10] sm:$0xff] %vm317, -inf
        %321 = vst.msk [vmem:[#allocation2 + $0x18] sm:$0xff] %vm317, -inf
        %322 = vst.msk [vmem:[#allocation3] sm:$0xff] %vm317, 0.0
        %323 = vst.msk [vmem:[#allocation3 + $0x8] sm:$0xff] %vm317, 0.0
        %324 = vst.msk [vmem:[#allocation3 + $0x10] sm:$0xff] %vm317, 0.0
        %325 = vst.msk [vmem:[#allocation3 + $0x18] sm:$0xff] %vm317, 0.0
        %vm326 = vcmask 64512
        %327 = vst.msk [vmem:[#allocation4] sm:$0xff] %vm326, 0.0
        %328 = vst.msk [vmem:[#allocation4 + $0x8] sm:$0xff] %vm326, 0.0
        %329 = vst.msk [vmem:[#allocation4 + $0x10] sm:$0xff] %vm326, 0.0
        %330 = vst.msk [vmem:[#allocation4 + $0x18] sm:$0xff] %vm326, 0.0
      $region40: #{transformer_with_mixout_forward.14} parent=35 // pred_fallthru
        _
      %v331 = vld [vmem:[%s304] sm:$0x1]
      %v332 = vld [vmem:[%s284] sm:$0xf]
      %v333 = vld [vmem:[%s291] sm:$0xf]
      %v334 = vld [vmem:[%s298] sm:$0xf]
      %vm335 = vcmask 64512
      %v337 = vsel %vm335, %v332, 0
      %v340 = vsel %vm335, %v333, 0
      %342 = vmatprep.subr.bf16.mxu0 0
      %343 = vmatpush1.bf16.xpose.msra.mxu0 0
      %344 = vmatprep.subr.bf16.mxu0 0
      %345 = vmatpush1.bf16.xpose.msra.mxu0 0
      %346 = vmatprep.subr.bf16.mxu0 0
      %347 = vmatpush1.bf16.xpose.msra.mxu0 0
      %348 = vmatprep.subr.bf16.mxu0 0
      %349 = vmatpush1.bf16.xpose.msra.mxu0 0
      %350 = vmatprep.subr.bf16.mxu0 0
      %351 = vmatpush1.bf16.xpose.msra.mxu0 0
      %352 = vmatprep.subr.bf16.mxu0 0
      %353 = vmatpush1.bf16.xpose.msra.mxu0 0
      %354 = vmatprep.subr.bf16.mxu0 0
      %355 = vmatpush1.bf16.xpose.msra.mxu0 0
      %356 = vmatprep.subr.bf16.mxu0 0
      %357 = vmatpush1.bf16.xpose.msra.mxu0 %v340
      %358 = vmatprep.subr.bf16.mxu0 0
      %359 = vmatpush2.bf16.xpose.msra.mxu0 0
      %360 = vmatprep.subr.bf16.mxu0 0
      %361 = vmatpush2.bf16.xpose.msra.mxu0 0
      %362 = vmatprep.subr.bf16.mxu0 0
      %363 = vmatpush2.bf16.xpose.msra.mxu0 0
      %364 = vmatprep.subr.bf16.mxu0 0
      %365 = vmatpush2.bf16.xpose.msra.mxu0 0
      %366 = vmatprep.subr.bf16.mxu0 0
      %367 = vmatpush2.bf16.xpose.msra.mxu0 0
      %368 = vmatprep.subr.bf16.mxu0 0
      %369 = vmatpush2.bf16.xpose.msra.mxu0 0
      %370 = vmatprep.subr.bf16.mxu0 0
      %371 = vmatpush2.bf16.xpose.msra.mxu0 0
      %372 = vmatprep.subr.bf16.mxu0 0
      %373 = vmatpush2.bf16.xpose.msra.mxu0 0
      %374 = vmatprep.mubr.bf16.mxu0 0
      %375 = vmatmul.mubr.bf16.gmra.mxu0 %v337
      %v376 = vpop.f32.mrf.mxu0
      %v377 = vadd.f32 0.0, %v376
      %v378 = vpop.f32.mrf.mxu0
      %v379 = vpop.f32.mrf.mxu0
      %v380 = vpop.f32.mrf.mxu0
      %381 = vdwg.mxu0
      %v382 = vmul.f32 %v377, 0.35355338
      %v384 = vlaneseq
      %v385 = vshrl.u32 %v384, 7
      %v386 = vsub.s32 0, %v385
      %v387 = vrot.slane %v331, %v386
      %v389 = vadd.f32 %v382, %v387
      %v390 = vld [vmem:[#allocation2] sm:$0xff]
      %v391 = vsel %vm335, %v389, -inf
      %392 = vmax.xlane.f32.xlu0 %v391
      %v393 = vpop.xlane.xlu0 %392
      %v394 = vmax.f32 %v390, %v393
      %v395 = vsub.f32 %v390, %v394
      %v396 = vmul.f32 %v395, 1.442695
      %v397 = vpow.pop %v396
      %399 = vset.pattern.permute.xlu0 0
      %400 = vperm.xlu0 %399, %v394
      %v401 = vpop.permute.xlu0 %400
      %v403 = vsub.f32 %v389, %v401
      %v404 = vmul.f32 %v403, 1.442695
      %v405 = vpow.pop %v404
      %v406 = vld [vmem:[#allocation3] sm:$0xff]
      %v407 = vmul.f32 %v397, %v406
      %v408 = vsel %vm335, %v405, 0.0
      %409 = vadd.xlane.f32.xlu0 %v408
      %v410 = vpop.xlane.xlu0 %409
      %v411 = vadd.f32 %v407, %v410
      %vm412 = vcmask 7168
      %413 = vst.msk [vmem:[#allocation3] sm:$0xff] %vm412, %v411
      %v414 = vld [vmem:[#allocation4] sm:$0xff]
      %416 = vset.pattern.permute.xlu0 0
      %417 = vperm.xlu0 %416, %v397
      %v418 = vpop.permute.xlu0 %417
      %v420 = vmul.f32 %v418, %v414
      %v421 = vpack.c.bf16 %v405, %v405
      %v423 = vsel %vm335, %v421, 0
      %vm425 = vcmask 1043456
      %v427 = vsel %vm425, %v334, 0
      %429 = vmatprep.subr.bf16.mxu0 0
      %430 = vmatpush1.bf16.msra.mxu0 0
      %431 = vmatprep.subr.bf16.mxu0 0
      %432 = vmatpush1.bf16.msra.mxu0 0
      %433 = vmatprep.subr.bf16.mxu0 0
      %434 = vmatpush1.bf16.msra.mxu0 0
      %435 = vmatprep.subr.bf16.mxu0 0
      %436 = vmatpush1.bf16.msra.mxu0 0
      %437 = vmatprep.subr.bf16.mxu0 0
      %438 = vmatpush1.bf16.msra.mxu0 0
      %439 = vmatprep.subr.bf16.mxu0 0
      %440 = vmatpush1.bf16.msra.mxu0 0
      %441 = vmatprep.subr.bf16.mxu0 0
      %442 = vmatpush1.bf16.msra.mxu0 0
      %443 = vmatprep.subr.bf16.mxu0 0
      %444 = vmatpush1.bf16.msra.mxu0 %v427
      %445 = vmatprep.subr.bf16.mxu0 0
      %446 = vmatpush2.bf16.msra.mxu0 0
      %447 = vmatprep.subr.bf16.mxu0 0
      %448 = vmatpush2.bf16.msra.mxu0 0
      %449 = vmatprep.subr.bf16.mxu0 0
      %450 = vmatpush2.bf16.msra.mxu0 0
      %451 = vmatprep.subr.bf16.mxu0 0
      %452 = vmatpush2.bf16.msra.mxu0 0
      %453 = vmatprep.subr.bf16.mxu0 0
      %454 = vmatpush2.bf16.msra.mxu0 0
      %455 = vmatprep.subr.bf16.mxu0 0
      %456 = vmatpush2.bf16.msra.mxu0 0
      %457 = vmatprep.subr.bf16.mxu0 0
      %458 = vmatpush2.bf16.msra.mxu0 0
      %459 = vmatprep.subr.bf16.mxu0 0
      %460 = vmatpush2.bf16.msra.mxu0 0
      %461 = vmatprep.mubr.bf16.mxu0 0
      %462 = vmatmul.mubr.bf16.gmra.mxu0 %v423
      %v463 = vpop.f32.mrf.mxu0
      %v464 = vadd.f32 0.0, %v463
      %v465 = vpop.f32.mrf.mxu0
      %v466 = vpop.f32.mrf.mxu0
      %v467 = vpop.f32.mrf.mxu0
      %468 = vdwg.mxu0
      %v469 = vadd.f32 %v420, %v464
      %470 = vst.msk [vmem:[#allocation4] sm:$0xff] %vm335, %v469
      %471 = vst.msk [vmem:[#allocation2] sm:$0xff] %vm412, %v394
      %v472 = vld [vmem:[%s284] sm:$0xf]
      %v473 = vld [vmem:[%s291] sm:$0xf]
      %v474 = vld [vmem:[%s298] sm:$0xf]
      %v476 = vunpack.c.l.b16 %v472
      %v477 = vpack.c.b16 %v476, %v476
      %478 = vrot.lane.b32.xlu0 %v477, 120
      %v479 = vpop.permute.xlu0 %478
      %v481 = vunpack.c.l.b16 %v473
      %v482 = vpack.c.b16 %v481, %v481
      %483 = vrot.lane.b32.xlu0 %v482, 120
      %v484 = vpop.permute.xlu0 %483
      %v486 = vsel %vm335, %v479, 0
      %v489 = vsel %vm335, %v484, 0
      %491 = vmatprep.subr.bf16.mxu0 0
      %492 = vmatpush1.bf16.xpose.msra.mxu0 0
      %493 = vmatprep.subr.bf16.mxu0 0
      %494 = vmatpush1.bf16.xpose.msra.mxu0 0
      %495 = vmatprep.subr.bf16.mxu0 0
      %496 = vmatpush1.bf16.xpose.msra.mxu0 0
      %497 = vmatprep.subr.bf16.mxu0 0
      %498 = vmatpush1.bf16.xpose.msra.mxu0 0
      %499 = vmatprep.subr.bf16.mxu0 0
      %500 = vmatpush1.bf16.xpose.msra.mxu0 0
      %501 = vmatprep.subr.bf16.mxu0 0
      %502 = vmatpush1.bf16.xpose.msra.mxu0 0
      %503 = vmatprep.subr.bf16.mxu0 0
      %504 = vmatpush1.bf16.xpose.msra.mxu0 0
      %505 = vmatprep.subr.bf16.mxu0 0
      %506 = vmatpush1.bf16.xpose.msra.mxu0 %v489
      %507 = vmatprep.subr.bf16.mxu0 0
      %508 = vmatpush2.bf16.xpose.msra.mxu0 0
      %509 = vmatprep.subr.bf16.mxu0 0
      %510 = vmatpush2.bf16.xpose.msra.mxu0 0
      %511 = vmatprep.subr.bf16.mxu0 0
      %512 = vmatpush2.bf16.xpose.msra.mxu0 0
      %513 = vmatprep.subr.bf16.mxu0 0
      %514 = vmatpush2.bf16.xpose.msra.mxu0 0
      %515 = vmatprep.subr.bf16.mxu0 0
      %516 = vmatpush2.bf16.xpose.msra.mxu0 0
      %517 = vmatprep.subr.bf16.mxu0 0
      %518 = vmatpush2.bf16.xpose.msra.mxu0 0
      %519 = vmatprep.subr.bf16.mxu0 0
      %520 = vmatpush2.bf16.xpose.msra.mxu0 0
      %521 = vmatprep.subr.bf16.mxu0 0
      %522 = vmatpush2.bf16.xpose.msra.mxu0 0
      %523 = vmatprep.mubr.bf16.mxu0 0
      %524 = vmatmul.mubr.bf16.gmra.mxu0 %v486
      %v525 = vpop.f32.mrf.mxu0
      %v526 = vadd.f32 0.0, %v525
      %v527 = vpop.f32.mrf.mxu0
      %v528 = vpop.f32.mrf.mxu0
      %v529 = vpop.f32.mrf.mxu0
      %530 = vdwg.mxu0
      %v531 = vmul.f32 %v526, 0.35355338
      %v532 = vadd.f32 %v531, %v387
      %s533 = scalar_lea.vmem [#allocation2], 8
      %v534 = vld [vmem:[%s533] sm:$0xff]
      %v535 = vsel %vm335, %v532, -inf
      %536 = vmax.xlane.f32.xlu0 %v535
      %v537 = vpop.xlane.xlu0 %536
      %v538 = vmax.f32 %v534, %v537
      %v539 = vsub.f32 %v534, %v538
      %v540 = vmul.f32 %v539, 1.442695
      %v541 = vpow.pop %v540
      %543 = vset.pattern.permute.xlu0 0
      %544 = vperm.xlu0 %543, %v538
      %v545 = vpop.permute.xlu0 %544
      %v547 = vsub.f32 %v532, %v545
      %v548 = vmul.f32 %v547, 1.442695
      %v549 = vpow.pop %v548
      %s550 = scalar_lea.vmem [#allocation3], 8
      %v551 = vld [vmem:[%s550] sm:$0xff]
      %v552 = vmul.f32 %v541, %v551
      %v553 = vsel %vm335, %v549, 0.0
      %554 = vadd.xlane.f32.xlu0 %v553
      %v555 = vpop.xlane.xlu0 %554
      %v556 = vadd.f32 %v552, %v555
      %557 = vst.msk [vmem:[%s550] sm:$0xff] %vm412, %v556
      %s558 = scalar_lea.vmem [#allocation4], 8
      %v559 = vld [vmem:[%s558] sm:$0xff]
      %561 = vset.pattern.permute.xlu0 0
      %562 = vperm.xlu0 %561, %v541
      %v563 = vpop.permute.xlu0 %562
      %v565 = vmul.f32 %v563, %v559
      %v566 = vpack.c.bf16 %v549, %v549
      %v568 = vunpack.c.l.b16 %v474
      %v569 = vpack.c.b16 %v568, %v568
      %570 = vrot.lane.b32.xlu0 %v569, 120
      %v571 = vpop.permute.xlu0 %570
      %v573 = vsel %vm335, %v566, 0
      %v576 = vsel %vm425, %v571, 0
      %578 = vmatprep.subr.bf16.mxu0 0
      %579 = vmatpush1.bf16.msra.mxu0 0
      %580 = vmatprep.subr.bf16.mxu0 0
      %581 = vmatpush1.bf16.msra.mxu0 0
      %582 = vmatprep.subr.bf16.mxu0 0
      %583 = vmatpush1.bf16.msra.mxu0 0
      %584 = vmatprep.subr.bf16.mxu0 0
      %585 = vmatpush1.bf16.msra.mxu0 0
      %586 = vmatprep.subr.bf16.mxu0 0
      %587 = vmatpush1.bf16.msra.mxu0 0
      %588 = vmatprep.subr.bf16.mxu0 0
      %589 = vmatpush1.bf16.msra.mxu0 0
      %590 = vmatprep.subr.bf16.mxu0 0
      %591 = vmatpush1.bf16.msra.mxu0 0
      %592 = vmatprep.subr.bf16.mxu0 0
      %593 = vmatpush1.bf16.msra.mxu0 %v576
      %594 = vmatprep.subr.bf16.mxu0 0
      %595 = vmatpush2.bf16.msra.mxu0 0
      %596 = vmatprep.subr.bf16.mxu0 0
      %597 = vmatpush2.bf16.msra.mxu0 0
      %598 = vmatprep.subr.bf16.mxu0 0
      %599 = vmatpush2.bf16.msra.mxu0 0
      %600 = vmatprep.subr.bf16.mxu0 0
      %601 = vmatpush2.bf16.msra.mxu0 0
      %602 = vmatprep.subr.bf16.mxu0 0
      %603 = vmatpush2.bf16.msra.mxu0 0
      %604 = vmatprep.subr.bf16.mxu0 0
      %605 = vmatpush2.bf16.msra.mxu0 0
      %606 = vmatprep.subr.bf16.mxu0 0
      %607 = vmatpush2.bf16.msra.mxu0 0
      %608 = vmatprep.subr.bf16.mxu0 0
      %609 = vmatpush2.bf16.msra.mxu0 0
      %610 = vmatprep.mubr.bf16.mxu0 0
      %611 = vmatmul.mubr.bf16.gmra.mxu0 %v573
      %v612 = vpop.f32.mrf.mxu0
      %v613 = vadd.f32 0.0, %v612
      %v614 = vpop.f32.mrf.mxu0
      %v615 = vpop.f32.mrf.mxu0
      %v616 = vpop.f32.mrf.mxu0
      %617 = vdwg.mxu0
      %v618 = vadd.f32 %v565, %v613
      %619 = vst.msk [vmem:[%s558] sm:$0xff] %vm335, %v618
      %620 = vst.msk [vmem:[%s533] sm:$0xff] %vm412, %v538
      %v621 = vld [vmem:[%s284] sm:$0xf]
      %v622 = vld [vmem:[%s291] sm:$0xf]
      %v623 = vld [vmem:[%s298] sm:$0xf]
      %v625 = vunpack.c.l.b16 %v621
      %v626 = vpack.c.b16 %v625, %v625
      %627 = vrot.lane.b32.xlu0 %v626, 112
      %v628 = vpop.permute.xlu0 %627
      %v630 = vunpack.c.l.b16 %v622
      %v631 = vpack.c.b16 %v630, %v630
      %632 = vrot.lane.b32.xlu0 %v631, 112
      %v633 = vpop.permute.xlu0 %632
      %v635 = vsel %vm335, %v628, 0
      %v638 = vsel %vm335, %v633, 0
      %640 = vmatprep.subr.bf16.mxu0 0
      %641 = vmatpush1.bf16.xpose.msra.mxu0 0
      %642 = vmatprep.subr.bf16.mxu0 0
      %643 = vmatpush1.bf16.xpose.msra.mxu0 0
      %644 = vmatprep.subr.bf16.mxu0 0
      %645 = vmatpush1.bf16.xpose.msra.mxu0 0
      %646 = vmatprep.subr.bf16.mxu0 0
      %647 = vmatpush1.bf16.xpose.msra.mxu0 0
      %648 = vmatprep.subr.bf16.mxu0 0
      %649 = vmatpush1.bf16.xpose.msra.mxu0 0
      %650 = vmatprep.subr.bf16.mxu0 0
      %651 = vmatpush1.bf16.xpose.msra.mxu0 0
      %652 = vmatprep.subr.bf16.mxu0 0
      %653 = vmatpush1.bf16.xpose.msra.mxu0 0
      %654 = vmatprep.subr.bf16.mxu0 0
      %655 = vmatpush1.bf16.xpose.msra.mxu0 %v638
      %656 = vmatprep.subr.bf16.mxu0 0
      %657 = vmatpush2.bf16.xpose.msra.mxu0 0
      %658 = vmatprep.subr.bf16.mxu0 0
      %659 = vmatpush2.bf16.xpose.msra.mxu0 0
      %660 = vmatprep.subr.bf16.mxu0 0
      %661 = vmatpush2.bf16.xpose.msra.mxu0 0
      %662 = vmatprep.subr.bf16.mxu0 0
      %663 = vmatpush2.bf16.xpose.msra.mxu0 0
      %664 = vmatprep.subr.bf16.mxu0 0
      %665 = vmatpush2.bf16.xpose.msra.mxu0 0
      %666 = vmatprep.subr.bf16.mxu0 0
      %667 = vmatpush2.bf16.xpose.msra.mxu0 0
      %668 = vmatprep.subr.bf16.mxu0 0
      %669 = vmatpush2.bf16.xpose.msra.mxu0 0
      %670 = vmatprep.subr.bf16.mxu0 0
      %671 = vmatpush2.bf16.xpose.msra.mxu0 0
      %672 = vmatprep.mubr.bf16.mxu0 0
      %673 = vmatmul.mubr.bf16.gmra.mxu0 %v635
      %v674 = vpop.f32.mrf.mxu0
      %v675 = vadd.f32 0.0, %v674
      %v676 = vpop.f32.mrf.mxu0
      %v677 = vpop.f32.mrf.mxu0
      %v678 = vpop.f32.mrf.mxu0
      %679 = vdwg.mxu0
      %v680 = vmul.f32 %v675, 0.35355338
      %v681 = vadd.f32 %v680, %v387
      %s682 = scalar_lea.vmem [#allocation2], 16
      %v683 = vld [vmem:[%s682] sm:$0xff]
      %v684 = vsel %vm335, %v681, -inf
      %685 = vmax.xlane.f32.xlu0 %v684
      %v686 = vpop.xlane.xlu0 %685
      %v687 = vmax.f32 %v683, %v686
      %v688 = vsub.f32 %v683, %v687
      %v689 = vmul.f32 %v688, 1.442695
      %v690 = vpow.pop %v689
      %692 = vset.pattern.permute.xlu0 0
      %693 = vperm.xlu0 %692, %v687
      %v694 = vpop.permute.xlu0 %693
      %v696 = vsub.f32 %v681, %v694
      %v697 = vmul.f32 %v696, 1.442695
      %v698 = vpow.pop %v697
      %s699 = scalar_lea.vmem [#allocation3], 16
      %v700 = vld [vmem:[%s699] sm:$0xff]
      %v701 = vmul.f32 %v690, %v700
      %v702 = vsel %vm335, %v698, 0.0
      %703 = vadd.xlane.f32.xlu0 %v702
      %v704 = vpop.xlane.xlu0 %703
      %v705 = vadd.f32 %v701, %v704
      %706 = vst.msk [vmem:[%s699] sm:$0xff] %vm412, %v705
      %s707 = scalar_lea.vmem [#allocation4], 16
      %v708 = vld [vmem:[%s707] sm:$0xff]
      %710 = vset.pattern.permute.xlu0 0
      %711 = vperm.xlu0 %710, %v690
      %v712 = vpop.permute.xlu0 %711
      %v714 = vmul.f32 %v712, %v708
      %v715 = vpack.c.bf16 %v698, %v698
      %v717 = vunpack.c.l.b16 %v623
      %v718 = vpack.c.b16 %v717, %v717
      %719 = vrot.lane.b32.xlu0 %v718, 112
      %v720 = vpop.permute.xlu0 %719
      %v722 = vsel %vm335, %v715, 0
      %v725 = vsel %vm425, %v720, 0
      %727 = vmatprep.subr.bf16.mxu0 0
      %728 = vmatpush1.bf16.msra.mxu0 0
      %729 = vmatprep.subr.bf16.mxu0 0
      %730 = vmatpush1.bf16.msra.mxu0 0
      %731 = vmatprep.subr.bf16.mxu0 0
      %732 = vmatpush1.bf16.msra.mxu0 0
      %733 = vmatprep.subr.bf16.mxu0 0
      %734 = vmatpush1.bf16.msra.mxu0 0
      %735 = vmatprep.subr.bf16.mxu0 0
      %736 = vmatpush1.bf16.msra.mxu0 0
      %737 = vmatprep.subr.bf16.mxu0 0
      %738 = vmatpush1.bf16.msra.mxu0 0
      %739 = vmatprep.subr.bf16.mxu0 0
      %740 = vmatpush1.bf16.msra.mxu0 0
      %741 = vmatprep.subr.bf16.mxu0 0
      %742 = vmatpush1.bf16.msra.mxu0 %v725
      %743 = vmatprep.subr.bf16.mxu0 0
      %744 = vmatpush2.bf16.msra.mxu0 0
      %745 = vmatprep.subr.bf16.mxu0 0
      %746 = vmatpush2.bf16.msra.mxu0 0
      %747 = vmatprep.subr.bf16.mxu0 0
      %748 = vmatpush2.bf16.msra.mxu0 0
      %749 = vmatprep.subr.bf16.mxu0 0
      %750 = vmatpush2.bf16.msra.mxu0 0
      %751 = vmatprep.subr.bf16.mxu0 0
      %752 = vmatpush2.bf16.msra.mxu0 0
      %753 = vmatprep.subr.bf16.mxu0 0
      %754 = vmatpush2.bf16.msra.mxu0 0
      %755 = vmatprep.subr.bf16.mxu0 0
      %756 = vmatpush2.bf16.msra.mxu0 0
      %757 = vmatprep.subr.bf16.mxu0 0
      %758 = vmatpush2.bf16.msra.mxu0 0
      %759 = vmatprep.mubr.bf16.mxu0 0
      %760 = vmatmul.mubr.bf16.gmra.mxu0 %v722
      %v761 = vpop.f32.mrf.mxu0
      %v762 = vadd.f32 0.0, %v761
      %v763 = vpop.f32.mrf.mxu0
      %v764 = vpop.f32.mrf.mxu0
      %v765 = vpop.f32.mrf.mxu0
      %766 = vdwg.mxu0
      %v767 = vadd.f32 %v714, %v762
      %768 = vst.msk [vmem:[%s707] sm:$0xff] %vm335, %v767
      %769 = vst.msk [vmem:[%s682] sm:$0xff] %vm412, %v687
      %v770 = vld [vmem:[%s284] sm:$0xf]
      %v771 = vld [vmem:[%s291] sm:$0xf]
      %v772 = vld [vmem:[%s298] sm:$0xf]
      %v774 = vunpack.c.l.b16 %v770
      %v775 = vpack.c.b16 %v774, %v774
      %776 = vrot.lane.b32.xlu0 %v775, 104
      %v777 = vpop.permute.xlu0 %776
      %v779 = vunpack.c.l.b16 %v771
      %v780 = vpack.c.b16 %v779, %v779
      %781 = vrot.lane.b32.xlu0 %v780, 104
      %v782 = vpop.permute.xlu0 %781
      %v784 = vsel %vm335, %v777, 0
      %v787 = vsel %vm335, %v782, 0
      %789 = vmatprep.subr.bf16.mxu0 0
      %790 = vmatpush1.bf16.xpose.msra.mxu0 0
      %791 = vmatprep.subr.bf16.mxu0 0
      %792 = vmatpush1.bf16.xpose.msra.mxu0 0
      %793 = vmatprep.subr.bf16.mxu0 0
      %794 = vmatpush1.bf16.xpose.msra.mxu0 0
      %795 = vmatprep.subr.bf16.mxu0 0
      %796 = vmatpush1.bf16.xpose.msra.mxu0 0
      %797 = vmatprep.subr.bf16.mxu0 0
      %798 = vmatpush1.bf16.xpose.msra.mxu0 0
      %799 = vmatprep.subr.bf16.mxu0 0
      %800 = vmatpush1.bf16.xpose.msra.mxu0 0
      %801 = vmatprep.subr.bf16.mxu0 0
      %802 = vmatpush1.bf16.xpose.msra.mxu0 0
      %803 = vmatprep.subr.bf16.mxu0 0
      %804 = vmatpush1.bf16.xpose.msra.mxu0 %v787
      %805 = vmatprep.subr.bf16.mxu0 0
      %806 = vmatpush2.bf16.xpose.msra.mxu0 0
      %807 = vmatprep.subr.bf16.mxu0 0
      %808 = vmatpush2.bf16.xpose.msra.mxu0 0
      %809 = vmatprep.subr.bf16.mxu0 0
      %810 = vmatpush2.bf16.xpose.msra.mxu0 0
      %811 = vmatprep.subr.bf16.mxu0 0
      %812 = vmatpush2.bf16.xpose.msra.mxu0 0
      %813 = vmatprep.subr.bf16.mxu0 0
      %814 = vmatpush2.bf16.xpose.msra.mxu0 0
      %815 = vmatprep.subr.bf16.mxu0 0
      %816 = vmatpush2.bf16.xpose.msra.mxu0 0
      %817 = vmatprep.subr.bf16.mxu0 0
      %818 = vmatpush2.bf16.xpose.msra.mxu0 0
      %819 = vmatprep.subr.bf16.mxu0 0
      %820 = vmatpush2.bf16.xpose.msra.mxu0 0
      %821 = vmatprep.mubr.bf16.mxu0 0
      %822 = vmatmul.mubr.bf16.gmra.mxu0 %v784
      %v823 = vpop.f32.mrf.mxu0
      %v824 = vadd.f32 0.0, %v823
      %v825 = vpop.f32.mrf.mxu0
      %v826 = vpop.f32.mrf.mxu0
      %v827 = vpop.f32.mrf.mxu0
      %828 = vdwg.mxu0
      %v829 = vmul.f32 %v824, 0.35355338
      %v830 = vadd.f32 %v829, %v387
      %s831 = scalar_lea.vmem [#allocation2], 24
      %v832 = vld [vmem:[%s831] sm:$0xff]
      %v833 = vsel %vm335, %v830, -inf
      %834 = vmax.xlane.f32.xlu0 %v833
      %v835 = vpop.xlane.xlu0 %834
      %v836 = vmax.f32 %v832, %v835
      %v837 = vsub.f32 %v832, %v836
      %v838 = vmul.f32 %v837, 1.442695
      %v839 = vpow.pop %v838
      %841 = vset.pattern.permute.xlu0 0
      %842 = vperm.xlu0 %841, %v836
      %v843 = vpop.permute.xlu0 %842
      %v845 = vsub.f32 %v830, %v843
      %v846 = vmul.f32 %v845, 1.442695
      %v847 = vpow.pop %v846
      %s848 = scalar_lea.vmem [#allocation3], 24
      %v849 = vld [vmem:[%s848] sm:$0xff]
      %v850 = vmul.f32 %v839, %v849
      %v851 = vsel %vm335, %v847, 0.0
      %852 = vadd.xlane.f32.xlu0 %v851
      %v853 = vpop.xlane.xlu0 %852
      %v854 = vadd.f32 %v850, %v853
      %855 = vst.msk [vmem:[%s848] sm:$0xff] %vm412, %v854
      %s856 = scalar_lea.vmem [#allocation4], 24
      %v857 = vld [vmem:[%s856] sm:$0xff]
      %859 = vset.pattern.permute.xlu0 0
      %860 = vperm.xlu0 %859, %v839
      %v861 = vpop.permute.xlu0 %860
      %v863 = vmul.f32 %v861, %v857
      %v864 = vpack.c.bf16 %v847, %v847
      %v866 = vunpack.c.l.b16 %v772
      %v867 = vpack.c.b16 %v866, %v866
      %868 = vrot.lane.b32.xlu0 %v867, 104
      %v869 = vpop.permute.xlu0 %868
      %v871 = vsel %vm335, %v864, 0
      %v874 = vsel %vm425, %v869, 0
      %876 = vmatprep.subr.bf16.mxu0 0
      %877 = vmatpush1.bf16.msra.mxu0 0
      %878 = vmatprep.subr.bf16.mxu0 0
      %879 = vmatpush1.bf16.msra.mxu0 0
      %880 = vmatprep.subr.bf16.mxu0 0
      %881 = vmatpush1.bf16.msra.mxu0 0
      %882 = vmatprep.subr.bf16.mxu0 0
      %883 = vmatpush1.bf16.msra.mxu0 0
      %884 = vmatprep.subr.bf16.mxu0 0
      %885 = vmatpush1.bf16.msra.mxu0 0
      %886 = vmatprep.subr.bf16.mxu0 0
      %887 = vmatpush1.bf16.msra.mxu0 0
      %888 = vmatprep.subr.bf16.mxu0 0
      %889 = vmatpush1.bf16.msra.mxu0 0
      %890 = vmatprep.subr.bf16.mxu0 0
      %891 = vmatpush1.bf16.msra.mxu0 %v874
      %892 = vmatprep.subr.bf16.mxu0 0
      %893 = vmatpush2.bf16.msra.mxu0 0
      %894 = vmatprep.subr.bf16.mxu0 0
      %895 = vmatpush2.bf16.msra.mxu0 0
      %896 = vmatprep.subr.bf16.mxu0 0
      %897 = vmatpush2.bf16.msra.mxu0 0
      %898 = vmatprep.subr.bf16.mxu0 0
      %899 = vmatpush2.bf16.msra.mxu0 0
      %900 = vmatprep.subr.bf16.mxu0 0
      %901 = vmatpush2.bf16.msra.mxu0 0
      %902 = vmatprep.subr.bf16.mxu0 0
      %903 = vmatpush2.bf16.msra.mxu0 0
      %904 = vmatprep.subr.bf16.mxu0 0
      %905 = vmatpush2.bf16.msra.mxu0 0
      %906 = vmatprep.subr.bf16.mxu0 0
      %907 = vmatpush2.bf16.msra.mxu0 0
      %908 = vmatprep.mubr.bf16.mxu0 0
      %909 = vmatmul.mubr.bf16.gmra.mxu0 %v871
      %v910 = vpop.f32.mrf.mxu0
      %v911 = vadd.f32 0.0, %v910
      %v912 = vpop.f32.mrf.mxu0
      %v913 = vpop.f32.mrf.mxu0
      %v914 = vpop.f32.mrf.mxu0
      %915 = vdwg.mxu0
      %v916 = vadd.f32 %v863, %v911
      %917 = vst.msk [vmem:[%s856] sm:$0xff] %vm335, %v916
      %918 = vst.msk [vmem:[%s831] sm:$0xff] %vm412, %v836
      // Predicated region
      $region41: #{transformer_with_mixout_forward.14} parent=35 // pred_check
        %p919 = pneg %p313
      $region42: #{transformer_with_mixout_forward.14} parent=35 // pred_check_branch
        %921 = sbr.rel (%p919) target = $region44
      $region43: #{transformer_with_mixout_forward.14} parent=35 // pred_region
        %v922 = vld [vmem:[#allocation3] sm:$0xff]
        %v923 = vrcp.pop %v922
        %v924 = vld [vmem:[#allocation4] sm:$0xff]
        %926 = vset.pattern.permute.xlu0 0
        %927 = vperm.xlu0 %926, %v923
        %v928 = vpop.permute.xlu0 %927
        %v930 = vmul.f32 %v924, %v928
        %v931 = vpack.c.bf16 %v930, %v930
        %vm932 = vcmask 60416
        %933 = vst.msk [vmem:[%s311] sm:$0xf] %vm932, %v931
        %v934 = vld [vmem:[%s550] sm:$0xff]
        %v935 = vrcp.pop %v934
        %v936 = vld [vmem:[%s558] sm:$0xff]
        %938 = vset.pattern.permute.xlu0 0
        %939 = vperm.xlu0 %938, %v935
        %v940 = vpop.permute.xlu0 %939
        %v942 = vmul.f32 %v936, %v940
        %v943 = vpack.c.bf16 %v942, %v942
        %v945 = vunpack.c.l.b16 %v943
        %v946 = vpack.c.b16 %v945, %v945
        %947 = vrot.lane.b32.xlu0 %v946, 8
        %v948 = vpop.permute.xlu0 %947
        %vm950 = vcmask 126016
        %951 = vst.msk [vmem:[%s311] sm:$0xf] %vm950, %v948
        %v952 = vld [vmem:[%s699] sm:$0xff]
        %v953 = vrcp.pop %v952
        %v954 = vld [vmem:[%s707] sm:$0xff]
        %956 = vset.pattern.permute.xlu0 0
        %957 = vperm.xlu0 %956, %v953
        %v958 = vpop.permute.xlu0 %957
        %v960 = vmul.f32 %v954, %v958
        %v961 = vpack.c.bf16 %v960, %v960
        %v963 = vunpack.c.l.b16 %v961
        %v964 = vpack.c.b16 %v963, %v963
        %965 = vrot.lane.b32.xlu0 %v964, 16
        %v966 = vpop.permute.xlu0 %965
        %vm968 = vcmask 191616
        %969 = vst.msk [vmem:[%s311] sm:$0xf] %vm968, %v966
        %v970 = vld [vmem:[%s848] sm:$0xff]
        %v971 = vrcp.pop %v970
        %v972 = vld [vmem:[%s856] sm:$0xff]
        %974 = vset.pattern.permute.xlu0 0
        %975 = vperm.xlu0 %974, %v971
        %v976 = vpop.permute.xlu0 %975
        %v978 = vmul.f32 %v972, %v976
        %v979 = vpack.c.bf16 %v978, %v978
        %v981 = vunpack.c.l.b16 %v979
        %v982 = vpack.c.b16 %v981, %v981
        %983 = vrot.lane.b32.xlu0 %v982, 24
        %v984 = vpop.permute.xlu0 %983
        %vm986 = vcmask 257216
        %987 = vst.msk [vmem:[%s311] sm:$0xf] %vm986, %v984
      $region44: #{transformer_with_mixout_forward.14} parent=35 // pred_fallthru
        _
      %p988 = scmp.lt.s32.totalorder %s20, 1
      %s989 = scalar_select %p988, %s20, 1
      %p990 = scmp.lt.s32.totalorder %s21, 0
      %s991 = scalar_select %p990, %s21, 0
      %s992 = sadd.s32 %s991, %s989
      %s993 = smul.addr %s992, 4
      %s994 = scalar_lea.vmem %s4, %s993
      // Predicated region
      $region45: #{transformer_with_mixout_forward.14} parent=35 // pred_check
        %p995 = pneg %p166
      $region46: #{transformer_with_mixout_forward.14} parent=35 // pred_check_branch
        %997 = sbr.rel (%p995) target = $region48
      $region47: #{transformer_with_mixout_forward.14} parent=35 // pred_region
        _
      $region48: #{transformer_with_mixout_forward.14} parent=35 // pred_fallthru
        _
    $region36: #{transformer_with_mixout_forward.14} parent=5 // pred_fallthru
      _
    %p998 = scmp.le.s32.totalorder 2, %s10
    // Predicated region
    $region49: #{transformer_with_mixout_forward.14} parent=5 // pred_check
      %p999 = pneg %p998
    $region50: #{transformer_with_mixout_forward.14} parent=5 // pred_check_branch
      %1001 = sbr.rel (%p999) target = $region52
    $region51: #{transformer_with_mixout_forward.14} parent=5 // pred_region
      %s1002 = ssub.s32 %s10, 2
      // Predicated region
      $region53: #{transformer_with_mixout_forward.14} parent=51 // pred_check
        %p1003 = pneg %p172
      $region54: #{transformer_with_mixout_forward.14} parent=51 // pred_check_branch
        %1005 = sbr.rel (%p1003) target = $region56
      $region55: #{transformer_with_mixout_forward.14} parent=51 // pred_region
        %p1006 = scmp.lt.s32.totalorder %s23, 1
        %s1007 = scalar_select %p1006, %s23, 1
        %p1008 = scmp.lt.s32.totalorder %s24, 0
        %s1009 = scalar_select %p1008, %s24, 0
        %s1010 = sadd.s32 %s1009, %s1007
        %s1011 = smul.addr %s1010, 4
        %s1012 = scalar_lea.vmem %s4, %s1011
      $region56: #{transformer_with_mixout_forward.14} parent=51 // pred_fallthru
        _
    $region52: #{transformer_with_mixout_forward.14} parent=5 // pred_fallthru
      _
  $region6: #{transformer_with_mixout_forward.14} parent=0 // loop_footer
    %s14 = sadd.s32 1, %s10
  $region7: #{transformer_with_mixout_forward.14} parent=0 // loop_footer_branch
    %9 = sbr.rel target = $region3
  $region8: #{transformer_with_mixout_forward.14} parent=0 // loop_exit
    _

// kernel: transformer_with_mixout_forward.16
$region0: #{transformer_with_mixout_forward.16}
  #allocation0 [shape = 'u32[]', space=smem, size = 0x4, offset = 0x4, fixed_abs, tag = 'smem constant byte address 0x4 - core index']
  #allocation1 [shape = 'u32[144,128]{1,0:T(1,128)}', space=vmem, size = 0x12000, scoped, tag = 'internal scratch']
  #allocation2 [shape = 'f32[16,64]{1,0:T(8,128)}', space=vmem, size = 0x2000, scoped, tag = 'scratch operand']
  %s0 = inlined_call_operand.vmem [shape: bf16[16,32], index: 0, kind: input, shape index: {}]
  %s1 = inlined_call_operand.vmem [shape: bf16[32,64], index: 1, kind: input, shape index: {}]
  %s2 = inlined_call_operand.vmem [shape: f32[1,64], index: 2, kind: input, shape index: {}]
  %s3 = inlined_call_operand.vmem [shape: bf16[16,64], index: 3, kind: output, shape index: {}]
  %s4 = sld [smem:[#allocation0]]
  $region30: #{transformer_with_mixout_forward.16} parent=0
    _
  %s6 = ssub.s32 1, %s4
  %s7 = scalar_select 0, %s6, %s4
  // Predicated region
  $region2: #{transformer_with_mixout_forward.16} parent=0 // pred_check
    _
  $region3: #{transformer_with_mixout_forward.16} parent=0 // pred_check_branch
    %9 = sbr.rel (0) target = $region5
  $region4: #{transformer_with_mixout_forward.16} parent=0 // pred_region
    _
  $region5: #{transformer_with_mixout_forward.16} parent=0 // pred_fallthru
    _
  // Predicated region
  $region6: #{transformer_with_mixout_forward.16} parent=0 // pred_check
    _
  $region7: #{transformer_with_mixout_forward.16} parent=0 // pred_check_branch
    %11 = sbr.rel (0) target = $region9
  $region8: #{transformer_with_mixout_forward.16} parent=0 // pred_region
    _
  $region9: #{transformer_with_mixout_forward.16} parent=0 // pred_fallthru
    _
  // Predicated region
  $region10: #{transformer_with_mixout_forward.16} parent=0 // pred_check
    _
  $region11: #{transformer_with_mixout_forward.16} parent=0 // pred_check_branch
    %13 = sbr.rel (0) target = $region13
  $region12: #{transformer_with_mixout_forward.16} parent=0 // pred_region
    _
  $region13: #{transformer_with_mixout_forward.16} parent=0 // pred_fallthru
    _
  %p15 = scmp.eq.s32.totalorder 0, 0
  // Predicated region
  $region14: #{transformer_with_mixout_forward.16} parent=0 // pred_check
    %p16 = pneg %p15
  $region15: #{transformer_with_mixout_forward.16} parent=0 // pred_check_branch
    %18 = sbr.rel (%p16) target = $region17
  $region16: #{transformer_with_mixout_forward.16} parent=0 // pred_region
    %vm19 = vcmask 523264
    %20 = vst.msk [vmem:[#allocation2] sm:$0xff] %vm19, 0.0
    %21 = vst.msk [vmem:[#allocation2 + $0x8] sm:$0xff] %vm19, 0.0
  $region17: #{transformer_with_mixout_forward.16} parent=0 // pred_fallthru
    _
  %v22 = vld [vmem:[#allocation2] sm:$0xff]
  %v23 = vld [vmem:[#allocation2 + $0x8] sm:$0xff]
  %v24 = vld [vmem:[%s0] sm:$0xf]
  %v25 = vld [vmem:[%s0 + $0x4] sm:$0xf]
  %v26 = vld [vmem:[%s1] sm:$0xf]
  %v27 = vld [vmem:[%s1 + $0x4] sm:$0xf]
  %v28 = vld [vmem:[%s1 + $0x8] sm:$0xf]
  %v29 = vld [vmem:[%s1 + $0xc] sm:$0xf]
  %v32 = vunpack.c.l.b16 %v24
  %v33 = vunpack.c.l.b16 %v25
  %v34 = vpack.c.b16 %v33, %v32
  %v39 = vunpack.c.l.b16 %v26
  %v40 = vunpack.c.l.b16 %v27
  %v41 = vunpack.c.l.b16 %v28
  %v42 = vunpack.c.l.b16 %v29
  %v43 = vpack.c.b16 %v40, %v39
  %v44 = vpack.c.b16 %v42, %v41
  %vm47 = vcmask 261120
  %v49 = vsel %vm47, %v34, 0
  %51 = vmatprep.subr.bf16.mxu0 0
  %52 = vmatpush1.bf16.msra.mxu0 0
  %53 = vmatprep.subr.bf16.mxu0 0
  %54 = vmatpush1.bf16.msra.mxu0 0
  %55 = vmatprep.subr.bf16.mxu0 0
  %56 = vmatpush1.bf16.msra.mxu0 0
  %57 = vmatprep.subr.bf16.mxu0 0
  %58 = vmatpush1.bf16.msra.mxu0 0
  %59 = vmatprep.subr.bf16.mxu0 0
  %60 = vmatpush1.bf16.msra.mxu0 0
  %61 = vmatprep.subr.bf16.mxu0 0
  %62 = vmatpush1.bf16.msra.mxu0 0
  %63 = vmatprep.subr.bf16.mxu0 0
  %64 = vmatpush1.bf16.msra.mxu0 %v44
  %65 = vmatprep.subr.bf16.mxu0 0
  %66 = vmatpush1.bf16.msra.mxu0 %v43
  %67 = vmatprep.subr.bf16.mxu0 0
  %68 = vmatpush2.bf16.msra.mxu0 0
  %69 = vmatprep.subr.bf16.mxu0 0
  %70 = vmatpush2.bf16.msra.mxu0 0
  %71 = vmatprep.subr.bf16.mxu0 0
  %72 = vmatpush2.bf16.msra.mxu0 0
  %73 = vmatprep.subr.bf16.mxu0 0
  %74 = vmatpush2.bf16.msra.mxu0 0
  %75 = vmatprep.subr.bf16.mxu0 0
  %76 = vmatpush2.bf16.msra.mxu0 0
  %77 = vmatprep.subr.bf16.mxu0 0
  %78 = vmatpush2.bf16.msra.mxu0 0
  %79 = vmatprep.subr.bf16.mxu0 0
  %80 = vmatpush2.bf16.msra.mxu0 0
  %81 = vmatprep.subr.bf16.mxu0 0
  %82 = vmatpush2.bf16.msra.mxu0 0
  %83 = vmatprep.mubr.bf16.mxu0 0
  %84 = vmatmul.mubr.bf16.gmra.mxu0 %v49
  %v85 = vpop.f32.mrf.mxu0
  %v86 = vadd.f32 0.0, %v85
  %v87 = vpop.f32.mrf.mxu0
  %v88 = vpop.f32.mrf.mxu0
  %v89 = vadd.f32 0.0, %v88
  %v90 = vpop.f32.mrf.mxu0
  %91 = vdwg.mxu0
  %v92 = vadd.f32 %v22, %v86
  %v93 = vadd.f32 %v23, %v89
  %vm94 = vcmask 523264
  %95 = vst.msk [vmem:[#allocation2] sm:$0xff] %vm94, %v92
  %96 = vst.msk [vmem:[#allocation2 + $0x8] sm:$0xff] %vm94, %v93
  // Predicated region
  $region18: #{transformer_with_mixout_forward.16} parent=0 // pred_check
    %p97 = pneg %p15
  $region19: #{transformer_with_mixout_forward.16} parent=0 // pred_check_branch
    %99 = sbr.rel (%p97) target = $region21
  $region20: #{transformer_with_mixout_forward.16} parent=0 // pred_region
    %v100 = vld [vmem:[#allocation2] sm:$0xff]
    %v101 = vld [vmem:[#allocation2 + $0x8] sm:$0xff]
    %v102 = vld [vmem:[%s2] sm:$0x1]
    %v104 = vlaneseq
    %v105 = vshrl.u32 %v104, 7
    %v106 = vsub.s32 0, %v105
    %v107 = vrot.slane %v102, %v106
    %v109 = vadd.f32 %v100, %v107
    %v110 = vadd.f32 %v101, %v107
    %v111 = vmul.f32 %v109, %v109
    %v112 = vmul.f32 %v110, %v110
    %v113 = vmul.f32 %v109, %v111
    %v114 = vmul.f32 %v110, %v112
    %v115 = vmul.f32 %v113, 0.044715
    %v116 = vmul.f32 %v114, 0.044715
    %v117 = vadd.f32 %v109, %v115
    %v118 = vadd.f32 %v110, %v116
    %v119 = vmul.f32 %v117, 0.7978846
    %v120 = vmul.f32 %v118, 0.7978846
    %v121 = vtanh.pop %v119
    %v122 = vtanh.pop %v120
    %v123 = vadd.f32 %v121, 1.0
    %v124 = vadd.f32 %v122, 1.0
    %v125 = vmul.f32 %v123, 0.5
    %v126 = vmul.f32 %v124, 0.5
    %v127 = vmul.f32 %v109, %v125
    %v128 = vmul.f32 %v110, %v126
    %v129 = vpack.c.bf16 %v128, %v127
    %v131 = vunpack.c.l.b16 %v129
    %v132 = vunpack.c.h.b16 %v129
    %v133 = vpack.c.b16 %v131, %v131
    %v134 = vpack.c.b16 %v132, %v132
    %vm137 = vcmask 519168
    %138 = vst.msk [vmem:[%s3] sm:$0xf] %vm137, %v133
    %139 = vst.msk [vmem:[%s3 + $0x4] sm:$0xf] %vm137, %v134
  $region21: #{transformer_with_mixout_forward.16} parent=0 // pred_fallthru
    _
  // Predicated region
  $region22: #{transformer_with_mixout_forward.16} parent=0 // pred_check
    _
  $region23: #{transformer_with_mixout_forward.16} parent=0 // pred_check_branch
    %141 = sbr.rel (0) target = $region25
  $region24: #{transformer_with_mixout_forward.16} parent=0 // pred_region
    _
  $region25: #{transformer_with_mixout_forward.16} parent=0 // pred_fallthru
    _
  // Predicated region
  $region26: #{transformer_with_mixout_forward.16} parent=0 // pred_check
    _
  $region27: #{transformer_with_mixout_forward.16} parent=0 // pred_check_branch
    %143 = sbr.rel (0) target = $region29
  $region28: #{transformer_with_mixout_forward.16} parent=0 // pred_region
    _
  $region29: #{transformer_with_mixout_forward.16} parent=0 // pred_fallthru
    _

// kernel: transformer_with_mixout_forward.23
$region0: #{transformer_with_mixout_forward.23}
  #allocation0 [shape = 'u32[]', space=smem, size = 0x4, offset = 0x4, fixed_abs, tag = 'smem constant byte address 0x4 - core index']
  #allocation1 [shape = 'u32[144,128]{1,0:T(1,128)}', space=vmem, size = 0x12000, scoped, tag = 'internal scratch']
  #allocation2 [shape = 'f32[2,32]{1,0:T(2,128)}', space=vmem, size = 0x400, scoped, tag = 'scratch operand']
  %s0 = inlined_call_operand.vmem [shape: bf16[2,8,32], index: 0, kind: input, shape index: {}]
  %s1 = inlined_call_operand.vmem [shape: f32[32,128], index: 1, kind: input, shape index: {}]
  %s2 = inlined_call_operand.vmem [shape: f32[1,128], index: 2, kind: input, shape index: {}]
  %s3 = inlined_call_operand.vmem [shape: f32[2,128], index: 3, kind: output, shape index: {}]
  %s4 = sld [smem:[#allocation0]]
  $region30: #{transformer_with_mixout_forward.23} parent=0
    _
  %s6 = ssub.s32 1, %s4
  %s7 = scalar_select 0, %s6, %s4
  // Predicated region
  $region2: #{transformer_with_mixout_forward.23} parent=0 // pred_check
    _
  $region3: #{transformer_with_mixout_forward.23} parent=0 // pred_check_branch
    %9 = sbr.rel (0) target = $region5
  $region4: #{transformer_with_mixout_forward.23} parent=0 // pred_region
    _
  $region5: #{transformer_with_mixout_forward.23} parent=0 // pred_fallthru
    _
  // Predicated region
  $region6: #{transformer_with_mixout_forward.23} parent=0 // pred_check
    _
  $region7: #{transformer_with_mixout_forward.23} parent=0 // pred_check_branch
    %11 = sbr.rel (0) target = $region9
  $region8: #{transformer_with_mixout_forward.23} parent=0 // pred_region
    _
  $region9: #{transformer_with_mixout_forward.23} parent=0 // pred_fallthru
    _
  // Predicated region
  $region10: #{transformer_with_mixout_forward.23} parent=0 // pred_check
    _
  $region11: #{transformer_with_mixout_forward.23} parent=0 // pred_check_branch
    %13 = sbr.rel (0) target = $region13
  $region12: #{transformer_with_mixout_forward.23} parent=0 // pred_region
    _
  $region13: #{transformer_with_mixout_forward.23} parent=0 // pred_fallthru
    _
  %p14 = scmp.eq.s32.totalorder 0, 0
  // Predicated region
  $region14: #{transformer_with_mixout_forward.23} parent=0 // pred_check
    %p15 = pneg %p14
  $region15: #{transformer_with_mixout_forward.23} parent=0 // pred_check_branch
    %17 = sbr.rel (%p15) target = $region17
  $region16: #{transformer_with_mixout_forward.23} parent=0 // pred_region
    %vm18 = vcmask 254976
    %19 = vst.msk [vmem:[#allocation2] sm:$0x3] %vm18, 0.0
  $region17: #{transformer_with_mixout_forward.23} parent=0 // pred_fallthru
    _
  %v20 = vld [vmem:[#allocation2] sm:$0x3]
  %v21 = vld [vmem:[%s0] sm:$0xf]
  %v22 = vld [vmem:[%s0 + $0x4] sm:$0xf]
  %v23 = vunpack.c.l.bf16 %v21
  %v24 = vunpack.c.l.bf16 %v22
  %vm25 = vcmask 261120
  %v26 = vsel %vm25, %v23, 0.0
  %v27 = vrot.slane %v26, 4
  %v28 = vadd.f32 %v26, %v27
  %v29 = vrot.slane %v28, 2
  %v30 = vadd.f32 %v28, %v29
  %v31 = vrot.slane %v30, 1
  %v32 = vadd.f32 %v30, %v31
  %v33 = vsel %vm25, %v24, 0.0
  %v34 = vrot.slane %v33, 4
  %v35 = vadd.f32 %v33, %v34
  %v36 = vrot.slane %v35, 2
  %v37 = vadd.f32 %v35, %v36
  %v38 = vrot.slane %v37, 1
  %v39 = vadd.f32 %v37, %v38
  %vm42 = vcmask 1041409
  %v43 = vsel %vm42, %v39, %v32
  %v45 = vadd.f32 %v20, %v43
  %vm46 = vcmask 254976
  %47 = vst.msk [vmem:[#allocation2] sm:$0x3] %vm46, %v45
  // Predicated region
  $region18: #{transformer_with_mixout_forward.23} parent=0 // pred_check
    %p48 = pneg %p14
  $region19: #{transformer_with_mixout_forward.23} parent=0 // pred_check_branch
    %50 = sbr.rel (%p48) target = $region21
  $region20: #{transformer_with_mixout_forward.23} parent=0 // pred_region
    %v51 = vld [vmem:[#allocation2] sm:$0x3]
    %v52 = vmul.f32 %v51, 0.125
    %v53 = vld [vmem:[%s1] sm:$0xff]
    %v54 = vld [vmem:[%s1 + $0x8] sm:$0xff]
    %v55 = vld [vmem:[%s1 + $0x10] sm:$0xff]
    %v56 = vld [vmem:[%s1 + $0x18] sm:$0xff]
    %v57 = vld [vmem:[%s2] sm:$0x1]
    %v59 = vlaneseq
    %v60 = vshrl.u32 %v59, 7
    %v61 = vsub.s32 0, %v60
    %v62 = vrot.slane %v57, %v61
    %v65 = vsel %vm25, %v52, 0
    %67 = vmatprep.subr.mxu0 0.0
    %68 = vmatpush1.msra.mxu0 0.0
    %69 = vmatprep.subr.mxu0 0.0
    %70 = vmatpush1.msra.mxu0 0.0
    %71 = vmatprep.subr.mxu0 0.0
    %72 = vmatpush1.msra.mxu0 0.0
    %73 = vmatprep.subr.mxu0 0.0
    %74 = vmatpush1.msra.mxu0 0.0
    %75 = vmatprep.subr.mxu0 0.0
    %76 = vmatpush1.msra.mxu0 0.0
    %77 = vmatprep.subr.mxu0 0.0
    %78 = vmatpush1.msra.mxu0 0.0
    %79 = vmatprep.subr.mxu0 0.0
    %80 = vmatpush1.msra.mxu0 0.0
    %81 = vmatprep.subr.mxu0 0.0
    %82 = vmatpush1.msra.mxu0 0.0
    %83 = vmatprep.subr.mxu0 0.0
    %84 = vmatpush1.msra.mxu0 0.0
    %85 = vmatprep.subr.mxu0 0.0
    %86 = vmatpush1.msra.mxu0 0.0
    %87 = vmatprep.subr.mxu0 0.0
    %88 = vmatpush1.msra.mxu0 0.0
    %89 = vmatprep.subr.mxu0 0.0
    %90 = vmatpush1.msra.mxu0 0.0
    %91 = vmatprep.subr.mxu0 0.0
    %92 = vmatpush1.msra.mxu0 %v56
    %93 = vmatprep.subr.mxu0 0.0
    %94 = vmatpush1.msra.mxu0 %v55
    %95 = vmatprep.subr.mxu0 0.0
    %96 = vmatpush1.msra.mxu0 %v54
    %97 = vmatprep.subr.mxu0 0.0
    %98 = vmatpush1.msra.mxu0 %v53
    %99 = vmatprep.subr.mxu0 0.0
    %100 = vmatpush2.msra.mxu0 0.0
    %101 = vmatprep.subr.mxu0 0.0
    %102 = vmatpush2.msra.mxu0 0.0
    %103 = vmatprep.subr.mxu0 0.0
    %104 = vmatpush2.msra.mxu0 0.0
    %105 = vmatprep.subr.mxu0 0.0
    %106 = vmatpush2.msra.mxu0 0.0
    %107 = vmatprep.subr.mxu0 0.0
    %108 = vmatpush2.msra.mxu0 0.0
    %109 = vmatprep.subr.mxu0 0.0
    %110 = vmatpush2.msra.mxu0 0.0
    %111 = vmatprep.subr.mxu0 0.0
    %112 = vmatpush2.msra.mxu0 0.0
    %113 = vmatprep.subr.mxu0 0.0
    %114 = vmatpush2.msra.mxu0 0.0
    %115 = vmatprep.subr.mxu0 0.0
    %116 = vmatpush2.msra.mxu0 0.0
    %117 = vmatprep.subr.mxu0 0.0
    %118 = vmatpush2.msra.mxu0 0.0
    %119 = vmatprep.subr.mxu0 0.0
    %120 = vmatpush2.msra.mxu0 0.0
    %121 = vmatprep.subr.mxu0 0.0
    %122 = vmatpush2.msra.mxu0 0.0
    %123 = vmatprep.subr.mxu0 0.0
    %124 = vmatpush2.msra.mxu0 0.0
    %125 = vmatprep.subr.mxu0 0.0
    %126 = vmatpush2.msra.mxu0 0.0
    %127 = vmatprep.subr.mxu0 0.0
    %128 = vmatpush2.msra.mxu0 0.0
    %129 = vmatprep.subr.mxu0 0.0
    %130 = vmatpush2.msra.mxu0 0.0
    %131 = vmatprep.mubr.f32.mxu0 0.0
    %132 = vmatmul.mubr.f32.gmra.mxu0 %v65
    %v133 = vpop.f32.mrf.mxu0
    %v134 = vadd.f32 %v62, %v133
    %v135 = vpop.f32.mrf.mxu0
    %136 = vdwg.mxu0
    %137 = vst [vmem:[%s3] sm:$0x3] %v134
  $region21: #{transformer_with_mixout_forward.23} parent=0 // pred_fallthru
    _
  // Predicated region
  $region22: #{transformer_with_mixout_forward.23} parent=0 // pred_check
    _
  $region23: #{transformer_with_mixout_forward.23} parent=0 // pred_check_branch
    %139 = sbr.rel (0) target = $region25
  $region24: #{transformer_with_mixout_forward.23} parent=0 // pred_region
    _
  $region25: #{transformer_with_mixout_forward.23} parent=0 // pred_fallthru
    _
  // Predicated region
  $region26: #{transformer_with_mixout_forward.23} parent=0 // pred_check
    _
  $region27: #{transformer_with_mixout_forward.23} parent=0 // pred_check_branch
    %141 = sbr.rel (0) target = $region29
  $region28: #{transformer_with_mixout_forward.23} parent=0 // pred_region
    _
  $region29: #{transformer_with_mixout_forward.23} parent=0 // pred_fallthru
    _

// kernel: transformer_with_mixout_forward.17
$region0: #{transformer_with_mixout_forward.17}
  #allocation0 [shape = 'u32[]', space=smem, size = 0x4, offset = 0x4, fixed_abs, tag = 'smem constant byte address 0x4 - core index']
  #allocation1 [shape = 'u32[144,128]{1,0:T(1,128)}', space=vmem, size = 0x12000, scoped, tag = 'internal scratch']
  #allocation2 [shape = 'f32[16,32]{1,0:T(8,128)}', space=vmem, size = 0x2000, scoped, tag = 'scratch operand']
  %s0 = inlined_call_operand.vmem [shape: bf16[16,64], index: 0, kind: input, shape index: {}]
  %s1 = inlined_call_operand.vmem [shape: bf16[64,32], index: 1, kind: input, shape index: {}]
  %s2 = inlined_call_operand.vmem [shape: f32[1,32], index: 2, kind: input, shape index: {}]
  %s3 = inlined_call_operand.vmem [shape: bf16[16,32], index: 3, kind: input, shape index: {}]
  %s4 = inlined_call_operand.vmem [shape: f32[1,32], index: 4, kind: input, shape index: {}]
  %s5 = inlined_call_operand.vmem [shape: f32[1,32], index: 5, kind: input, shape index: {}]
  %s6 = inlined_call_operand.vmem [shape: bf16[16,32], index: 6, kind: output, shape index: {}]
  %s7 = sld [smem:[#allocation0]]
  $region42: #{transformer_with_mixout_forward.17} parent=0
    _
  %s9 = ssub.s32 1, %s7
  %s10 = scalar_select 0, %s9, %s7
  // Predicated region
  $region2: #{transformer_with_mixout_forward.17} parent=0 // pred_check
    _
  $region3: #{transformer_with_mixout_forward.17} parent=0 // pred_check_branch
    %12 = sbr.rel (0) target = $region5
  $region4: #{transformer_with_mixout_forward.17} parent=0 // pred_region
    _
  $region5: #{transformer_with_mixout_forward.17} parent=0 // pred_fallthru
    _
  // Predicated region
  $region6: #{transformer_with_mixout_forward.17} parent=0 // pred_check
    _
  $region7: #{transformer_with_mixout_forward.17} parent=0 // pred_check_branch
    %14 = sbr.rel (0) target = $region9
  $region8: #{transformer_with_mixout_forward.17} parent=0 // pred_region
    _
  $region9: #{transformer_with_mixout_forward.17} parent=0 // pred_fallthru
    _
  // Predicated region
  $region10: #{transformer_with_mixout_forward.17} parent=0 // pred_check
    _
  $region11: #{transformer_with_mixout_forward.17} parent=0 // pred_check_branch
    %16 = sbr.rel (0) target = $region13
  $region12: #{transformer_with_mixout_forward.17} parent=0 // pred_region
    _
  $region13: #{transformer_with_mixout_forward.17} parent=0 // pred_fallthru
    _
  // Predicated region
  $region14: #{transformer_with_mixout_forward.17} parent=0 // pred_check
    _
  $region15: #{transformer_with_mixout_forward.17} parent=0 // pred_check_branch
    %18 = sbr.rel (0) target = $region17
  $region16: #{transformer_with_mixout_forward.17} parent=0 // pred_region
    _
  $region17: #{transformer_with_mixout_forward.17} parent=0 // pred_fallthru
    _
  // Predicated region
  $region18: #{transformer_with_mixout_forward.17} parent=0 // pred_check
    _
  $region19: #{transformer_with_mixout_forward.17} parent=0 // pred_check_branch
    %20 = sbr.rel (0) target = $region21
  $region20: #{transformer_with_mixout_forward.17} parent=0 // pred_region
    _
  $region21: #{transformer_with_mixout_forward.17} parent=0 // pred_fallthru
    _
  // Predicated region
  $region22: #{transformer_with_mixout_forward.17} parent=0 // pred_check
    _
  $region23: #{transformer_with_mixout_forward.17} parent=0 // pred_check_branch
    %22 = sbr.rel (0) target = $region25
  $region24: #{transformer_with_mixout_forward.17} parent=0 // pred_region
    _
  $region25: #{transformer_with_mixout_forward.17} parent=0 // pred_fallthru
    _
  %p24 = scmp.eq.s32.totalorder 0, 0
  // Predicated region
  $region26: #{transformer_with_mixout_forward.17} parent=0 // pred_check
    %p25 = pneg %p24
  $region27: #{transformer_with_mixout_forward.17} parent=0 // pred_check_branch
    %27 = sbr.rel (%p25) target = $region29
  $region28: #{transformer_with_mixout_forward.17} parent=0 // pred_region
    %vm28 = vcmask 261120
    %29 = vst.msk [vmem:[#allocation2] sm:$0xff] %vm28, 0.0
    %30 = vst.msk [vmem:[#allocation2 + $0x8] sm:$0xff] %vm28, 0.0
  $region29: #{transformer_with_mixout_forward.17} parent=0 // pred_fallthru
    _
  %v31 = vld [vmem:[#allocation2] sm:$0xff]
  %v32 = vld [vmem:[#allocation2 + $0x8] sm:$0xff]
  %v33 = vld [vmem:[%s0] sm:$0xf]
  %v34 = vld [vmem:[%s0 + $0x4] sm:$0xf]
  %v35 = vld [vmem:[%s1] sm:$0xf]
  %v36 = vld [vmem:[%s1 + $0x4] sm:$0xf]
  %v37 = vld [vmem:[%s1 + $0x8] sm:$0xf]
  %v38 = vld [vmem:[%s1 + $0xc] sm:$0xf]
  %v39 = vld [vmem:[%s1 + $0x10] sm:$0xf]
  %v40 = vld [vmem:[%s1 + $0x14] sm:$0xf]
  %v41 = vld [vmem:[%s1 + $0x18] sm:$0xf]
  %v42 = vld [vmem:[%s1 + $0x1c] sm:$0xf]
  %v45 = vunpack.c.l.b16 %v33
  %v46 = vunpack.c.l.b16 %v34
  %v47 = vpack.c.b16 %v46, %v45
  %v56 = vunpack.c.l.b16 %v35
  %v57 = vunpack.c.l.b16 %v36
  %v58 = vunpack.c.l.b16 %v37
  %v59 = vunpack.c.l.b16 %v38
  %v60 = vunpack.c.l.b16 %v39
  %v61 = vunpack.c.l.b16 %v40
  %v62 = vunpack.c.l.b16 %v41
  %v63 = vunpack.c.l.b16 %v42
  %v64 = vpack.c.b16 %v57, %v56
  %v65 = vpack.c.b16 %v59, %v58
  %v66 = vpack.c.b16 %v61, %v60
  %v67 = vpack.c.b16 %v63, %v62
  %vm72 = vcmask 523264
  %v74 = vsel %vm72, %v47, 0
  %76 = vmatprep.subr.bf16.mxu0 0
  %77 = vmatpush1.bf16.msra.mxu0 0
  %78 = vmatprep.subr.bf16.mxu0 0
  %79 = vmatpush1.bf16.msra.mxu0 0
  %80 = vmatprep.subr.bf16.mxu0 0
  %81 = vmatpush1.bf16.msra.mxu0 0
  %82 = vmatprep.subr.bf16.mxu0 0
  %83 = vmatpush1.bf16.msra.mxu0 0
  %84 = vmatprep.subr.bf16.mxu0 0
  %85 = vmatpush1.bf16.msra.mxu0 %v67
  %86 = vmatprep.subr.bf16.mxu0 0
  %87 = vmatpush1.bf16.msra.mxu0 %v66
  %88 = vmatprep.subr.bf16.mxu0 0
  %89 = vmatpush1.bf16.msra.mxu0 %v65
  %90 = vmatprep.subr.bf16.mxu0 0
  %91 = vmatpush1.bf16.msra.mxu0 %v64
  %92 = vmatprep.subr.bf16.mxu0 0
  %93 = vmatpush2.bf16.msra.mxu0 0
  %94 = vmatprep.subr.bf16.mxu0 0
  %95 = vmatpush2.bf16.msra.mxu0 0
  %96 = vmatprep.subr.bf16.mxu0 0
  %97 = vmatpush2.bf16.msra.mxu0 0
  %98 = vmatprep.subr.bf16.mxu0 0
  %99 = vmatpush2.bf16.msra.mxu0 0
  %100 = vmatprep.subr.bf16.mxu0 0
  %101 = vmatpush2.bf16.msra.mxu0 0
  %102 = vmatprep.subr.bf16.mxu0 0
  %103 = vmatpush2.bf16.msra.mxu0 0
  %104 = vmatprep.subr.bf16.mxu0 0
  %105 = vmatpush2.bf16.msra.mxu0 0
  %106 = vmatprep.subr.bf16.mxu0 0
  %107 = vmatpush2.bf16.msra.mxu0 0
  %108 = vmatprep.mubr.bf16.mxu0 0
  %109 = vmatmul.mubr.bf16.gmra.mxu0 %v74
  %v110 = vpop.f32.mrf.mxu0
  %v111 = vadd.f32 0.0, %v110
  %v112 = vpop.f32.mrf.mxu0
  %v113 = vpop.f32.mrf.mxu0
  %v114 = vadd.f32 0.0, %v113
  %v115 = vpop.f32.mrf.mxu0
  %116 = vdwg.mxu0
  %v117 = vadd.f32 %v31, %v111
  %v118 = vadd.f32 %v32, %v114
  %vm119 = vcmask 261120
  %120 = vst.msk [vmem:[#allocation2] sm:$0xff] %vm119, %v117
  %121 = vst.msk [vmem:[#allocation2 + $0x8] sm:$0xff] %vm119, %v118
  // Predicated region
  $region30: #{transformer_with_mixout_forward.17} parent=0 // pred_check
    %p122 = pneg %p24
  $region31: #{transformer_with_mixout_forward.17} parent=0 // pred_check_branch
    %124 = sbr.rel (%p122) target = $region33
  $region32: #{transformer_with_mixout_forward.17} parent=0 // pred_region
    %v125 = vld [vmem:[#allocation2] sm:$0xff]
    %v126 = vld [vmem:[#allocation2 + $0x8] sm:$0xff]
    %v127 = vld [vmem:[%s2] sm:$0x1]
    %v129 = vlaneseq
    %v130 = vshrl.u32 %v129, 7
    %v131 = vsub.s32 0, %v130
    %v132 = vrot.slane %v127, %v131
    %v134 = vadd.f32 %v125, %v132
    %v135 = vadd.f32 %v126, %v132
    %v136 = vld [vmem:[%s3] sm:$0xf]
    %v137 = vld [vmem:[%s3 + $0x4] sm:$0xf]
    %v138 = vunpack.c.l.bf16 %v136
    %v139 = vunpack.c.l.bf16 %v137
    %v140 = vadd.f32 %v134, %v138
    %v141 = vadd.f32 %v135, %v139
    %v142 = vsel %vm119, %v140, 0.0
    %143 = vadd.xlane.f32.xlu0 %v142
    %v144 = vpop.xlane.xlu0 %143
    %v145 = vsel %vm119, %v141, 0.0
    %146 = vadd.xlane.f32.xlu0 %v145
    %v147 = vpop.xlane.xlu0 %146
    %v148 = vrcp.pop 32.0
    %v149 = vmul.f32 %v144, %v148
    %v150 = vmul.f32 %v147, %v148
    %v151 = vsub.f32 %v140, %v149
    %v152 = vsub.f32 %v141, %v150
    %v153 = vmul.f32 %v151, %v151
    %v154 = vmul.f32 %v152, %v152
    %v155 = vsel %vm119, %v153, 0.0
    %156 = vadd.xlane.f32.xlu0 %v155
    %v157 = vpop.xlane.xlu0 %156
    %v158 = vsel %vm119, %v154, 0.0
    %159 = vadd.xlane.f32.xlu0 %v158
    %v160 = vpop.xlane.xlu0 %159
    %v161 = vmul.f32 %v157, %v148
    %v162 = vmul.f32 %v160, %v148
    %v163 = vadd.f32 %v161, 1e-12
    %v164 = vadd.f32 %v162, 1e-12
    %v165 = vrsqrt.pop %v163
    %v166 = vrsqrt.pop %v164
    %v167 = vmul.f32 %v151, %v165
    %v168 = vmul.f32 %v152, %v166
    %v169 = vld [vmem:[%s4] sm:$0x1]
    %v171 = vlaneseq
    %v172 = vshrl.u32 %v171, 7
    %v173 = vsub.s32 0, %v172
    %v174 = vrot.slane %v169, %v173
    %v176 = vmul.f32 %v167, %v174
    %v177 = vmul.f32 %v168, %v174
    %v178 = vld [vmem:[%s5] sm:$0x1]
    %v180 = vlaneseq
    %v181 = vshrl.u32 %v180, 7
    %v182 = vsub.s32 0, %v181
    %v183 = vrot.slane %v178, %v182
    %v185 = vadd.f32 %v176, %v183
    %v186 = vadd.f32 %v177, %v183
    %v187 = vpack.c.bf16 %v186, %v185
    %v189 = vunpack.c.l.b16 %v187
    %v190 = vunpack.c.h.b16 %v187
    %v191 = vpack.c.b16 %v189, %v189
    %v192 = vpack.c.b16 %v190, %v190
    %vm195 = vcmask 257024
    %196 = vst.msk [vmem:[%s6] sm:$0xf] %vm195, %v191
    %197 = vst.msk [vmem:[%s6 + $0x4] sm:$0xf] %vm195, %v192
  $region33: #{transformer_with_mixout_forward.17} parent=0 // pred_fallthru
    _
  // Predicated region
  $region34: #{transformer_with_mixout_forward.17} parent=0 // pred_check
    _
  $region35: #{transformer_with_mixout_forward.17} parent=0 // pred_check_branch
    %199 = sbr.rel (0) target = $region37
  $region36: #{transformer_with_mixout_forward.17} parent=0 // pred_region
    _
  $region37: #{transformer_with_mixout_forward.17} parent=0 // pred_fallthru
    _
  // Predicated region
  $region38: #{transformer_with_mixout_forward.17} parent=0 // pred_check
    _
  $region39: #{transformer_with_mixout_forward.17} parent=0 // pred_check_branch
    %201 = sbr.rel (0) target = $region41
  $region40: #{transformer_with_mixout_forward.17} parent=0 // pred_region
    _
  $region41: #{transformer_with_mixout_forward.17} parent=0 // pred_fallthru
    _

</llo_original>
